<compile_context>
chip_gen: v7x
topology: tpu7x:2x2x1
jax: 0.10.0
libtpu: 0.0.40
codegen_flags: <defaults>
</compile_context>

<pallas_src>
import functools

import jax
import jax.numpy as jnp
from jax.experimental import pallas as pl
from jax.experimental.pallas import tpu as pltpu


# ------------------------------ Pallas kernel ------------------------------

def _bottleneck_kernel(x_ref, w1_ref, b1_ref, w2_ref, b2_ref, w3_ref, b3_ref,
                       o_ref, pad_ref, *, H, W):
    # x_ref:   (1, H*W, Cin)        bf16  flattened-NHWC input tile (one image)
    # w1_ref:  (Cin, Wp)            bf16  conv1 weight, BN1 scale folded
    # b1_ref:  (1, Wp)              f32   folded BN1 bias
    # w2_ref:  (9, Wp, Wp)          bf16  conv2 per-tap weights (kh-major), BN2 folded
    # b2_ref:  (1, Wp)              f32
    # w3_ref:  (Wp, Cout)           bf16  conv3 weight, BN3 folded
    # b3_ref:  (1, Cout)            f32
    # o_ref:   (1, H*W, Cout)       bf16  flattened-NHWC output tile
    # pad_ref: ((H+2)*(W+2)+2, Wp)  bf16  flat zero-padded h1 scratch
    Wp2 = W + 2
    n_rows = H * Wp2                      # conv2/conv3 row count (2 junk cols/row)

    # ---- stage 1: 1x1 conv (+ folded BN1) + ReLU ---------------------------
    h1 = jnp.dot(x_ref[0], w1_ref[...], preferred_element_type=jnp.float32)
    h1 = jnp.maximum(h1 + b1_ref[...], 0.0).astype(jnp.bfloat16)      # (HW, Wp)

    # Zero the whole padded scratch every step (keeps the halo correct even
    # when the batch grid axis is split across TensorCores), then write the
    # interior rows of the padded image.
    pad_ref[...] = jnp.zeros(pad_ref.shape, pad_ref.dtype)
    for h in range(H):
        pad_ref[pl.ds((h + 1) * Wp2 + 1, W)] = h1[h * W:(h + 1) * W]

    # ---- stage 2: 3x3 conv (+ folded BN2) + ReLU ---------------------------
    # 9 contiguous static slices of the flat padded image -> 9 pure matmuls.
    acc = None
    tap = 0
    for ky in (-1, 0, 1):
        for kx in (-1, 0, 1):
            off = (1 + ky) * Wp2 + (1 + kx)
            part = jnp.dot(pad_ref[pl.ds(off, n_rows)], w2_ref[tap],
                           preferred_element_type=jnp.float32)
            acc = part if acc is None else acc + part
            tap += 1
    h2 = jnp.maximum(acc + b2_ref[...], 0.0).astype(jnp.bfloat16)     # (n_rows, Wp)

    # ---- stage 3: 1x1 conv (+ folded BN3) + identity residual + ReLU -------
    y = jnp.dot(h2, w3_ref[...], preferred_element_type=jnp.float32)  # (n_rows, Cout)
    b3 = b3_ref[...]
    for h in range(H):
        rows = (y[h * Wp2:h * Wp2 + W] + b3
                + x_ref[0, pl.ds(h * W, W)].astype(jnp.float32))      # residual (f32)
        o_ref[0, pl.ds(h * W, W)] = jnp.maximum(rows, 0.0).astype(o_ref.dtype)


# ------------------------------- host wrapper -------------------------------

def _bn_fold(gamma, beta, mean, var, eps):
    scale = gamma / jnp.sqrt(var + eps)
    return scale, beta - mean * scale


def _round_up(n, m):
    return ((n + m - 1) // m) * m


def _vmem_limit_bytes(H, W, Cin, Cout, width_p):
    HW, Wp2 = H * W, W + 2
    act = 2 * HW * (Cin + Cout) * 2                                   # dbl-buffered bf16 I/O
    wts = 2 * (Cin * width_p + 9 * width_p * width_p + width_p * Cout) * 2 \
        + 6 * width_p * 4                                             # bf16 weights + f32 biases
    scratch = ((H + 2) * Wp2 + 2) * width_p * 2
    temps = 6 * H * Wp2 * max(width_p, Cout) * 4                      # f32 h1/acc/h2/y + slack
    est = act + wts + scratch + temps + (2 << 20)
    return int(min(max(est, 32 * 1024 * 1024), 64 * 1024 * 1024))


def bottleneck_forward(x_nchw, params, eps=1e-5):
    Nb, Cin, H, W = x_nchw.shape
    width = params["w1"].shape[0]
    Cout = params["w3"].shape[0]
    assert Cin == Cout, "identity residual requires inplanes == planes * expansion"
    width_p = _round_up(width, 128)        # lane-dense internal channel dim
    pw = width_p - width
    HW = H * W

    # Fold eval-mode BatchNorm into the conv weights/biases (one-time, host side).
    s1, b1 = _bn_fold(params["g1"], params["b1"], params["m1"], params["v1"], eps)
    w1 = params["w1"][:, :, 0, 0].T * s1[None, :]                     # (Cin, width)
    w1 = jnp.pad(w1, ((0, 0), (0, pw))).astype(jnp.bfloat16)
    b1p = jnp.pad(b1, (0, pw)).reshape(1, width_p).astype(jnp.float32)

    s2, b2 = _bn_fold(params["g2"], params["b2"], params["m2"], params["v2"], eps)
    taps = [params["w2"][:, :, kh, kw].T * s2[None, :]                # (width, width)
            for kh in range(3) for kw in range(3)]
    w2 = jnp.pad(jnp.stack(taps, 0), ((0, 0), (0, pw), (0, pw))).astype(jnp.bfloat16)
    b2p = jnp.pad(b2, (0, pw)).reshape(1, width_p).astype(jnp.float32)

    s3, b3 = _bn_fold(params["g3"], params["b3"], params["m3"], params["v3"], eps)
    w3 = params["w3"][:, :, 0, 0].T * s3[None, :]                     # (width, Cout)
    w3 = jnp.pad(w3, ((0, pw), (0, 0))).astype(jnp.bfloat16)
    b3p = b3.reshape(1, Cout).astype(jnp.float32)

    # NCHW -> flattened NHWC, bf16 activations on the HBM side.
    # TODO(synk): in a full NHWC/bf16 network these transposes/casts disappear.
    x_flat = jnp.transpose(x_nchw, (0, 2, 3, 1)).reshape(Nb, HW, Cin).astype(jnp.bfloat16)

    n_pad_rows = (H + 2) * (W + 2) + 2     # +2: last tap slice reaches past the halo

    kernel = functools.partial(_bottleneck_kernel, H=H, W=W)
    out_flat = pl.pallas_call(
        kernel,
        out_shape=jax.ShapeDtypeStruct((Nb, HW, Cout), jnp.bfloat16),
        grid=(Nb,),
        in_specs=[
            pl.BlockSpec((1, HW, Cin), lambda b: (b, 0, 0)),             # activations
            pl.BlockSpec((Cin, width_p), lambda b: (0, 0)),              # w1 (resident)
            pl.BlockSpec((1, width_p), lambda b: (0, 0)),                # b1
            pl.BlockSpec((9, width_p, width_p), lambda b: (0, 0, 0)),    # w2 taps
            pl.BlockSpec((1, width_p), lambda b: (0, 0)),                # b2
            pl.BlockSpec((width_p, Cout), lambda b: (0, 0)),             # w3
            pl.BlockSpec((1, Cout), lambda b: (0, 0)),                   # b3
        ],
        out_specs=pl.BlockSpec((1, HW, Cout), lambda b: (b, 0, 0)),
        scratch_shapes=[pltpu.VMEM((n_pad_rows, width_p), jnp.bfloat16)],
        compiler_params=pltpu.CompilerParams(
            dimension_semantics=("parallel",),
            vmem_limit_bytes=_vmem_limit_bytes(H, W, Cin, Cout, width_p),
        ),
    )(x_flat, w1, b1p, w2, b2p, w3, b3p)

    out = out_flat.reshape(Nb, H, W, Cout).transpose(0, 3, 1, 2)      # back to NCHW
    return out.astype(jnp.float32)


# ---------------------------- pure-JAX reference ----------------------------

def _ref_forward(x, p, eps=1e-5):
    def conv(x, w, pad):
        return jax.lax.conv_general_dilated(
            x, w, window_strides=(1, 1), padding=pad,
            dimension_numbers=("NCHW", "OIHW", "NCHW"))

    def bn(x, g, b, m, v):
        inv = g / jnp.sqrt(v + eps)
        return x * inv[None, :, None, None] + (b - m * inv)[None, :, None, None]

    out = jax.nn.relu(bn(conv(x, p["w1"], "VALID"), p["g1"], p["b1"], p["m1"], p["v1"]))
    out = jax.nn.relu(bn(conv(out, p["w2"], ((1, 1), (1, 1))), p["g2"], p["b2"], p["m2"], p["v2"]))
    out = bn(conv(out, p["w3"], "VALID"), p["g3"], p["b3"], p["m3"], p["v3"])
    return jax.nn.relu(out + x)


# ----------------------------------- main ------------------------------------

if __name__ == "__main__":
    key = jax.random.PRNGKey(0)
    Nb, planes, H, W = 2, 4, 16, 16
    width = planes                      # base_width=64, groups=1
    inplanes = planes * 4               # expansion = 4; identity residual path
    Cout = planes * 4

    keys = jax.random.split(key, 12)
    params = {
        "w1": jax.random.normal(keys[0], (width, inplanes, 1, 1), jnp.float32) * 0.1,
        "w2": jax.random.normal(keys[1], (width, width, 3, 3), jnp.float32) * 0.1,
        "w3": jax.random.normal(keys[2], (Cout, width, 1, 1), jnp.float32) * 0.1,
        "g1": 1.0 + 0.1 * jax.random.normal(keys[3], (width,), jnp.float32),
        "b1": 0.1 * jax.random.normal(keys[4], (width,), jnp.float32),
        "m1": jnp.zeros((width,), jnp.float32),
        "v1": jnp.ones((width,), jnp.float32),
        "g2": 1.0 + 0.1 * jax.random.normal(keys[5], (width,), jnp.float32),
        "b2": 0.1 * jax.random.normal(keys[6], (width,), jnp.float32),
        "m2": jnp.zeros((width,), jnp.float32),
        "v2": jnp.ones((width,), jnp.float32),
        "g3": 1.0 + 0.1 * jax.random.normal(keys[7], (Cout,), jnp.float32),
        "b3": 0.1 * jax.random.normal(keys[8], (Cout,), jnp.float32),
        "m3": jnp.zeros((Cout,), jnp.float32),
        "v3": jnp.ones((Cout,), jnp.float32),
    }

    x = jax.random.normal(keys[9], (Nb, inplanes, H, W), jnp.float32)

    out = jax.block_until_ready(bottleneck_forward(x, params))
    ref = jax.block_until_ready(_ref_forward(x, params))

    assert out.shape == (Nb, Cout, H, W), out.shape
    # bf16 activations on HBM + bf16 MXU inputs (f32 accumulation) -> compare
    # against the f32 reference with a bf16-level tolerance.
    err = float(jnp.max(jnp.abs(out - ref)))
    assert jnp.allclose(out, ref, rtol=5e-2, atol=6e-2), f"max abs err {err}"
    print("KERNEL_OK")
</pallas_src>

<mosaic_0001>
module attributes {stable_mosaic.version = 11 : i64} {
  func.func @_bottleneck_kernel(%arg0: i32, %arg1: memref<1x256x16xbf16, #tpu.memory_space<vmem>>, %arg2: memref<16x128xbf16, #tpu.memory_space<vmem>>, %arg3: memref<1x128xf32, #tpu.memory_space<vmem>>, %arg4: memref<9x128x128xbf16, #tpu.memory_space<vmem>>, %arg5: memref<1x128xf32, #tpu.memory_space<vmem>>, %arg6: memref<128x16xbf16, #tpu.memory_space<vmem>>, %arg7: memref<1x16xf32, #tpu.memory_space<vmem>>, %arg8: memref<1x256x16xbf16, #tpu.memory_space<vmem>>, %arg9: memref<326x128xbf16, #tpu.memory_space<vmem>>) attributes {dimension_semantics = [#tpu.dimension_semantics<parallel>], iteration_bounds = array<i64: 2>, scalar_prefetch = 0 : i64, scratch_operands = 1 : i64, tpu.core_type = #tpu.core_type<tc>, window_params = [{transform_indices = @transform_0, window_bounds = array<i64: 1, 256, 16>}, {pipeline_mode = #tpu.pipeline_mode<synchronous>, transform_indices = @transform_1, window_bounds = array<i64: 16, 128>}, {pipeline_mode = #tpu.pipeline_mode<synchronous>, transform_indices = @transform_2, window_bounds = array<i64: 1, 128>}, {pipeline_mode = #tpu.pipeline_mode<synchronous>, transform_indices = @transform_3, window_bounds = array<i64: 9, 128, 128>}, {pipeline_mode = #tpu.pipeline_mode<synchronous>, transform_indices = @transform_4, window_bounds = array<i64: 1, 128>}, {pipeline_mode = #tpu.pipeline_mode<synchronous>, transform_indices = @transform_5, window_bounds = array<i64: 128, 16>}, {pipeline_mode = #tpu.pipeline_mode<synchronous>, transform_indices = @transform_6, window_bounds = array<i64: 1, 16>}, {transform_indices = @transform_7, window_bounds = array<i64: 1, 256, 16>}]} {
    %c0 = arith.constant 0 : index
    %c0_0 = arith.constant 0 : index
    %c0_1 = arith.constant 0 : index
    %0 = vector.load %arg1[%c0, %c0_0, %c0_1] : memref<1x256x16xbf16, #tpu.memory_space<vmem>>, vector<1x256x16xbf16>
    %1 = vector.shape_cast %0 : vector<1x256x16xbf16> to vector<256x16xbf16>
    %c0_2 = arith.constant 0 : index
    %c0_3 = arith.constant 0 : index
    %2 = vector.load %arg2[%c0_2, %c0_3] : memref<16x128xbf16, #tpu.memory_space<vmem>>, vector<16x128xbf16>
    %cst = arith.constant dense<0.000000e+00> : vector<256x128xf32>
    %3 = tpu.matmul %1, %2, %cst {dimension_numbers = #tpu.dot_dimension_numbers<[1], [0], [0], [1], [0, 0, 1, 1], [], []>} : vector<256x16xbf16>, vector<16x128xbf16>, vector<256x128xf32> -> vector<256x128xf32>
    %c0_4 = arith.constant 0 : index
    %c0_5 = arith.constant 0 : index
    %4 = vector.load %arg3[%c0_4, %c0_5] : memref<1x128xf32, #tpu.memory_space<vmem>>, vector<1x128xf32>
    %5 = vector.broadcast %4 : vector<1x128xf32> to vector<256x128xf32>
    %6 = arith.addf %3, %5 : vector<256x128xf32>
    %cst_6 = arith.constant 0.000000e+00 : f32
    %7 = vector.broadcast %cst_6 : f32 to vector<256x128xf32>
    %8 = arith.maximumf %6, %7 : vector<256x128xf32>
    %9 = arith.truncf %8 : vector<256x128xf32> to vector<256x128xbf16>
    %cst_7 = arith.constant 0.000000e+00 : bf16
    %10 = vector.broadcast %cst_7 : bf16 to vector<326x128xbf16>
    %c0_8 = arith.constant 0 : index
    %c0_9 = arith.constant 0 : index
    %11 = vector.load %arg9[%c0_8, %c0_9] : memref<326x128xbf16, #tpu.memory_space<vmem>>, vector<326x128xbf16>
    tpu.vector_store %arg9[%c0_8, %c0_9], %10 {strides = array<i32>} : memref<326x128xbf16, #tpu.memory_space<vmem>>, vector<326x128xbf16>,
    %12 = vector.extract_strided_slice %9 {offsets = [0, 0], sizes = [16, 128], strides = [1, 1]} : vector<256x128xbf16> to vector<16x128xbf16>
    %c19 = arith.constant 19 : index
    %c0_10 = arith.constant 0 : index
    %13 = vector.load %arg9[%c19, %c0_10] : memref<326x128xbf16, #tpu.memory_space<vmem>>, vector<16x128xbf16>
    tpu.vector_store %arg9[%c19, %c0_10], %12 {strides = array<i32>} : memref<326x128xbf16, #tpu.memory_space<vmem>>, vector<16x128xbf16>,
    %14 = vector.extract_strided_slice %9 {offsets = [16, 0], sizes = [16, 128], strides = [1, 1]} : vector<256x128xbf16> to vector<16x128xbf16>
    %c37 = arith.constant 37 : index
    %c0_11 = arith.constant 0 : index
    %15 = vector.load %arg9[%c37, %c0_11] : memref<326x128xbf16, #tpu.memory_space<vmem>>, vector<16x128xbf16>
    tpu.vector_store %arg9[%c37, %c0_11], %14 {strides = array<i32>} : memref<326x128xbf16, #tpu.memory_space<vmem>>, vector<16x128xbf16>,
    %16 = vector.extract_strided_slice %9 {offsets = [32, 0], sizes = [16, 128], strides = [1, 1]} : vector<256x128xbf16> to vector<16x128xbf16>
    %c55 = arith.constant 55 : index
    %c0_12 = arith.constant 0 : index
    %17 = vector.load %arg9[%c55, %c0_12] : memref<326x128xbf16, #tpu.memory_space<vmem>>, vector<16x128xbf16>
    tpu.vector_store %arg9[%c55, %c0_12], %16 {strides = array<i32>} : memref<326x128xbf16, #tpu.memory_space<vmem>>, vector<16x128xbf16>,
    %18 = vector.extract_strided_slice %9 {offsets = [48, 0], sizes = [16, 128], strides = [1, 1]} : vector<256x128xbf16> to vector<16x128xbf16>
    %c73 = arith.constant 73 : index
    %c0_13 = arith.constant 0 : index
    %19 = vector.load %arg9[%c73, %c0_13] : memref<326x128xbf16, #tpu.memory_space<vmem>>, vector<16x128xbf16>
    tpu.vector_store %arg9[%c73, %c0_13], %18 {strides = array<i32>} : memref<326x128xbf16, #tpu.memory_space<vmem>>, vector<16x128xbf16>,
    %20 = vector.extract_strided_slice %9 {offsets = [64, 0], sizes = [16, 128], strides = [1, 1]} : vector<256x128xbf16> to vector<16x128xbf16>
    %c91 = arith.constant 91 : index
    %c0_14 = arith.constant 0 : index
    %21 = vector.load %arg9[%c91, %c0_14] : memref<326x128xbf16, #tpu.memory_space<vmem>>, vector<16x128xbf16>
    tpu.vector_store %arg9[%c91, %c0_14], %20 {strides = array<i32>} : memref<326x128xbf16, #tpu.memory_space<vmem>>, vector<16x128xbf16>,
    %22 = vector.extract_strided_slice %9 {offsets = [80, 0], sizes = [16, 128], strides = [1, 1]} : vector<256x128xbf16> to vector<16x128xbf16>
    %c109 = arith.constant 109 : index
    %c0_15 = arith.constant 0 : index
    %23 = vector.load %arg9[%c109, %c0_15] : memref<326x128xbf16, #tpu.memory_space<vmem>>, vector<16x128xbf16>
    tpu.vector_store %arg9[%c109, %c0_15], %22 {strides = array<i32>} : memref<326x128xbf16, #tpu.memory_space<vmem>>, vector<16x128xbf16>,
    %24 = vector.extract_strided_slice %9 {offsets = [96, 0], sizes = [16, 128], strides = [1, 1]} : vector<256x128xbf16> to vector<16x128xbf16>
    %c127 = arith.constant 127 : index
    %c0_16 = arith.constant 0 : index
    %25 = vector.load %arg9[%c127, %c0_16] : memref<326x128xbf16, #tpu.memory_space<vmem>>, vector<16x128xbf16>
    tpu.vector_store %arg9[%c127, %c0_16], %24 {strides = array<i32>} : memref<326x128xbf16, #tpu.memory_space<vmem>>, vector<16x128xbf16>,
    %26 = vector.extract_strided_slice %9 {offsets = [112, 0], sizes = [16, 128], strides = [1, 1]} : vector<256x128xbf16> to vector<16x128xbf16>
    %c145 = arith.constant 145 : index
    %c0_17 = arith.constant 0 : index
    %27 = vector.load %arg9[%c145, %c0_17] : memref<326x128xbf16, #tpu.memory_space<vmem>>, vector<16x128xbf16>
    tpu.vector_store %arg9[%c145, %c0_17], %26 {strides = array<i32>} : memref<326x128xbf16, #tpu.memory_space<vmem>>, vector<16x128xbf16>,
    %28 = vector.extract_strided_slice %9 {offsets = [128, 0], sizes = [16, 128], strides = [1, 1]} : vector<256x128xbf16> to vector<16x128xbf16>
    %c163 = arith.constant 163 : index
    %c0_18 = arith.constant 0 : index
    %29 = vector.load %arg9[%c163, %c0_18] : memref<326x128xbf16, #tpu.memory_space<vmem>>, vector<16x128xbf16>
    tpu.vector_store %arg9[%c163, %c0_18], %28 {strides = array<i32>} : memref<326x128xbf16, #tpu.memory_space<vmem>>, vector<16x128xbf16>,
    %30 = vector.extract_strided_slice %9 {offsets = [144, 0], sizes = [16, 128], strides = [1, 1]} : vector<256x128xbf16> to vector<16x128xbf16>
    %c181 = arith.constant 181 : index
    %c0_19 = arith.constant 0 : index
    %31 = vector.load %arg9[%c181, %c0_19] : memref<326x128xbf16, #tpu.memory_space<vmem>>, vector<16x128xbf16>
    tpu.vector_store %arg9[%c181, %c0_19], %30 {strides = array<i32>} : memref<326x128xbf16, #tpu.memory_space<vmem>>, vector<16x128xbf16>,
    %32 = vector.extract_strided_slice %9 {offsets = [160, 0], sizes = [16, 128], strides = [1, 1]} : vector<256x128xbf16> to vector<16x128xbf16>
    %c199 = arith.constant 199 : index
    %c0_20 = arith.constant 0 : index
    %33 = vector.load %arg9[%c199, %c0_20] : memref<326x128xbf16, #tpu.memory_space<vmem>>, vector<16x128xbf16>
    tpu.vector_store %arg9[%c199, %c0_20], %32 {strides = array<i32>} : memref<326x128xbf16, #tpu.memory_space<vmem>>, vector<16x128xbf16>,
    %34 = vector.extract_strided_slice %9 {offsets = [176, 0], sizes = [16, 128], strides = [1, 1]} : vector<256x128xbf16> to vector<16x128xbf16>
    %c217 = arith.constant 217 : index
    %c0_21 = arith.constant 0 : index
    %35 = vector.load %arg9[%c217, %c0_21] : memref<326x128xbf16, #tpu.memory_space<vmem>>, vector<16x128xbf16>
    tpu.vector_store %arg9[%c217, %c0_21], %34 {strides = array<i32>} : memref<326x128xbf16, #tpu.memory_space<vmem>>, vector<16x128xbf16>,
    %36 = vector.extract_strided_slice %9 {offsets = [192, 0], sizes = [16, 128], strides = [1, 1]} : vector<256x128xbf16> to vector<16x128xbf16>
    %c235 = arith.constant 235 : index
    %c0_22 = arith.constant 0 : index
    %37 = vector.load %arg9[%c235, %c0_22] : memref<326x128xbf16, #tpu.memory_space<vmem>>, vector<16x128xbf16>
    tpu.vector_store %arg9[%c235, %c0_22], %36 {strides = array<i32>} : memref<326x128xbf16, #tpu.memory_space<vmem>>, vector<16x128xbf16>,
    %38 = vector.extract_strided_slice %9 {offsets = [208, 0], sizes = [16, 128], strides = [1, 1]} : vector<256x128xbf16> to vector<16x128xbf16>
    %c253 = arith.constant 253 : index
    %c0_23 = arith.constant 0 : index
    %39 = vector.load %arg9[%c253, %c0_23] : memref<326x128xbf16, #tpu.memory_space<vmem>>, vector<16x128xbf16>
    tpu.vector_store %arg9[%c253, %c0_23], %38 {strides = array<i32>} : memref<326x128xbf16, #tpu.memory_space<vmem>>, vector<16x128xbf16>,
    %40 = vector.extract_strided_slice %9 {offsets = [224, 0], sizes = [16, 128], strides = [1, 1]} : vector<256x128xbf16> to vector<16x128xbf16>
    %c271 = arith.constant 271 : index
    %c0_24 = arith.constant 0 : index
    %41 = vector.load %arg9[%c271, %c0_24] : memref<326x128xbf16, #tpu.memory_space<vmem>>, vector<16x128xbf16>
    tpu.vector_store %arg9[%c271, %c0_24], %40 {strides = array<i32>} : memref<326x128xbf16, #tpu.memory_space<vmem>>, vector<16x128xbf16>,
    %42 = vector.extract_strided_slice %9 {offsets = [240, 0], sizes = [16, 128], strides = [1, 1]} : vector<256x128xbf16> to vector<16x128xbf16>
    %c289 = arith.constant 289 : index
    %c0_25 = arith.constant 0 : index
    %43 = vector.load %arg9[%c289, %c0_25] : memref<326x128xbf16, #tpu.memory_space<vmem>>, vector<16x128xbf16>
    tpu.vector_store %arg9[%c289, %c0_25], %42 {strides = array<i32>} : memref<326x128xbf16, #tpu.memory_space<vmem>>, vector<16x128xbf16>,
    %c0_26 = arith.constant 0 : index
    %c0_27 = arith.constant 0 : index
    %44 = vector.load %arg9[%c0_26, %c0_27] : memref<326x128xbf16, #tpu.memory_space<vmem>>, vector<288x128xbf16>
    %c0_28 = arith.constant 0 : index
    %c0_29 = arith.constant 0 : index
    %c0_30 = arith.constant 0 : index
    %45 = vector.load %arg4[%c0_28, %c0_29, %c0_30] : memref<9x128x128xbf16, #tpu.memory_space<vmem>>, vector<1x128x128xbf16>
    %46 = vector.shape_cast %45 : vector<1x128x128xbf16> to vector<128x128xbf16>
    %cst_31 = arith.constant dense<0.000000e+00> : vector<288x128xf32>
    %47 = tpu.matmul %44, %46, %cst_31 {dimension_numbers = #tpu.dot_dimension_numbers<[1], [0], [0], [1], [0, 0, 1, 1], [], []>} : vector<288x128xbf16>, vector<128x128xbf16>, vector<288x128xf32> -> vector<288x128xf32>
    %c1 = arith.constant 1 : index
    %c0_32 = arith.constant 0 : index
    %48 = vector.load %arg9[%c1, %c0_32] : memref<326x128xbf16, #tpu.memory_space<vmem>>, vector<288x128xbf16>
    %c1_33 = arith.constant 1 : index
    %c0_34 = arith.constant 0 : index
    %c0_35 = arith.constant 0 : index
    %49 = vector.load %arg4[%c1_33, %c0_34, %c0_35] : memref<9x128x128xbf16, #tpu.memory_space<vmem>>, vector<1x128x128xbf16>
    %50 = vector.shape_cast %49 : vector<1x128x128xbf16> to vector<128x128xbf16>
    %cst_36 = arith.constant dense<0.000000e+00> : vector<288x128xf32>
    %51 = tpu.matmul %48, %50, %cst_36 {dimension_numbers = #tpu.dot_dimension_numbers<[1], [0], [0], [1], [0, 0, 1, 1], [], []>} : vector<288x128xbf16>, vector<128x128xbf16>, vector<288x128xf32> -> vector<288x128xf32>
    %52 = arith.addf %47, %51 : vector<288x128xf32>
    %c2 = arith.constant 2 : index
    %c0_37 = arith.constant 0 : index
    %53 = vector.load %arg9[%c2, %c0_37] : memref<326x128xbf16, #tpu.memory_space<vmem>>, vector<288x128xbf16>
    %c2_38 = arith.constant 2 : index
    %c0_39 = arith.constant 0 : index
    %c0_40 = arith.constant 0 : index
    %54 = vector.load %arg4[%c2_38, %c0_39, %c0_40] : memref<9x128x128xbf16, #tpu.memory_space<vmem>>, vector<1x128x128xbf16>
    %55 = vector.shape_cast %54 : vector<1x128x128xbf16> to vector<128x128xbf16>
    %cst_41 = arith.constant dense<0.000000e+00> : vector<288x128xf32>
    %56 = tpu.matmul %53, %55, %cst_41 {dimension_numbers = #tpu.dot_dimension_numbers<[1], [0], [0], [1], [0, 0, 1, 1], [], []>} : vector<288x128xbf16>, vector<128x128xbf16>, vector<288x128xf32> -> vector<288x128xf32>
    %57 = arith.addf %52, %56 : vector<288x128xf32>
    %c18 = arith.constant 18 : index
    %c0_42 = arith.constant 0 : index
    %58 = vector.load %arg9[%c18, %c0_42] : memref<326x128xbf16, #tpu.memory_space<vmem>>, vector<288x128xbf16>
    %c3 = arith.constant 3 : index
    %c0_43 = arith.constant 0 : index
    %c0_44 = arith.constant 0 : index
    %59 = vector.load %arg4[%c3, %c0_43, %c0_44] : memref<9x128x128xbf16, #tpu.memory_space<vmem>>, vector<1x128x128xbf16>
    %60 = vector.shape_cast %59 : vector<1x128x128xbf16> to vector<128x128xbf16>
    %cst_45 = arith.constant dense<0.000000e+00> : vector<288x128xf32>
    %61 = tpu.matmul %58, %60, %cst_45 {dimension_numbers = #tpu.dot_dimension_numbers<[1], [0], [0], [1], [0, 0, 1, 1], [], []>} : vector<288x128xbf16>, vector<128x128xbf16>, vector<288x128xf32> -> vector<288x128xf32>
    %62 = arith.addf %57, %61 : vector<288x128xf32>
    %c19_46 = arith.constant 19 : index
    %c0_47 = arith.constant 0 : index
    %63 = vector.load %arg9[%c19_46, %c0_47] : memref<326x128xbf16, #tpu.memory_space<vmem>>, vector<288x128xbf16>
    %c4 = arith.constant 4 : index
    %c0_48 = arith.constant 0 : index
    %c0_49 = arith.constant 0 : index
    %64 = vector.load %arg4[%c4, %c0_48, %c0_49] : memref<9x128x128xbf16, #tpu.memory_space<vmem>>, vector<1x128x128xbf16>
    %65 = vector.shape_cast %64 : vector<1x128x128xbf16> to vector<128x128xbf16>
    %cst_50 = arith.constant dense<0.000000e+00> : vector<288x128xf32>
    %66 = tpu.matmul %63, %65, %cst_50 {dimension_numbers = #tpu.dot_dimension_numbers<[1], [0], [0], [1], [0, 0, 1, 1], [], []>} : vector<288x128xbf16>, vector<128x128xbf16>, vector<288x128xf32> -> vector<288x128xf32>
    %67 = arith.addf %62, %66 : vector<288x128xf32>
    %c20 = arith.constant 20 : index
    %c0_51 = arith.constant 0 : index
    %68 = vector.load %arg9[%c20, %c0_51] : memref<326x128xbf16, #tpu.memory_space<vmem>>, vector<288x128xbf16>
    %c5 = arith.constant 5 : index
    %c0_52 = arith.constant 0 : index
    %c0_53 = arith.constant 0 : index
    %69 = vector.load %arg4[%c5, %c0_52, %c0_53] : memref<9x128x128xbf16, #tpu.memory_space<vmem>>, vector<1x128x128xbf16>
    %70 = vector.shape_cast %69 : vector<1x128x128xbf16> to vector<128x128xbf16>
    %cst_54 = arith.constant dense<0.000000e+00> : vector<288x128xf32>
    %71 = tpu.matmul %68, %70, %cst_54 {dimension_numbers = #tpu.dot_dimension_numbers<[1], [0], [0], [1], [0, 0, 1, 1], [], []>} : vector<288x128xbf16>, vector<128x128xbf16>, vector<288x128xf32> -> vector<288x128xf32>
    %72 = arith.addf %67, %71 : vector<288x128xf32>
    %c36 = arith.constant 36 : index
    %c0_55 = arith.constant 0 : index
    %73 = vector.load %arg9[%c36, %c0_55] : memref<326x128xbf16, #tpu.memory_space<vmem>>, vector<288x128xbf16>
    %c6 = arith.constant 6 : index
    %c0_56 = arith.constant 0 : index
    %c0_57 = arith.constant 0 : index
    %74 = vector.load %arg4[%c6, %c0_56, %c0_57] : memref<9x128x128xbf16, #tpu.memory_space<vmem>>, vector<1x128x128xbf16>
    %75 = vector.shape_cast %74 : vector<1x128x128xbf16> to vector<128x128xbf16>
    %cst_58 = arith.constant dense<0.000000e+00> : vector<288x128xf32>
    %76 = tpu.matmul %73, %75, %cst_58 {dimension_numbers = #tpu.dot_dimension_numbers<[1], [0], [0], [1], [0, 0, 1, 1], [], []>} : vector<288x128xbf16>, vector<128x128xbf16>, vector<288x128xf32> -> vector<288x128xf32>
    %77 = arith.addf %72, %76 : vector<288x128xf32>
    %c37_59 = arith.constant 37 : index
    %c0_60 = arith.constant 0 : index
    %78 = vector.load %arg9[%c37_59, %c0_60] : memref<326x128xbf16, #tpu.memory_space<vmem>>, vector<288x128xbf16>
    %c7 = arith.constant 7 : index
    %c0_61 = arith.constant 0 : index
    %c0_62 = arith.constant 0 : index
    %79 = vector.load %arg4[%c7, %c0_61, %c0_62] : memref<9x128x128xbf16, #tpu.memory_space<vmem>>, vector<1x128x128xbf16>
    %80 = vector.shape_cast %79 : vector<1x128x128xbf16> to vector<128x128xbf16>
    %cst_63 = arith.constant dense<0.000000e+00> : vector<288x128xf32>
    %81 = tpu.matmul %78, %80, %cst_63 {dimension_numbers = #tpu.dot_dimension_numbers<[1], [0], [0], [1], [0, 0, 1, 1], [], []>} : vector<288x128xbf16>, vector<128x128xbf16>, vector<288x128xf32> -> vector<288x128xf32>
    %82 = arith.addf %77, %81 : vector<288x128xf32>
    %c38 = arith.constant 38 : index
    %c0_64 = arith.constant 0 : index
    %83 = vector.load %arg9[%c38, %c0_64] : memref<326x128xbf16, #tpu.memory_space<vmem>>, vector<288x128xbf16>
    %c8 = arith.constant 8 : index
    %c0_65 = arith.constant 0 : index
    %c0_66 = arith.constant 0 : index
    %84 = vector.load %arg4[%c8, %c0_65, %c0_66] : memref<9x128x128xbf16, #tpu.memory_space<vmem>>, vector<1x128x128xbf16>
    %85 = vector.shape_cast %84 : vector<1x128x128xbf16> to vector<128x128xbf16>
    %cst_67 = arith.constant dense<0.000000e+00> : vector<288x128xf32>
    %86 = tpu.matmul %83, %85, %cst_67 {dimension_numbers = #tpu.dot_dimension_numbers<[1], [0], [0], [1], [0, 0, 1, 1], [], []>} : vector<288x128xbf16>, vector<128x128xbf16>, vector<288x128xf32> -> vector<288x128xf32>
    %87 = arith.addf %82, %86 : vector<288x128xf32>
    %c0_68 = arith.constant 0 : index
    %c0_69 = arith.constant 0 : index
    %88 = vector.load %arg5[%c0_68, %c0_69] : memref<1x128xf32, #tpu.memory_space<vmem>>, vector<1x128xf32>
    %89 = vector.broadcast %88 : vector<1x128xf32> to vector<288x128xf32>
    %90 = arith.addf %87, %89 : vector<288x128xf32>
    %cst_70 = arith.constant 0.000000e+00 : f32
    %91 = vector.broadcast %cst_70 : f32 to vector<288x128xf32>
    %92 = arith.maximumf %90, %91 : vector<288x128xf32>
    %93 = arith.truncf %92 : vector<288x128xf32> to vector<288x128xbf16>
    %c0_71 = arith.constant 0 : index
    %c0_72 = arith.constant 0 : index
    %94 = vector.load %arg6[%c0_71, %c0_72] : memref<128x16xbf16, #tpu.memory_space<vmem>>, vector<128x16xbf16>
    %cst_73 = arith.constant dense<0.000000e+00> : vector<288x16xf32>
    %95 = tpu.matmul %93, %94, %cst_73 {dimension_numbers = #tpu.dot_dimension_numbers<[1], [0], [0], [1], [0, 0, 1, 1], [], []>} : vector<288x128xbf16>, vector<128x16xbf16>, vector<288x16xf32> -> vector<288x16xf32>
    %c0_74 = arith.constant 0 : index
    %c0_75 = arith.constant 0 : index
    %96 = vector.load %arg7[%c0_74, %c0_75] : memref<1x16xf32, #tpu.memory_space<vmem>>, vector<1x16xf32>
    %97 = vector.extract_strided_slice %95 {offsets = [0, 0], sizes = [16, 16], strides = [1, 1]} : vector<288x16xf32> to vector<16x16xf32>
    %98 = vector.broadcast %96 : vector<1x16xf32> to vector<16x16xf32>
    %99 = arith.addf %97, %98 : vector<16x16xf32>
    %c0_76 = arith.constant 0 : index
    %c0_77 = arith.constant 0 : index
    %c0_78 = arith.constant 0 : index
    %100 = vector.load %arg1[%c0_76, %c0_77, %c0_78] : memref<1x256x16xbf16, #tpu.memory_space<vmem>>, vector<1x16x16xbf16>
    %101 = vector.shape_cast %100 : vector<1x16x16xbf16> to vector<16x16xbf16>
    %102 = arith.extf %101 : vector<16x16xbf16> to vector<16x16xf32>
    %103 = arith.addf %99, %102 : vector<16x16xf32>
    %cst_79 = arith.constant 0.000000e+00 : f32
    %104 = vector.broadcast %cst_79 : f32 to vector<16x16xf32>
    %105 = arith.maximumf %103, %104 : vector<16x16xf32>
    %106 = arith.truncf %105 : vector<16x16xf32> to vector<16x16xbf16>
    %c0_80 = arith.constant 0 : index
    %c0_81 = arith.constant 0 : index
    %c0_82 = arith.constant 0 : index
    %107 = vector.load %arg8[%c0_80, %c0_81, %c0_82] : memref<1x256x16xbf16, #tpu.memory_space<vmem>>, vector<1x16x16xbf16>
    %108 = vector.shape_cast %107 : vector<1x16x16xbf16> to vector<16x16xbf16>
    %109 = vector.shape_cast %106 : vector<16x16xbf16> to vector<1x16x16xbf16>
    tpu.vector_store %arg8[%c0_80, %c0_81, %c0_82], %109 {strides = array<i32>} : memref<1x256x16xbf16, #tpu.memory_space<vmem>>, vector<1x16x16xbf16>,
    %110 = vector.extract_strided_slice %95 {offsets = [18, 0], sizes = [16, 16], strides = [1, 1]} : vector<288x16xf32> to vector<16x16xf32>
    %111 = vector.broadcast %96 : vector<1x16xf32> to vector<16x16xf32>
    %112 = arith.addf %110, %111 : vector<16x16xf32>
    %c0_83 = arith.constant 0 : index
    %c16 = arith.constant 16 : index
    %c0_84 = arith.constant 0 : index
    %113 = vector.load %arg1[%c0_83, %c16, %c0_84] : memref<1x256x16xbf16, #tpu.memory_space<vmem>>, vector<1x16x16xbf16>
    %114 = vector.shape_cast %113 : vector<1x16x16xbf16> to vector<16x16xbf16>
    %115 = arith.extf %114 : vector<16x16xbf16> to vector<16x16xf32>
    %116 = arith.addf %112, %115 : vector<16x16xf32>
    %cst_85 = arith.constant 0.000000e+00 : f32
    %117 = vector.broadcast %cst_85 : f32 to vector<16x16xf32>
    %118 = arith.maximumf %116, %117 : vector<16x16xf32>
    %119 = arith.truncf %118 : vector<16x16xf32> to vector<16x16xbf16>
    %c0_86 = arith.constant 0 : index
    %c16_87 = arith.constant 16 : index
    %c0_88 = arith.constant 0 : index
    %120 = vector.load %arg8[%c0_86, %c16_87, %c0_88] : memref<1x256x16xbf16, #tpu.memory_space<vmem>>, vector<1x16x16xbf16>
    %121 = vector.shape_cast %120 : vector<1x16x16xbf16> to vector<16x16xbf16>
    %122 = vector.shape_cast %119 : vector<16x16xbf16> to vector<1x16x16xbf16>
    tpu.vector_store %arg8[%c0_86, %c16_87, %c0_88], %122 {strides = array<i32>} : memref<1x256x16xbf16, #tpu.memory_space<vmem>>, vector<1x16x16xbf16>,
    %123 = vector.extract_strided_slice %95 {offsets = [36, 0], sizes = [16, 16], strides = [1, 1]} : vector<288x16xf32> to vector<16x16xf32>
    %124 = vector.broadcast %96 : vector<1x16xf32> to vector<16x16xf32>
    %125 = arith.addf %123, %124 : vector<16x16xf32>
    %c0_89 = arith.constant 0 : index
    %c32 = arith.constant 32 : index
    %c0_90 = arith.constant 0 : index
    %126 = vector.load %arg1[%c0_89, %c32, %c0_90] : memref<1x256x16xbf16, #tpu.memory_space<vmem>>, vector<1x16x16xbf16>
    %127 = vector.shape_cast %126 : vector<1x16x16xbf16> to vector<16x16xbf16>
    %128 = arith.extf %127 : vector<16x16xbf16> to vector<16x16xf32>
    %129 = arith.addf %125, %128 : vector<16x16xf32>
    %cst_91 = arith.constant 0.000000e+00 : f32
    %130 = vector.broadcast %cst_91 : f32 to vector<16x16xf32>
    %131 = arith.maximumf %129, %130 : vector<16x16xf32>
    %132 = arith.truncf %131 : vector<16x16xf32> to vector<16x16xbf16>
    %c0_92 = arith.constant 0 : index
    %c32_93 = arith.constant 32 : index
    %c0_94 = arith.constant 0 : index
    %133 = vector.load %arg8[%c0_92, %c32_93, %c0_94] : memref<1x256x16xbf16, #tpu.memory_space<vmem>>, vector<1x16x16xbf16>
    %134 = vector.shape_cast %133 : vector<1x16x16xbf16> to vector<16x16xbf16>
    %135 = vector.shape_cast %132 : vector<16x16xbf16> to vector<1x16x16xbf16>
    tpu.vector_store %arg8[%c0_92, %c32_93, %c0_94], %135 {strides = array<i32>} : memref<1x256x16xbf16, #tpu.memory_space<vmem>>, vector<1x16x16xbf16>,
    %136 = vector.extract_strided_slice %95 {offsets = [54, 0], sizes = [16, 16], strides = [1, 1]} : vector<288x16xf32> to vector<16x16xf32>
    %137 = vector.broadcast %96 : vector<1x16xf32> to vector<16x16xf32>
    %138 = arith.addf %136, %137 : vector<16x16xf32>
    %c0_95 = arith.constant 0 : index
    %c48 = arith.constant 48 : index
    %c0_96 = arith.constant 0 : index
    %139 = vector.load %arg1[%c0_95, %c48, %c0_96] : memref<1x256x16xbf16, #tpu.memory_space<vmem>>, vector<1x16x16xbf16>
    %140 = vector.shape_cast %139 : vector<1x16x16xbf16> to vector<16x16xbf16>
    %141 = arith.extf %140 : vector<16x16xbf16> to vector<16x16xf32>
    %142 = arith.addf %138, %141 : vector<16x16xf32>
    %cst_97 = arith.constant 0.000000e+00 : f32
    %143 = vector.broadcast %cst_97 : f32 to vector<16x16xf32>
    %144 = arith.maximumf %142, %143 : vector<16x16xf32>
    %145 = arith.truncf %144 : vector<16x16xf32> to vector<16x16xbf16>
    %c0_98 = arith.constant 0 : index
    %c48_99 = arith.constant 48 : index
    %c0_100 = arith.constant 0 : index
    %146 = vector.load %arg8[%c0_98, %c48_99, %c0_100] : memref<1x256x16xbf16, #tpu.memory_space<vmem>>, vector<1x16x16xbf16>
    %147 = vector.shape_cast %146 : vector<1x16x16xbf16> to vector<16x16xbf16>
    %148 = vector.shape_cast %145 : vector<16x16xbf16> to vector<1x16x16xbf16>
    tpu.vector_store %arg8[%c0_98, %c48_99, %c0_100], %148 {strides = array<i32>} : memref<1x256x16xbf16, #tpu.memory_space<vmem>>, vector<1x16x16xbf16>,
    %149 = vector.extract_strided_slice %95 {offsets = [72, 0], sizes = [16, 16], strides = [1, 1]} : vector<288x16xf32> to vector<16x16xf32>
    %150 = vector.broadcast %96 : vector<1x16xf32> to vector<16x16xf32>
    %151 = arith.addf %149, %150 : vector<16x16xf32>
    %c0_101 = arith.constant 0 : index
    %c64 = arith.constant 64 : index
    %c0_102 = arith.constant 0 : index
    %152 = vector.load %arg1[%c0_101, %c64, %c0_102] : memref<1x256x16xbf16, #tpu.memory_space<vmem>>, vector<1x16x16xbf16>
    %153 = vector.shape_cast %152 : vector<1x16x16xbf16> to vector<16x16xbf16>
    %154 = arith.extf %153 : vector<16x16xbf16> to vector<16x16xf32>
    %155 = arith.addf %151, %154 : vector<16x16xf32>
    %cst_103 = arith.constant 0.000000e+00 : f32
    %156 = vector.broadcast %cst_103 : f32 to vector<16x16xf32>
    %157 = arith.maximumf %155, %156 : vector<16x16xf32>
    %158 = arith.truncf %157 : vector<16x16xf32> to vector<16x16xbf16>
    %c0_104 = arith.constant 0 : index
    %c64_105 = arith.constant 64 : index
    %c0_106 = arith.constant 0 : index
    %159 = vector.load %arg8[%c0_104, %c64_105, %c0_106] : memref<1x256x16xbf16, #tpu.memory_space<vmem>>, vector<1x16x16xbf16>
    %160 = vector.shape_cast %159 : vector<1x16x16xbf16> to vector<16x16xbf16>
    %161 = vector.shape_cast %158 : vector<16x16xbf16> to vector<1x16x16xbf16>
    tpu.vector_store %arg8[%c0_104, %c64_105, %c0_106], %161 {strides = array<i32>} : memref<1x256x16xbf16, #tpu.memory_space<vmem>>, vector<1x16x16xbf16>,
    %162 = vector.extract_strided_slice %95 {offsets = [90, 0], sizes = [16, 16], strides = [1, 1]} : vector<288x16xf32> to vector<16x16xf32>
    %163 = vector.broadcast %96 : vector<1x16xf32> to vector<16x16xf32>
    %164 = arith.addf %162, %163 : vector<16x16xf32>
    %c0_107 = arith.constant 0 : index
    %c80 = arith.constant 80 : index
    %c0_108 = arith.constant 0 : index
    %165 = vector.load %arg1[%c0_107, %c80, %c0_108] : memref<1x256x16xbf16, #tpu.memory_space<vmem>>, vector<1x16x16xbf16>
    %166 = vector.shape_cast %165 : vector<1x16x16xbf16> to vector<16x16xbf16>
    %167 = arith.extf %166 : vector<16x16xbf16> to vector<16x16xf32>
    %168 = arith.addf %164, %167 : vector<16x16xf32>
    %cst_109 = arith.constant 0.000000e+00 : f32
    %169 = vector.broadcast %cst_109 : f32 to vector<16x16xf32>
    %170 = arith.maximumf %168, %169 : vector<16x16xf32>
    %171 = arith.truncf %170 : vector<16x16xf32> to vector<16x16xbf16>
    %c0_110 = arith.constant 0 : index
    %c80_111 = arith.constant 80 : index
    %c0_112 = arith.constant 0 : index
    %172 = vector.load %arg8[%c0_110, %c80_111, %c0_112] : memref<1x256x16xbf16, #tpu.memory_space<vmem>>, vector<1x16x16xbf16>
    %173 = vector.shape_cast %172 : vector<1x16x16xbf16> to vector<16x16xbf16>
    %174 = vector.shape_cast %171 : vector<16x16xbf16> to vector<1x16x16xbf16>
    tpu.vector_store %arg8[%c0_110, %c80_111, %c0_112], %174 {strides = array<i32>} : memref<1x256x16xbf16, #tpu.memory_space<vmem>>, vector<1x16x16xbf16>,
    %175 = vector.extract_strided_slice %95 {offsets = [108, 0], sizes = [16, 16], strides = [1, 1]} : vector<288x16xf32> to vector<16x16xf32>
    %176 = vector.broadcast %96 : vector<1x16xf32> to vector<16x16xf32>
    %177 = arith.addf %175, %176 : vector<16x16xf32>
    %c0_113 = arith.constant 0 : index
    %c96 = arith.constant 96 : index
    %c0_114 = arith.constant 0 : index
    %178 = vector.load %arg1[%c0_113, %c96, %c0_114] : memref<1x256x16xbf16, #tpu.memory_space<vmem>>, vector<1x16x16xbf16>
    %179 = vector.shape_cast %178 : vector<1x16x16xbf16> to vector<16x16xbf16>
    %180 = arith.extf %179 : vector<16x16xbf16> to vector<16x16xf32>
    %181 = arith.addf %177, %180 : vector<16x16xf32>
    %cst_115 = arith.constant 0.000000e+00 : f32
    %182 = vector.broadcast %cst_115 : f32 to vector<16x16xf32>
    %183 = arith.maximumf %181, %182 : vector<16x16xf32>
    %184 = arith.truncf %183 : vector<16x16xf32> to vector<16x16xbf16>
    %c0_116 = arith.constant 0 : index
    %c96_117 = arith.constant 96 : index
    %c0_118 = arith.constant 0 : index
    %185 = vector.load %arg8[%c0_116, %c96_117, %c0_118] : memref<1x256x16xbf16, #tpu.memory_space<vmem>>, vector<1x16x16xbf16>
    %186 = vector.shape_cast %185 : vector<1x16x16xbf16> to vector<16x16xbf16>
    %187 = vector.shape_cast %184 : vector<16x16xbf16> to vector<1x16x16xbf16>
    tpu.vector_store %arg8[%c0_116, %c96_117, %c0_118], %187 {strides = array<i32>} : memref<1x256x16xbf16, #tpu.memory_space<vmem>>, vector<1x16x16xbf16>,
    %188 = vector.extract_strided_slice %95 {offsets = [126, 0], sizes = [16, 16], strides = [1, 1]} : vector<288x16xf32> to vector<16x16xf32>
    %189 = vector.broadcast %96 : vector<1x16xf32> to vector<16x16xf32>
    %190 = arith.addf %188, %189 : vector<16x16xf32>
    %c0_119 = arith.constant 0 : index
    %c112 = arith.constant 112 : index
    %c0_120 = arith.constant 0 : index
    %191 = vector.load %arg1[%c0_119, %c112, %c0_120] : memref<1x256x16xbf16, #tpu.memory_space<vmem>>, vector<1x16x16xbf16>
    %192 = vector.shape_cast %191 : vector<1x16x16xbf16> to vector<16x16xbf16>
    %193 = arith.extf %192 : vector<16x16xbf16> to vector<16x16xf32>
    %194 = arith.addf %190, %193 : vector<16x16xf32>
    %cst_121 = arith.constant 0.000000e+00 : f32
    %195 = vector.broadcast %cst_121 : f32 to vector<16x16xf32>
    %196 = arith.maximumf %194, %195 : vector<16x16xf32>
    %197 = arith.truncf %196 : vector<16x16xf32> to vector<16x16xbf16>
    %c0_122 = arith.constant 0 : index
    %c112_123 = arith.constant 112 : index
    %c0_124 = arith.constant 0 : index
    %198 = vector.load %arg8[%c0_122, %c112_123, %c0_124] : memref<1x256x16xbf16, #tpu.memory_space<vmem>>, vector<1x16x16xbf16>
    %199 = vector.shape_cast %198 : vector<1x16x16xbf16> to vector<16x16xbf16>
    %200 = vector.shape_cast %197 : vector<16x16xbf16> to vector<1x16x16xbf16>
    tpu.vector_store %arg8[%c0_122, %c112_123, %c0_124], %200 {strides = array<i32>} : memref<1x256x16xbf16, #tpu.memory_space<vmem>>, vector<1x16x16xbf16>,
    %201 = vector.extract_strided_slice %95 {offsets = [144, 0], sizes = [16, 16], strides = [1, 1]} : vector<288x16xf32> to vector<16x16xf32>
    %202 = vector.broadcast %96 : vector<1x16xf32> to vector<16x16xf32>
    %203 = arith.addf %201, %202 : vector<16x16xf32>
    %c0_125 = arith.constant 0 : index
    %c128 = arith.constant 128 : index
    %c0_126 = arith.constant 0 : index
    %204 = vector.load %arg1[%c0_125, %c128, %c0_126] : memref<1x256x16xbf16, #tpu.memory_space<vmem>>, vector<1x16x16xbf16>
    %205 = vector.shape_cast %204 : vector<1x16x16xbf16> to vector<16x16xbf16>
    %206 = arith.extf %205 : vector<16x16xbf16> to vector<16x16xf32>
    %207 = arith.addf %203, %206 : vector<16x16xf32>
    %cst_127 = arith.constant 0.000000e+00 : f32
    %208 = vector.broadcast %cst_127 : f32 to vector<16x16xf32>
    %209 = arith.maximumf %207, %208 : vector<16x16xf32>
    %210 = arith.truncf %209 : vector<16x16xf32> to vector<16x16xbf16>
    %c0_128 = arith.constant 0 : index
    %c128_129 = arith.constant 128 : index
    %c0_130 = arith.constant 0 : index
    %211 = vector.load %arg8[%c0_128, %c128_129, %c0_130] : memref<1x256x16xbf16, #tpu.memory_space<vmem>>, vector<1x16x16xbf16>
    %212 = vector.shape_cast %211 : vector<1x16x16xbf16> to vector<16x16xbf16>
    %213 = vector.shape_cast %210 : vector<16x16xbf16> to vector<1x16x16xbf16>
    tpu.vector_store %arg8[%c0_128, %c128_129, %c0_130], %213 {strides = array<i32>} : memref<1x256x16xbf16, #tpu.memory_space<vmem>>, vector<1x16x16xbf16>,
    %214 = vector.extract_strided_slice %95 {offsets = [162, 0], sizes = [16, 16], strides = [1, 1]} : vector<288x16xf32> to vector<16x16xf32>
    %215 = vector.broadcast %96 : vector<1x16xf32> to vector<16x16xf32>
    %216 = arith.addf %214, %215 : vector<16x16xf32>
    %c0_131 = arith.constant 0 : index
    %c144 = arith.constant 144 : index
    %c0_132 = arith.constant 0 : index
    %217 = vector.load %arg1[%c0_131, %c144, %c0_132] : memref<1x256x16xbf16, #tpu.memory_space<vmem>>, vector<1x16x16xbf16>
    %218 = vector.shape_cast %217 : vector<1x16x16xbf16> to vector<16x16xbf16>
    %219 = arith.extf %218 : vector<16x16xbf16> to vector<16x16xf32>
    %220 = arith.addf %216, %219 : vector<16x16xf32>
    %cst_133 = arith.constant 0.000000e+00 : f32
    %221 = vector.broadcast %cst_133 : f32 to vector<16x16xf32>
    %222 = arith.maximumf %220, %221 : vector<16x16xf32>
    %223 = arith.truncf %222 : vector<16x16xf32> to vector<16x16xbf16>
    %c0_134 = arith.constant 0 : index
    %c144_135 = arith.constant 144 : index
    %c0_136 = arith.constant 0 : index
    %224 = vector.load %arg8[%c0_134, %c144_135, %c0_136] : memref<1x256x16xbf16, #tpu.memory_space<vmem>>, vector<1x16x16xbf16>
    %225 = vector.shape_cast %224 : vector<1x16x16xbf16> to vector<16x16xbf16>
    %226 = vector.shape_cast %223 : vector<16x16xbf16> to vector<1x16x16xbf16>
    tpu.vector_store %arg8[%c0_134, %c144_135, %c0_136], %226 {strides = array<i32>} : memref<1x256x16xbf16, #tpu.memory_space<vmem>>, vector<1x16x16xbf16>,
    %227 = vector.extract_strided_slice %95 {offsets = [180, 0], sizes = [16, 16], strides = [1, 1]} : vector<288x16xf32> to vector<16x16xf32>
    %228 = vector.broadcast %96 : vector<1x16xf32> to vector<16x16xf32>
    %229 = arith.addf %227, %228 : vector<16x16xf32>
    %c0_137 = arith.constant 0 : index
    %c160 = arith.constant 160 : index
    %c0_138 = arith.constant 0 : index
    %230 = vector.load %arg1[%c0_137, %c160, %c0_138] : memref<1x256x16xbf16, #tpu.memory_space<vmem>>, vector<1x16x16xbf16>
    %231 = vector.shape_cast %230 : vector<1x16x16xbf16> to vector<16x16xbf16>
    %232 = arith.extf %231 : vector<16x16xbf16> to vector<16x16xf32>
    %233 = arith.addf %229, %232 : vector<16x16xf32>
    %cst_139 = arith.constant 0.000000e+00 : f32
    %234 = vector.broadcast %cst_139 : f32 to vector<16x16xf32>
    %235 = arith.maximumf %233, %234 : vector<16x16xf32>
    %236 = arith.truncf %235 : vector<16x16xf32> to vector<16x16xbf16>
    %c0_140 = arith.constant 0 : index
    %c160_141 = arith.constant 160 : index
    %c0_142 = arith.constant 0 : index
    %237 = vector.load %arg8[%c0_140, %c160_141, %c0_142] : memref<1x256x16xbf16, #tpu.memory_space<vmem>>, vector<1x16x16xbf16>
    %238 = vector.shape_cast %237 : vector<1x16x16xbf16> to vector<16x16xbf16>
    %239 = vector.shape_cast %236 : vector<16x16xbf16> to vector<1x16x16xbf16>
    tpu.vector_store %arg8[%c0_140, %c160_141, %c0_142], %239 {strides = array<i32>} : memref<1x256x16xbf16, #tpu.memory_space<vmem>>, vector<1x16x16xbf16>,
    %240 = vector.extract_strided_slice %95 {offsets = [198, 0], sizes = [16, 16], strides = [1, 1]} : vector<288x16xf32> to vector<16x16xf32>
    %241 = vector.broadcast %96 : vector<1x16xf32> to vector<16x16xf32>
    %242 = arith.addf %240, %241 : vector<16x16xf32>
    %c0_143 = arith.constant 0 : index
    %c176 = arith.constant 176 : index
    %c0_144 = arith.constant 0 : index
    %243 = vector.load %arg1[%c0_143, %c176, %c0_144] : memref<1x256x16xbf16, #tpu.memory_space<vmem>>, vector<1x16x16xbf16>
    %244 = vector.shape_cast %243 : vector<1x16x16xbf16> to vector<16x16xbf16>
    %245 = arith.extf %244 : vector<16x16xbf16> to vector<16x16xf32>
    %246 = arith.addf %242, %245 : vector<16x16xf32>
    %cst_145 = arith.constant 0.000000e+00 : f32
    %247 = vector.broadcast %cst_145 : f32 to vector<16x16xf32>
    %248 = arith.maximumf %246, %247 : vector<16x16xf32>
    %249 = arith.truncf %248 : vector<16x16xf32> to vector<16x16xbf16>
    %c0_146 = arith.constant 0 : index
    %c176_147 = arith.constant 176 : index
    %c0_148 = arith.constant 0 : index
    %250 = vector.load %arg8[%c0_146, %c176_147, %c0_148] : memref<1x256x16xbf16, #tpu.memory_space<vmem>>, vector<1x16x16xbf16>
    %251 = vector.shape_cast %250 : vector<1x16x16xbf16> to vector<16x16xbf16>
    %252 = vector.shape_cast %249 : vector<16x16xbf16> to vector<1x16x16xbf16>
    tpu.vector_store %arg8[%c0_146, %c176_147, %c0_148], %252 {strides = array<i32>} : memref<1x256x16xbf16, #tpu.memory_space<vmem>>, vector<1x16x16xbf16>,
    %253 = vector.extract_strided_slice %95 {offsets = [216, 0], sizes = [16, 16], strides = [1, 1]} : vector<288x16xf32> to vector<16x16xf32>
    %254 = vector.broadcast %96 : vector<1x16xf32> to vector<16x16xf32>
    %255 = arith.addf %253, %254 : vector<16x16xf32>
    %c0_149 = arith.constant 0 : index
    %c192 = arith.constant 192 : index
    %c0_150 = arith.constant 0 : index
    %256 = vector.load %arg1[%c0_149, %c192, %c0_150] : memref<1x256x16xbf16, #tpu.memory_space<vmem>>, vector<1x16x16xbf16>
    %257 = vector.shape_cast %256 : vector<1x16x16xbf16> to vector<16x16xbf16>
    %258 = arith.extf %257 : vector<16x16xbf16> to vector<16x16xf32>
    %259 = arith.addf %255, %258 : vector<16x16xf32>
    %cst_151 = arith.constant 0.000000e+00 : f32
    %260 = vector.broadcast %cst_151 : f32 to vector<16x16xf32>
    %261 = arith.maximumf %259, %260 : vector<16x16xf32>
    %262 = arith.truncf %261 : vector<16x16xf32> to vector<16x16xbf16>
    %c0_152 = arith.constant 0 : index
    %c192_153 = arith.constant 192 : index
    %c0_154 = arith.constant 0 : index
    %263 = vector.load %arg8[%c0_152, %c192_153, %c0_154] : memref<1x256x16xbf16, #tpu.memory_space<vmem>>, vector<1x16x16xbf16>
    %264 = vector.shape_cast %263 : vector<1x16x16xbf16> to vector<16x16xbf16>
    %265 = vector.shape_cast %262 : vector<16x16xbf16> to vector<1x16x16xbf16>
    tpu.vector_store %arg8[%c0_152, %c192_153, %c0_154], %265 {strides = array<i32>} : memref<1x256x16xbf16, #tpu.memory_space<vmem>>, vector<1x16x16xbf16>,
    %266 = vector.extract_strided_slice %95 {offsets = [234, 0], sizes = [16, 16], strides = [1, 1]} : vector<288x16xf32> to vector<16x16xf32>
    %267 = vector.broadcast %96 : vector<1x16xf32> to vector<16x16xf32>
    %268 = arith.addf %266, %267 : vector<16x16xf32>
    %c0_155 = arith.constant 0 : index
    %c208 = arith.constant 208 : index
    %c0_156 = arith.constant 0 : index
    %269 = vector.load %arg1[%c0_155, %c208, %c0_156] : memref<1x256x16xbf16, #tpu.memory_space<vmem>>, vector<1x16x16xbf16>
    %270 = vector.shape_cast %269 : vector<1x16x16xbf16> to vector<16x16xbf16>
    %271 = arith.extf %270 : vector<16x16xbf16> to vector<16x16xf32>
    %272 = arith.addf %268, %271 : vector<16x16xf32>
    %cst_157 = arith.constant 0.000000e+00 : f32
    %273 = vector.broadcast %cst_157 : f32 to vector<16x16xf32>
    %274 = arith.maximumf %272, %273 : vector<16x16xf32>
    %275 = arith.truncf %274 : vector<16x16xf32> to vector<16x16xbf16>
    %c0_158 = arith.constant 0 : index
    %c208_159 = arith.constant 208 : index
    %c0_160 = arith.constant 0 : index
    %276 = vector.load %arg8[%c0_158, %c208_159, %c0_160] : memref<1x256x16xbf16, #tpu.memory_space<vmem>>, vector<1x16x16xbf16>
    %277 = vector.shape_cast %276 : vector<1x16x16xbf16> to vector<16x16xbf16>
    %278 = vector.shape_cast %275 : vector<16x16xbf16> to vector<1x16x16xbf16>
    tpu.vector_store %arg8[%c0_158, %c208_159, %c0_160], %278 {strides = array<i32>} : memref<1x256x16xbf16, #tpu.memory_space<vmem>>, vector<1x16x16xbf16>,
    %279 = vector.extract_strided_slice %95 {offsets = [252, 0], sizes = [16, 16], strides = [1, 1]} : vector<288x16xf32> to vector<16x16xf32>
    %280 = vector.broadcast %96 : vector<1x16xf32> to vector<16x16xf32>
    %281 = arith.addf %279, %280 : vector<16x16xf32>
    %c0_161 = arith.constant 0 : index
    %c224 = arith.constant 224 : index
    %c0_162 = arith.constant 0 : index
    %282 = vector.load %arg1[%c0_161, %c224, %c0_162] : memref<1x256x16xbf16, #tpu.memory_space<vmem>>, vector<1x16x16xbf16>
    %283 = vector.shape_cast %282 : vector<1x16x16xbf16> to vector<16x16xbf16>
    %284 = arith.extf %283 : vector<16x16xbf16> to vector<16x16xf32>
    %285 = arith.addf %281, %284 : vector<16x16xf32>
    %cst_163 = arith.constant 0.000000e+00 : f32
    %286 = vector.broadcast %cst_163 : f32 to vector<16x16xf32>
    %287 = arith.maximumf %285, %286 : vector<16x16xf32>
    %288 = arith.truncf %287 : vector<16x16xf32> to vector<16x16xbf16>
    %c0_164 = arith.constant 0 : index
    %c224_165 = arith.constant 224 : index
    %c0_166 = arith.constant 0 : index
    %289 = vector.load %arg8[%c0_164, %c224_165, %c0_166] : memref<1x256x16xbf16, #tpu.memory_space<vmem>>, vector<1x16x16xbf16>
    %290 = vector.shape_cast %289 : vector<1x16x16xbf16> to vector<16x16xbf16>
    %291 = vector.shape_cast %288 : vector<16x16xbf16> to vector<1x16x16xbf16>
    tpu.vector_store %arg8[%c0_164, %c224_165, %c0_166], %291 {strides = array<i32>} : memref<1x256x16xbf16, #tpu.memory_space<vmem>>, vector<1x16x16xbf16>,
    %292 = vector.extract_strided_slice %95 {offsets = [270, 0], sizes = [16, 16], strides = [1, 1]} : vector<288x16xf32> to vector<16x16xf32>
    %293 = vector.broadcast %96 : vector<1x16xf32> to vector<16x16xf32>
    %294 = arith.addf %292, %293 : vector<16x16xf32>
    %c0_167 = arith.constant 0 : index
    %c240 = arith.constant 240 : index
    %c0_168 = arith.constant 0 : index
    %295 = vector.load %arg1[%c0_167, %c240, %c0_168] : memref<1x256x16xbf16, #tpu.memory_space<vmem>>, vector<1x16x16xbf16>
    %296 = vector.shape_cast %295 : vector<1x16x16xbf16> to vector<16x16xbf16>
    %297 = arith.extf %296 : vector<16x16xbf16> to vector<16x16xf32>
    %298 = arith.addf %294, %297 : vector<16x16xf32>
    %cst_169 = arith.constant 0.000000e+00 : f32
    %299 = vector.broadcast %cst_169 : f32 to vector<16x16xf32>
    %300 = arith.maximumf %298, %299 : vector<16x16xf32>
    %301 = arith.truncf %300 : vector<16x16xf32> to vector<16x16xbf16>
    %c0_170 = arith.constant 0 : index
    %c240_171 = arith.constant 240 : index
    %c0_172 = arith.constant 0 : index
    %302 = vector.load %arg8[%c0_170, %c240_171, %c0_172] : memref<1x256x16xbf16, #tpu.memory_space<vmem>>, vector<1x16x16xbf16>
    %303 = vector.shape_cast %302 : vector<1x16x16xbf16> to vector<16x16xbf16>
    %304 = vector.shape_cast %301 : vector<16x16xbf16> to vector<1x16x16xbf16>
    tpu.vector_store %arg8[%c0_170, %c240_171, %c0_172], %304 {strides = array<i32>} : memref<1x256x16xbf16, #tpu.memory_space<vmem>>, vector<1x16x16xbf16>,
    return
  }
  func.func @transform_0(%arg0: i32) -> (i32, i32, i32) {
    %c0_i32 = arith.constant 0 : i32
    %c0_i32_0 = arith.constant 0 : i32
    %c0_i32_1 = arith.constant 0 : i32
    return %arg0, %c0_i32, %c0_i32_0 : i32, i32, i32
  }
  func.func @transform_1(%arg0: i32) -> (i32, i32) {
    %c0_i32 = arith.constant 0 : i32
    %c0_i32_0 = arith.constant 0 : i32
    %c0_i32_1 = arith.constant 0 : i32
    return %c0_i32, %c0_i32_0 : i32, i32
  }
  func.func @transform_2(%arg0: i32) -> (i32, i32) {
    %c0_i32 = arith.constant 0 : i32
    %c0_i32_0 = arith.constant 0 : i32
    %c0_i32_1 = arith.constant 0 : i32
    return %c0_i32, %c0_i32_0 : i32, i32
  }
  func.func @transform_3(%arg0: i32) -> (i32, i32, i32) {
    %c0_i32 = arith.constant 0 : i32
    %c0_i32_0 = arith.constant 0 : i32
    %c0_i32_1 = arith.constant 0 : i32
    %c0_i32_2 = arith.constant 0 : i32
    return %c0_i32, %c0_i32_0, %c0_i32_1 : i32, i32, i32
  }
  func.func @transform_4(%arg0: i32) -> (i32, i32) {
    %c0_i32 = arith.constant 0 : i32
    %c0_i32_0 = arith.constant 0 : i32
    %c0_i32_1 = arith.constant 0 : i32
    return %c0_i32, %c0_i32_0 : i32, i32
  }
  func.func @transform_5(%arg0: i32) -> (i32, i32) {
    %c0_i32 = arith.constant 0 : i32
    %c0_i32_0 = arith.constant 0 : i32
    %c0_i32_1 = arith.constant 0 : i32
    return %c0_i32, %c0_i32_0 : i32, i32
  }
  func.func @transform_6(%arg0: i32) -> (i32, i32) {
    %c0_i32 = arith.constant 0 : i32
    %c0_i32_0 = arith.constant 0 : i32
    %c0_i32_1 = arith.constant 0 : i32
    return %c0_i32, %c0_i32_0 : i32, i32
  }
  func.func @transform_7(%arg0: i32) -> (i32, i32, i32) {
    %c0_i32 = arith.constant 0 : i32
    %c0_i32_0 = arith.constant 0 : i32
    %c0_i32_1 = arith.constant 0 : i32
    return %arg0, %c0_i32, %c0_i32_0 : i32, i32, i32
  }
}

</mosaic_0001>

<llo_original>
// kernel: tpu_custom_call.1
$region0: #{tpu_custom_call.1}
  #allocation0 [shape = 'u32[]', space=smem, size = 0x4, offset = 0x4, fixed_abs, tag = 'smem constant byte address 0x4 - core index']
  #allocation1 [shape = 'u32[144,128]{1,0:T(1,128)}', space=vmem, size = 0x12000, scoped, tag = 'internal scratch']
  #allocation2 [shape = 'bf16[326,128]{1,0:T(8,128)(2,1)}', space=vmem, size = 0x14800, scoped, tag = 'scratch operand']
  %s0 = inlined_call_operand.vmem [shape: bf16[2,256,16], index: 0, kind: input, shape index: {}]
  %s1 = inlined_call_operand.vmem [shape: bf16[16,128], index: 1, kind: input, shape index: {}]
  %s2 = inlined_call_operand.vmem [shape: f32[1,128], index: 2, kind: input, shape index: {}]
  %s3 = inlined_call_operand.hbm [shape: bf16[9,128,128], index: 3, kind: input, shape index: {}]
  %s4 = inlined_call_operand.vmem [shape: f32[1,128], index: 4, kind: input, shape index: {}]
  %s5 = inlined_call_operand.vmem [shape: bf16[128,16], index: 5, kind: input, shape index: {}]
  %s6 = inlined_call_operand.vmem [shape: f32[1,16], index: 6, kind: input, shape index: {}]
  %s7 = inlined_call_operand.vmem [shape: bf16[2,256,16], index: 7, kind: output, shape index: {}]
  %s8 = sld [smem:[#allocation0]]
  $region65: #{tpu_custom_call.1} parent=0
    _
  %s10 = ssub.s32 1, %s8
  %s11 = scalar_select 0, %s10, %s8
  $region1: #{tpu_custom_call.1} parent=0
    #allocation3 [shape = 'u8[294912]{0}', space=vmem, size = 0x48000, scoped, tag = 'input window, operand 3, single buffered']
    #allocation4 [shape = 's32[2]{0}', space=sflag, size = 0x8, scoped, tag = 'scoped memory for tpu_custom_call.1']
    %12 = vsyncpa [#allocation4], 0
    loop: start=0, step=1, limit=4
    $region2: #{tpu_custom_call.1} parent=1 // loop_pre_header
      _
    $region3: #{tpu_custom_call.1} parent=1 // loop_header
      %s14 = sphi 0, %s18
      %p15 = scmp.ge.s32.totalorder %s14, 4
      %s24 = sphi 0, %s26
      %s27 = sphi 0, %s24
      %s28 = sphi 0, %s27
      %s44 = sphi 0, %s28
      %s48 = sphi 0, %s48
      %s50 = sphi 0, %s48
      %s51 = sphi 0, %s50
      %s65 = sphi 0, %s51
      %s69 = sphi 0, %s69
      %s71 = sphi 0, %s69
      %s72 = sphi 0, %s71
      %s86 = sphi 0, %s72
      %s90 = sphi 0, %s90
      %s92 = sphi 0, %s90
      %s93 = sphi 0, %s92
      %s107 = sphi 0, %s93
      %s111 = sphi 0, %s111
      %s113 = sphi 0, %s111
      %s114 = sphi 0, %s113
      %s128 = sphi 0, %s114
      %s132 = sphi 0, %s132
      %s134 = sphi 0, %s132
      %s135 = sphi 0, %s134
      %s149 = sphi 0, %s135
      %s153 = sphi 0, %s153
      %s155 = sphi 0, %s153
      %s156 = sphi 0, %s155
      %s170 = sphi 0, %s156
      %s176 = sphi 0, %s178
      %s179 = sphi 0, %s176
      %s180 = sphi 0, %s179
      %s196 = sphi 0, %s180
    $region4: #{tpu_custom_call.1} parent=1 // loop_header_branch
      %17 = sbr.rel (%p15) target = $region8
    $region5: #{tpu_custom_call.1} parent=1 // loop_body
      %s19 = ssub.s32 %s14, 1
      %s20 = ssub.s32 %s14, 2
      %s21 = sadd.s32 %s14, 1
      %s22 = ssub.s32 %s14, %s21
      %p23 = scmp.eq.s32.totalorder %s22, 0
      %s25 = sadd.s32 %s24, 1
      %s26 = scalar_select %p23, %s24, %s25
      %p29 = pneg %p23
      %p30 = scmp.eq.s32.totalorder %s14, 1
      %p31 = por %p29, %p30
      %p32 = scmp.ne.s32.totalorder %s24, %s27
      %p33 = scmp.eq.s32.totalorder %s14, 0
      %p34 = por %p32, %p33
      %p35 = scmp.ne.s32.totalorder %s24, %s27
      %p36 = scmp.eq.s32.totalorder %s19, 1
      %p37 = por %p35, %p36
      %p38 = scmp.ne.s32.totalorder %s27, %s28
      %p39 = scmp.eq.s32.totalorder %s19, 0
      %p40 = por %p38, %p39
      %p41 = scmp.ne.s32.totalorder %s27, %s28
      %p42 = scmp.eq.s32.totalorder %s20, 1
      %p43 = por %p41, %p42
      %p45 = scmp.ne.s32.totalorder %s28, %s44
      %p46 = scmp.eq.s32.totalorder %s20, 0
      %p47 = por %p45, %p46
      %s49 = sadd.s32 %s48, 1
      %p52 = scmp.eq.s32.totalorder %s14, 1
      %p53 = scmp.ne.s32.totalorder %s48, %s50
      %p54 = scmp.eq.s32.totalorder %s14, 0
      %p55 = por %p53, %p54
      %p56 = scmp.ne.s32.totalorder %s48, %s50
      %p57 = scmp.eq.s32.totalorder %s19, 1
      %p58 = por %p56, %p57
      %p59 = scmp.ne.s32.totalorder %s50, %s51
      %p60 = scmp.eq.s32.totalorder %s19, 0
      %p61 = por %p59, %p60
      %p62 = scmp.ne.s32.totalorder %s50, %s51
      %p63 = scmp.eq.s32.totalorder %s20, 1
      %p64 = por %p62, %p63
      %p66 = scmp.ne.s32.totalorder %s51, %s65
      %p67 = scmp.eq.s32.totalorder %s20, 0
      %p68 = por %p66, %p67
      %s70 = sadd.s32 %s69, 1
      %p73 = scmp.eq.s32.totalorder %s14, 1
      %p74 = scmp.ne.s32.totalorder %s69, %s71
      %p75 = scmp.eq.s32.totalorder %s14, 0
      %p76 = por %p74, %p75
      %p77 = scmp.ne.s32.totalorder %s69, %s71
      %p78 = scmp.eq.s32.totalorder %s19, 1
      %p79 = por %p77, %p78
      %p80 = scmp.ne.s32.totalorder %s71, %s72
      %p81 = scmp.eq.s32.totalorder %s19, 0
      %p82 = por %p80, %p81
      %p83 = scmp.ne.s32.totalorder %s71, %s72
      %p84 = scmp.eq.s32.totalorder %s20, 1
      %p85 = por %p83, %p84
      %p87 = scmp.ne.s32.totalorder %s72, %s86
      %p88 = scmp.eq.s32.totalorder %s20, 0
      %p89 = por %p87, %p88
      %s91 = sadd.s32 %s90, 1
      %p94 = scmp.eq.s32.totalorder %s14, 1
      %p95 = scmp.ne.s32.totalorder %s90, %s92
      %p96 = scmp.eq.s32.totalorder %s14, 0
      %p97 = por %p95, %p96
      %p98 = scmp.ne.s32.totalorder %s90, %s92
      %p99 = scmp.eq.s32.totalorder %s19, 1
      %p100 = por %p98, %p99
      %p101 = scmp.ne.s32.totalorder %s92, %s93
      %p102 = scmp.eq.s32.totalorder %s19, 0
      %p103 = por %p101, %p102
      %p104 = scmp.ne.s32.totalorder %s92, %s93
      %p105 = scmp.eq.s32.totalorder %s20, 1
      %p106 = por %p104, %p105
      %p108 = scmp.ne.s32.totalorder %s93, %s107
      %p109 = scmp.eq.s32.totalorder %s20, 0
      %p110 = por %p108, %p109
      %s112 = sadd.s32 %s111, 1
      %p115 = scmp.eq.s32.totalorder %s14, 1
      %p116 = scmp.ne.s32.totalorder %s111, %s113
      %p117 = scmp.eq.s32.totalorder %s14, 0
      %p118 = por %p116, %p117
      %p119 = scmp.ne.s32.totalorder %s111, %s113
      %p120 = scmp.eq.s32.totalorder %s19, 1
      %p121 = por %p119, %p120
      %p122 = scmp.ne.s32.totalorder %s113, %s114
      %p123 = scmp.eq.s32.totalorder %s19, 0
      %p124 = por %p122, %p123
      %p125 = scmp.ne.s32.totalorder %s113, %s114
      %p126 = scmp.eq.s32.totalorder %s20, 1
      %p127 = por %p125, %p126
      %p129 = scmp.ne.s32.totalorder %s114, %s128
      %p130 = scmp.eq.s32.totalorder %s20, 0
      %p131 = por %p129, %p130
      %s133 = sadd.s32 %s132, 1
      %p136 = scmp.eq.s32.totalorder %s14, 1
      %p137 = scmp.ne.s32.totalorder %s132, %s134
      %p138 = scmp.eq.s32.totalorder %s14, 0
      %p139 = por %p137, %p138
      %p140 = scmp.ne.s32.totalorder %s132, %s134
      %p141 = scmp.eq.s32.totalorder %s19, 1
      %p142 = por %p140, %p141
      %p143 = scmp.ne.s32.totalorder %s134, %s135
      %p144 = scmp.eq.s32.totalorder %s19, 0
      %p145 = por %p143, %p144
      %p146 = scmp.ne.s32.totalorder %s134, %s135
      %p147 = scmp.eq.s32.totalorder %s20, 1
      %p148 = por %p146, %p147
      %p150 = scmp.ne.s32.totalorder %s135, %s149
      %p151 = scmp.eq.s32.totalorder %s20, 0
      %p152 = por %p150, %p151
      %s154 = sadd.s32 %s153, 1
      %p157 = scmp.eq.s32.totalorder %s14, 1
      %p158 = scmp.ne.s32.totalorder %s153, %s155
      %p159 = scmp.eq.s32.totalorder %s14, 0
      %p160 = por %p158, %p159
      %p161 = scmp.ne.s32.totalorder %s153, %s155
      %p162 = scmp.eq.s32.totalorder %s19, 1
      %p163 = por %p161, %p162
      %p164 = scmp.ne.s32.totalorder %s155, %s156
      %p165 = scmp.eq.s32.totalorder %s19, 0
      %p166 = por %p164, %p165
      %p167 = scmp.ne.s32.totalorder %s155, %s156
      %p168 = scmp.eq.s32.totalorder %s20, 1
      %p169 = por %p167, %p168
      %p171 = scmp.ne.s32.totalorder %s156, %s170
      %p172 = scmp.eq.s32.totalorder %s20, 0
      %p173 = por %p171, %p172
      %s174 = ssub.s32 %s14, %s21
      %p175 = scmp.eq.s32.totalorder %s174, 0
      %s177 = sadd.s32 %s176, 1
      %s178 = scalar_select %p175, %s176, %s177
      %p181 = pneg %p175
      %p182 = scmp.eq.s32.totalorder %s14, 1
      %p183 = por %p181, %p182
      %p184 = scmp.ne.s32.totalorder %s176, %s179
      %p185 = scmp.eq.s32.totalorder %s14, 0
      %p186 = por %p184, %p185
      %p187 = scmp.ne.s32.totalorder %s176, %s179
      %p188 = scmp.eq.s32.totalorder %s19, 1
      %p189 = por %p187, %p188
      %p190 = scmp.ne.s32.totalorder %s179, %s180
      %p191 = scmp.eq.s32.totalorder %s19, 0
      %p192 = por %p190, %p191
      %p193 = scmp.ne.s32.totalorder %s179, %s180
      %p194 = scmp.eq.s32.totalorder %s20, 1
      %p195 = por %p193, %p194
      %p197 = scmp.ne.s32.totalorder %s180, %s196
      %p198 = scmp.eq.s32.totalorder %s20, 0
      %p199 = por %p197, %p198
      %p200 = scmp.le.s32.totalorder 1, %s14
      %p201 = scmp.lt.s32.totalorder %s14, 3
      %p202 = pnand %p200, %p201
      %p203 = pneg %p202
      // Predicated region
      $region9: #{tpu_custom_call.1} parent=5 // pred_check
        _
      $region10: #{tpu_custom_call.1} parent=5 // pred_check_branch
        %205 = sbr.rel (%p202) target = $region12
      $region11: #{tpu_custom_call.1} parent=5 // pred_region
        %s206 = ssub.s32 %s14, 1
        // Predicated region
        $region13: #{tpu_custom_call.1} parent=11 // pred_check
          %p207 = pneg %p61
        $region14: #{tpu_custom_call.1} parent=11 // pred_check_branch
          %209 = sbr.rel (%p207) target = $region16
        $region15: #{tpu_custom_call.1} parent=11 // pred_region
          _
        $region16: #{tpu_custom_call.1} parent=11 // pred_fallthru
          _
        // Predicated region
        $region17: #{tpu_custom_call.1} parent=11 // pred_check
          %p210 = pneg %p82
        $region18: #{tpu_custom_call.1} parent=11 // pred_check_branch
          %212 = sbr.rel (%p210) target = $region20
        $region19: #{tpu_custom_call.1} parent=11 // pred_region
          _
        $region20: #{tpu_custom_call.1} parent=11 // pred_fallthru
          _
        // Predicated region
        $region21: #{tpu_custom_call.1} parent=11 // pred_check
          %p213 = pneg %p103
        $region22: #{tpu_custom_call.1} parent=11 // pred_check_branch
          %215 = sbr.rel (%p213) target = $region24
        $region23: #{tpu_custom_call.1} parent=11 // pred_region
          %s217 = ssub.s32 9216, 9216
          %218 = vsyncadd [#allocation4], %s217
          %s219 = sshll.u32 [#allocation3], 4
          %s220 = int_to_ptr.vmem [resolvable:$true] %s219
          %225 = dma.hbm_to_vmem [thread:$0]  %s3, 9216, %s220, [#allocation4], 64, 64, 4
        $region24: #{tpu_custom_call.1} parent=11 // pred_fallthru
          _
        // Predicated region
        $region25: #{tpu_custom_call.1} parent=11 // pred_check
          %p226 = pneg %p124
        $region26: #{tpu_custom_call.1} parent=11 // pred_check_branch
          %228 = sbr.rel (%p226) target = $region28
        $region27: #{tpu_custom_call.1} parent=11 // pred_region
          _
        $region28: #{tpu_custom_call.1} parent=11 // pred_fallthru
          _
        // Predicated region
        $region29: #{tpu_custom_call.1} parent=11 // pred_check
          %p229 = pneg %p145
        $region30: #{tpu_custom_call.1} parent=11 // pred_check_branch
          %231 = sbr.rel (%p229) target = $region32
        $region31: #{tpu_custom_call.1} parent=11 // pred_region
          _
        $region32: #{tpu_custom_call.1} parent=11 // pred_fallthru
          _
        // Predicated region
        $region33: #{tpu_custom_call.1} parent=11 // pred_check
          %p232 = pneg %p166
        $region34: #{tpu_custom_call.1} parent=11 // pred_check_branch
          %234 = sbr.rel (%p232) target = $region36
        $region35: #{tpu_custom_call.1} parent=11 // pred_region
          _
        $region36: #{tpu_custom_call.1} parent=11 // pred_fallthru
          _
      $region12: #{tpu_custom_call.1} parent=5 // pred_fallthru
        _
      %p235 = scmp.lt.s32.totalorder %s14, 2
      // Predicated region
      $region37: #{tpu_custom_call.1} parent=5 // pred_check
        %p236 = pneg %p235
      $region38: #{tpu_custom_call.1} parent=5 // pred_check_branch
        %238 = sbr.rel (%p236) target = $region40
      $region39: #{tpu_custom_call.1} parent=5 // pred_region
        // Predicated region
        $region41: #{tpu_custom_call.1} parent=39 // pred_check
          %p239 = pneg %p34
        $region42: #{tpu_custom_call.1} parent=39 // pred_check_branch
          %241 = sbr.rel (%p239) target = $region44
        $region43: #{tpu_custom_call.1} parent=39 // pred_region
          %p242 = scmp.lt.s32.totalorder %s14, 1
          %s243 = scalar_select %p242, %s14, 1
          %s244 = smul.addr %s243, 32
          %s245 = smul.addr %s244, 4
          %s246 = scalar_lea.vmem %s0, %s245
        $region44: #{tpu_custom_call.1} parent=39 // pred_fallthru
          _
      $region40: #{tpu_custom_call.1} parent=5 // pred_fallthru
        _
      %p247 = scmp.le.s32.totalorder 1, %s14
      %p248 = scmp.lt.s32.totalorder %s14, 3
      %p249 = pnand %p247, %p248
      %p250 = pneg %p249
      // Predicated region
      $region45: #{tpu_custom_call.1} parent=5 // pred_check
        _
      $region46: #{tpu_custom_call.1} parent=5 // pred_check_branch
        %252 = sbr.rel (%p249) target = $region48
      $region47: #{tpu_custom_call.1} parent=5 // pred_region
        %s253 = ssub.s32 %s14, 1
        // Predicated region
        $region49: #{tpu_custom_call.1} parent=47 // pred_check
          %p254 = pneg %p103
        $region50: #{tpu_custom_call.1} parent=47 // pred_check_branch
          %256 = sbr.rel (%p254) target = $region52
        $region51: #{tpu_custom_call.1} parent=47 // pred_region
          %257 = dma.done [#allocation4], 9216
        $region52: #{tpu_custom_call.1} parent=47 // pred_fallthru
          _
        %p258 = scmp.lt.s32.totalorder %s19, 1
        %s259 = scalar_select %p258, %s19, 1
        %s260 = smul.addr %s259, 32
        %s261 = smul.addr %s260, 4
        %s262 = scalar_lea.vmem %s0, %s261
        %p263 = pneg %p40
        %p264 = pneg %p37
        %p265 = pneg %p61
        %p266 = pneg %p58
        %p267 = pneg %p82
        %p268 = pneg %p79
        %p269 = pneg %p103
        %p270 = pneg %p100
        %p271 = pneg %p124
        %p272 = pneg %p121
        %p273 = pneg %p145
        %p274 = pneg %p142
        %p275 = pneg %p166
        %p276 = pneg %p163
        %p277 = pneg %p192
        %p278 = pneg %p189
        %p279 = scmp.lt.s32.totalorder %s19, 1
        %s280 = scalar_select %p279, %s19, 1
        %s281 = smul.addr %s280, 32
        %s282 = smul.addr %s281, 4
        %s283 = scalar_lea.vmem %s7, %s282
        %p284 = scmp.lt.s32.totalorder %s19, 1
        %s285 = scalar_select %p284, %s19, 1
        %s286 = smul.addr %s285, 32
        %s287 = smul.addr %s286, 4
        %s288 = scalar_lea.vmem %s0, %s287
        %p289 = scmp.lt.s32.totalorder %s19, 1
        %s290 = scalar_select %p289, %s19, 1
        %s291 = smul.addr %s290, 32
        %s292 = smul.addr %s291, 4
        %s293 = scalar_lea.vmem %s7, %s292
        %v295 = vld [vmem:[%s288] sm:$0xf]
        %v296 = vld [vmem:[%s288 + $0x4] sm:$0xf]
        %v297 = vld [vmem:[%s288 + $0x8] sm:$0xf]
        %v298 = vld [vmem:[%s288 + $0xc] sm:$0xf]
        %v299 = vld [vmem:[%s288 + $0x10] sm:$0xf]
        %v300 = vld [vmem:[%s288 + $0x14] sm:$0xf]
        %v301 = vld [vmem:[%s288 + $0x18] sm:$0xf]
        %v302 = vld [vmem:[%s288 + $0x1c] sm:$0xf]
        %v303 = vld [vmem:[%s288 + $0x20] sm:$0xf]
        %v304 = vld [vmem:[%s288 + $0x24] sm:$0xf]
        %v305 = vld [vmem:[%s288 + $0x28] sm:$0xf]
        %v306 = vld [vmem:[%s288 + $0x2c] sm:$0xf]
        %v307 = vld [vmem:[%s288 + $0x30] sm:$0xf]
        %v308 = vld [vmem:[%s288 + $0x34] sm:$0xf]
        %v309 = vld [vmem:[%s288 + $0x38] sm:$0xf]
        %v310 = vld [vmem:[%s288 + $0x3c] sm:$0xf]
        %v311 = vld [vmem:[%s288 + $0x40] sm:$0xf]
        %v312 = vld [vmem:[%s288 + $0x44] sm:$0xf]
        %v313 = vld [vmem:[%s288 + $0x48] sm:$0xf]
        %v314 = vld [vmem:[%s288 + $0x4c] sm:$0xf]
        %v315 = vld [vmem:[%s288 + $0x50] sm:$0xf]
        %v316 = vld [vmem:[%s288 + $0x54] sm:$0xf]
        %v317 = vld [vmem:[%s288 + $0x58] sm:$0xf]
        %v318 = vld [vmem:[%s288 + $0x5c] sm:$0xf]
        %v319 = vld [vmem:[%s288 + $0x60] sm:$0xf]
        %v320 = vld [vmem:[%s288 + $0x64] sm:$0xf]
        %v321 = vld [vmem:[%s288 + $0x68] sm:$0xf]
        %v322 = vld [vmem:[%s288 + $0x6c] sm:$0xf]
        %v323 = vld [vmem:[%s288 + $0x70] sm:$0xf]
        %v324 = vld [vmem:[%s288 + $0x74] sm:$0xf]
        %v325 = vld [vmem:[%s288 + $0x78] sm:$0xf]
        %v326 = vld [vmem:[%s288 + $0x7c] sm:$0xf]
        %v327 = vld [vmem:[%s1] sm:$0xf]
        %v328 = vld [vmem:[%s1 + $0x4] sm:$0xf]
        %v329 = vld [vmem:[%s2] sm:$0x1]
        %v331 = vlaneseq
        %v332 = vshrl.u32 %v331, 7
        %v333 = vsub.s32 0, %v332
        %v334 = vrot.slane %v329, %v333
        %v368 = vunpack.c.l.b16 %v295
        %v369 = vunpack.c.l.b16 %v296
        %v370 = vunpack.c.l.b16 %v297
        %v371 = vunpack.c.l.b16 %v298
        %v372 = vunpack.c.l.b16 %v299
        %v373 = vunpack.c.l.b16 %v300
        %v374 = vunpack.c.l.b16 %v301
        %v375 = vunpack.c.l.b16 %v302
        %v376 = vunpack.c.l.b16 %v303
        %v377 = vunpack.c.l.b16 %v304
        %v378 = vunpack.c.l.b16 %v305
        %v379 = vunpack.c.l.b16 %v306
        %v380 = vunpack.c.l.b16 %v307
        %v381 = vunpack.c.l.b16 %v308
        %v382 = vunpack.c.l.b16 %v309
        %v383 = vunpack.c.l.b16 %v310
        %v384 = vunpack.c.l.b16 %v311
        %v385 = vunpack.c.l.b16 %v312
        %v386 = vunpack.c.l.b16 %v313
        %v387 = vunpack.c.l.b16 %v314
        %v388 = vunpack.c.l.b16 %v315
        %v389 = vunpack.c.l.b16 %v316
        %v390 = vunpack.c.l.b16 %v317
        %v391 = vunpack.c.l.b16 %v318
        %v392 = vunpack.c.l.b16 %v319
        %v393 = vunpack.c.l.b16 %v320
        %v394 = vunpack.c.l.b16 %v321
        %v395 = vunpack.c.l.b16 %v322
        %v396 = vunpack.c.l.b16 %v323
        %v397 = vunpack.c.l.b16 %v324
        %v398 = vunpack.c.l.b16 %v325
        %v399 = vunpack.c.l.b16 %v326
        %v400 = vpack.c.b16 %v369, %v368
        %v401 = vpack.c.b16 %v371, %v370
        %v402 = vpack.c.b16 %v373, %v372
        %v403 = vpack.c.b16 %v375, %v374
        %v404 = vpack.c.b16 %v377, %v376
        %v405 = vpack.c.b16 %v379, %v378
        %v406 = vpack.c.b16 %v381, %v380
        %v407 = vpack.c.b16 %v383, %v382
        %v408 = vpack.c.b16 %v385, %v384
        %v409 = vpack.c.b16 %v387, %v386
        %v410 = vpack.c.b16 %v389, %v388
        %v411 = vpack.c.b16 %v391, %v390
        %v412 = vpack.c.b16 %v393, %v392
        %v413 = vpack.c.b16 %v395, %v394
        %v414 = vpack.c.b16 %v397, %v396
        %v415 = vpack.c.b16 %v399, %v398
        %v418 = vunpack.c.l.b16 %v327
        %v419 = vunpack.c.l.b16 %v328
        %v420 = vpack.c.b16 %v419, %v418
        %vm422 = vcmask 130048
        %v424 = vsel %vm422, %v400, 0
        %v427 = vsel %vm422, %v401, 0
        %v430 = vsel %vm422, %v402, 0
        %v433 = vsel %vm422, %v403, 0
        %v436 = vsel %vm422, %v404, 0
        %v439 = vsel %vm422, %v405, 0
        %v442 = vsel %vm422, %v406, 0
        %v445 = vsel %vm422, %v407, 0
        %v448 = vsel %vm422, %v408, 0
        %v451 = vsel %vm422, %v409, 0
        %v454 = vsel %vm422, %v410, 0
        %v457 = vsel %vm422, %v411, 0
        %v460 = vsel %vm422, %v412, 0
        %v463 = vsel %vm422, %v413, 0
        %v466 = vsel %vm422, %v414, 0
        %v469 = vsel %vm422, %v415, 0
        %471 = vmatprep.subr.bf16.mxu0 0
        %472 = vmatpush1.bf16.msra.mxu0 %v420
        %473 = vmatprep.subr.bf16.mxu0 0
        %474 = vmatpush1.bf16.msra.mxu0 0
        %475 = vmatprep.subr.bf16.mxu0 0
        %476 = vmatpush1.bf16.msra.mxu0 0
        %477 = vmatprep.subr.bf16.mxu0 0
        %478 = vmatpush1.bf16.msra.mxu0 0
        %479 = vmatprep.subr.bf16.mxu0 0
        %480 = vmatpush1.bf16.msra.mxu0 0
        %481 = vmatprep.subr.bf16.mxu0 0
        %482 = vmatpush1.bf16.msra.mxu0 0
        %483 = vmatprep.subr.bf16.mxu0 0
        %484 = vmatpush1.bf16.msra.mxu0 0
        %485 = vmatprep.subr.bf16.mxu0 0
        %486 = vmatpush1.bf16.msra.mxu0 0
        %487 = vmatprep.subr.bf16.mxu0 0
        %488 = vmatpush1.bf16.msra.mxu0 0
        %489 = vmatprep.subr.bf16.mxu0 0
        %490 = vmatpush1.bf16.msra.mxu0 0
        %491 = vmatprep.subr.bf16.mxu0 0
        %492 = vmatpush1.bf16.msra.mxu0 0
        %493 = vmatprep.subr.bf16.mxu0 0
        %494 = vmatpush1.bf16.msra.mxu0 0
        %495 = vmatprep.subr.bf16.mxu0 0
        %496 = vmatpush1.bf16.msra.mxu0 0
        %497 = vmatprep.subr.bf16.mxu0 0
        %498 = vmatpush1.bf16.msra.mxu0 0
        %499 = vmatprep.subr.bf16.mxu0 0
        %500 = vmatpush1.bf16.msra.mxu0 0
        %501 = vmatprep.subr.bf16.mxu0 0
        %502 = vmatpush1.bf16.msra.mxu0 0
        %503 = vmatprep.mubr.bf16.mxu0 0
        %504 = vmatmul.mubr.bf16.gmra.mrb[0].mxu0 %v424
        %v505 = vpop.f32.mrb[0].mxu0
        %v506 = vadd.f32 %v334, %v505
        %v507 = vpop.f32.mrb[0].mxu0
        %v508 = vpop.f32.mrb[0].mxu0
        %v509 = vadd.f32 %v334, %v508
        %v510 = vpop.f32.mrb[0].mxu0
        %511 = vmatprep.mubr.bf16.mxu0 0
        %512 = vmatmul.mubr.bf16.gmra.mrb[0].mxu0 %v427
        %v513 = vpop.f32.mrb[0].mxu0
        %v514 = vadd.f32 %v334, %v513
        %v515 = vpop.f32.mrb[0].mxu0
        %v516 = vpop.f32.mrb[0].mxu0
        %v517 = vadd.f32 %v334, %v516
        %v518 = vpop.f32.mrb[0].mxu0
        %519 = vmatprep.mubr.bf16.mxu0 0
        %520 = vmatmul.mubr.bf16.gmra.mrb[0].mxu0 %v430
        %v521 = vpop.f32.mrb[0].mxu0
        %v522 = vadd.f32 %v334, %v521
        %v523 = vpop.f32.mrb[0].mxu0
        %v524 = vpop.f32.mrb[0].mxu0
        %v525 = vadd.f32 %v334, %v524
        %v526 = vpop.f32.mrb[0].mxu0
        %527 = vmatprep.mubr.bf16.mxu0 0
        %528 = vmatmul.mubr.bf16.gmra.mrb[0].mxu0 %v433
        %v529 = vpop.f32.mrb[0].mxu0
        %v530 = vadd.f32 %v334, %v529
        %v531 = vpop.f32.mrb[0].mxu0
        %v532 = vpop.f32.mrb[0].mxu0
        %v533 = vadd.f32 %v334, %v532
        %v534 = vpop.f32.mrb[0].mxu0
        %535 = vmatprep.mubr.bf16.mxu0 0
        %536 = vmatmul.mubr.bf16.gmra.mrb[0].mxu0 %v436
        %v537 = vpop.f32.mrb[0].mxu0
        %v538 = vadd.f32 %v334, %v537
        %v539 = vpop.f32.mrb[0].mxu0
        %v540 = vpop.f32.mrb[0].mxu0
        %v541 = vadd.f32 %v334, %v540
        %v542 = vpop.f32.mrb[0].mxu0
        %543 = vmatprep.mubr.bf16.mxu0 0
        %544 = vmatmul.mubr.bf16.gmra.mrb[0].mxu0 %v439
        %v545 = vpop.f32.mrb[0].mxu0
        %v546 = vadd.f32 %v334, %v545
        %v547 = vpop.f32.mrb[0].mxu0
        %v548 = vpop.f32.mrb[0].mxu0
        %v549 = vadd.f32 %v334, %v548
        %v550 = vpop.f32.mrb[0].mxu0
        %551 = vmatprep.mubr.bf16.mxu0 0
        %552 = vmatmul.mubr.bf16.gmra.mrb[0].mxu0 %v442
        %v553 = vpop.f32.mrb[0].mxu0
        %v554 = vadd.f32 %v334, %v553
        %v555 = vpop.f32.mrb[0].mxu0
        %v556 = vpop.f32.mrb[0].mxu0
        %v557 = vadd.f32 %v334, %v556
        %v558 = vpop.f32.mrb[0].mxu0
        %559 = vmatprep.mubr.bf16.mxu0 0
        %560 = vmatmul.mubr.bf16.gmra.mrb[0].mxu0 %v445
        %v561 = vpop.f32.mrb[0].mxu0
        %v562 = vadd.f32 %v334, %v561
        %v563 = vpop.f32.mrb[0].mxu0
        %v564 = vpop.f32.mrb[0].mxu0
        %v565 = vadd.f32 %v334, %v564
        %v566 = vpop.f32.mrb[0].mxu0
        %567 = vmatprep.mubr.bf16.mxu0 0
        %568 = vmatmul.mubr.bf16.gmra.mrb[0].mxu0 %v448
        %v569 = vpop.f32.mrb[0].mxu0
        %v570 = vadd.f32 %v334, %v569
        %v571 = vpop.f32.mrb[0].mxu0
        %v572 = vpop.f32.mrb[0].mxu0
        %v573 = vadd.f32 %v334, %v572
        %v574 = vpop.f32.mrb[0].mxu0
        %575 = vmatprep.mubr.bf16.mxu0 0
        %576 = vmatmul.mubr.bf16.gmra.mrb[0].mxu0 %v451
        %v577 = vpop.f32.mrb[0].mxu0
        %v578 = vadd.f32 %v334, %v577
        %v579 = vpop.f32.mrb[0].mxu0
        %v580 = vpop.f32.mrb[0].mxu0
        %v581 = vadd.f32 %v334, %v580
        %v582 = vpop.f32.mrb[0].mxu0
        %583 = vmatprep.mubr.bf16.mxu0 0
        %584 = vmatmul.mubr.bf16.gmra.mrb[0].mxu0 %v454
        %v585 = vpop.f32.mrb[0].mxu0
        %v586 = vadd.f32 %v334, %v585
        %v587 = vpop.f32.mrb[0].mxu0
        %v588 = vpop.f32.mrb[0].mxu0
        %v589 = vadd.f32 %v334, %v588
        %v590 = vpop.f32.mrb[0].mxu0
        %591 = vmatprep.mubr.bf16.mxu0 0
        %592 = vmatmul.mubr.bf16.gmra.mrb[0].mxu0 %v457
        %v593 = vpop.f32.mrb[0].mxu0
        %v594 = vadd.f32 %v334, %v593
        %v595 = vpop.f32.mrb[0].mxu0
        %v596 = vpop.f32.mrb[0].mxu0
        %v597 = vadd.f32 %v334, %v596
        %v598 = vpop.f32.mrb[0].mxu0
        %599 = vmatprep.mubr.bf16.mxu0 0
        %600 = vmatmul.mubr.bf16.gmra.mrb[0].mxu0 %v460
        %v601 = vpop.f32.mrb[0].mxu0
        %v602 = vadd.f32 %v334, %v601
        %v603 = vpop.f32.mrb[0].mxu0
        %v604 = vpop.f32.mrb[0].mxu0
        %v605 = vadd.f32 %v334, %v604
        %v606 = vpop.f32.mrb[0].mxu0
        %607 = vmatprep.mubr.bf16.mxu0 0
        %608 = vmatmul.mubr.bf16.gmra.mrb[0].mxu0 %v463
        %v609 = vpop.f32.mrb[0].mxu0
        %v610 = vadd.f32 %v334, %v609
        %v611 = vpop.f32.mrb[0].mxu0
        %v612 = vpop.f32.mrb[0].mxu0
        %v613 = vadd.f32 %v334, %v612
        %v614 = vpop.f32.mrb[0].mxu0
        %615 = vmatprep.mubr.bf16.mxu0 0
        %616 = vmatmul.mubr.bf16.gmra.mrb[0].mxu0 %v466
        %v617 = vpop.f32.mrb[0].mxu0
        %v618 = vadd.f32 %v334, %v617
        %v619 = vpop.f32.mrb[0].mxu0
        %v620 = vpop.f32.mrb[0].mxu0
        %v621 = vadd.f32 %v334, %v620
        %v622 = vpop.f32.mrb[0].mxu0
        %623 = vmatprep.mubr.bf16.mxu0 0
        %624 = vmatmul.mubr.bf16.gmra.mrb[0].mxu0 %v469
        %v625 = vpop.f32.mrb[0].mxu0
        %v626 = vadd.f32 %v334, %v625
        %v627 = vpop.f32.mrb[0].mxu0
        %v628 = vpop.f32.mrb[0].mxu0
        %v629 = vadd.f32 %v334, %v628
        %v630 = vpop.f32.mrb[0].mxu0
        %631 = vdwg.mxu0
        %v632 = vmax.f32 %v506, 0.0
        %v633 = vmax.f32 %v509, 0.0
        %v634 = vmax.f32 %v514, 0.0
        %v635 = vmax.f32 %v517, 0.0
        %v636 = vmax.f32 %v522, 0.0
        %v637 = vmax.f32 %v525, 0.0
        %v638 = vmax.f32 %v530, 0.0
        %v639 = vmax.f32 %v533, 0.0
        %v640 = vmax.f32 %v538, 0.0
        %v641 = vmax.f32 %v541, 0.0
        %v642 = vmax.f32 %v546, 0.0
        %v643 = vmax.f32 %v549, 0.0
        %v644 = vmax.f32 %v554, 0.0
        %v645 = vmax.f32 %v557, 0.0
        %v646 = vmax.f32 %v562, 0.0
        %v647 = vmax.f32 %v565, 0.0
        %v648 = vmax.f32 %v570, 0.0
        %v649 = vmax.f32 %v573, 0.0
        %v650 = vmax.f32 %v578, 0.0
        %v651 = vmax.f32 %v581, 0.0
        %v652 = vmax.f32 %v586, 0.0
        %v653 = vmax.f32 %v589, 0.0
        %v654 = vmax.f32 %v594, 0.0
        %v655 = vmax.f32 %v597, 0.0
        %v656 = vmax.f32 %v602, 0.0
        %v657 = vmax.f32 %v605, 0.0
        %v658 = vmax.f32 %v610, 0.0
        %v659 = vmax.f32 %v613, 0.0
        %v660 = vmax.f32 %v618, 0.0
        %v661 = vmax.f32 %v621, 0.0
        %v662 = vmax.f32 %v626, 0.0
        %v663 = vmax.f32 %v629, 0.0
        %v664 = vpack.c.bf16 %v633, %v632
        %v665 = vpack.c.bf16 %v635, %v634
        %v666 = vpack.c.bf16 %v637, %v636
        %v667 = vpack.c.bf16 %v639, %v638
        %v668 = vpack.c.bf16 %v641, %v640
        %v669 = vpack.c.bf16 %v643, %v642
        %v670 = vpack.c.bf16 %v645, %v644
        %v671 = vpack.c.bf16 %v647, %v646
        %v672 = vpack.c.bf16 %v649, %v648
        %v673 = vpack.c.bf16 %v651, %v650
        %v674 = vpack.c.bf16 %v653, %v652
        %v675 = vpack.c.bf16 %v655, %v654
        %v676 = vpack.c.bf16 %v657, %v656
        %v677 = vpack.c.bf16 %v659, %v658
        %v678 = vpack.c.bf16 %v661, %v660
        %v679 = vpack.c.bf16 %v663, %v662
        %680 = vst [vmem:[#allocation2] sm:$0xf] 0
        %681 = vst [vmem:[#allocation2 + $0x4] sm:$0xf] 0
        %682 = vst [vmem:[#allocation2 + $0x8] sm:$0xf] 0
        %683 = vst [vmem:[#allocation2 + $0xc] sm:$0xf] 0
        %684 = vst [vmem:[#allocation2 + $0x10] sm:$0xf] 0
        %685 = vst [vmem:[#allocation2 + $0x14] sm:$0xf] 0
        %686 = vst [vmem:[#allocation2 + $0x18] sm:$0xf] 0
        %687 = vst [vmem:[#allocation2 + $0x1c] sm:$0xf] 0
        %688 = vst [vmem:[#allocation2 + $0x20] sm:$0xf] 0
        %689 = vst [vmem:[#allocation2 + $0x24] sm:$0xf] 0
        %690 = vst [vmem:[#allocation2 + $0x28] sm:$0xf] 0
        %691 = vst [vmem:[#allocation2 + $0x2c] sm:$0xf] 0
        %692 = vst [vmem:[#allocation2 + $0x30] sm:$0xf] 0
        %693 = vst [vmem:[#allocation2 + $0x34] sm:$0xf] 0
        %694 = vst [vmem:[#allocation2 + $0x38] sm:$0xf] 0
        %695 = vst [vmem:[#allocation2 + $0x3c] sm:$0xf] 0
        %696 = vst [vmem:[#allocation2 + $0x40] sm:$0xf] 0
        %697 = vst [vmem:[#allocation2 + $0x44] sm:$0xf] 0
        %698 = vst [vmem:[#allocation2 + $0x48] sm:$0xf] 0
        %699 = vst [vmem:[#allocation2 + $0x4c] sm:$0xf] 0
        %700 = vst [vmem:[#allocation2 + $0x50] sm:$0xf] 0
        %701 = vst [vmem:[#allocation2 + $0x54] sm:$0xf] 0
        %702 = vst [vmem:[#allocation2 + $0x58] sm:$0xf] 0
        %703 = vst [vmem:[#allocation2 + $0x5c] sm:$0xf] 0
        %704 = vst [vmem:[#allocation2 + $0x60] sm:$0xf] 0
        %705 = vst [vmem:[#allocation2 + $0x64] sm:$0xf] 0
        %706 = vst [vmem:[#allocation2 + $0x68] sm:$0xf] 0
        %707 = vst [vmem:[#allocation2 + $0x6c] sm:$0xf] 0
        %708 = vst [vmem:[#allocation2 + $0x70] sm:$0xf] 0
        %709 = vst [vmem:[#allocation2 + $0x74] sm:$0xf] 0
        %710 = vst [vmem:[#allocation2 + $0x78] sm:$0xf] 0
        %711 = vst [vmem:[#allocation2 + $0x7c] sm:$0xf] 0
        %712 = vst [vmem:[#allocation2 + $0x80] sm:$0xf] 0
        %713 = vst [vmem:[#allocation2 + $0x84] sm:$0xf] 0
        %714 = vst [vmem:[#allocation2 + $0x88] sm:$0xf] 0
        %715 = vst [vmem:[#allocation2 + $0x8c] sm:$0xf] 0
        %716 = vst [vmem:[#allocation2 + $0x90] sm:$0xf] 0
        %717 = vst [vmem:[#allocation2 + $0x94] sm:$0xf] 0
        %718 = vst [vmem:[#allocation2 + $0x98] sm:$0xf] 0
        %719 = vst [vmem:[#allocation2 + $0x9c] sm:$0xf] 0
        %720 = vst [vmem:[#allocation2 + $0xa0] sm:$0x7] 0
        %v722 = vunpack.c.l.b16 %v664
        %v723 = vunpack.c.h.b16 %v664
        %v724 = vpack.c.b16 %v722, %v722
        %v725 = vpack.c.b16 %v723, %v723
        %vm726 = vsmask.f32 1280
        %vm727 = vsmask.f32 5392
        %vm728 = vmor %vm726, %vm727
        %v730 = vshrl.u32 %v724, 16
        %v732 = vrot.slane %v730, 6
        %v733 = vshll.u32 %v724, 16
        %v735 = vrot.slane %v733, 7
        %v736 = vor.u32 %v732, %v735
        %v737 = vrot.slane %v736, 4
        %v739 = vshrl.u32 %v725, 16
        %v741 = vrot.slane %v739, 6
        %v742 = vshll.u32 %v725, 16
        %v744 = vrot.slane %v742, 7
        %v745 = vor.u32 %v741, %v744
        %v746 = vsel %vm728, %v737, %v745
        %v747 = vrot.slane %v745, 4
        %vm751 = vcmask 1043457
        %vm752 = vsmask.f32 7942
        %vm753 = vmand %vm751, %vm752
        %v754 = vld [vmem:[#allocation2 + $0x8] sm:$0xe]
        %v755 = vsel %vm753, %v736, %v754
        %756 = vst [vmem:[#allocation2 + $0x8] sm:$0xe] %v755
        %757 = vst [vmem:[#allocation2 + $0xc] sm:$0xf] %v746
        %vm758 = vcmask 1041408
        %vm759 = vmand %vm758, %vm726
        %v760 = vld [vmem:[#allocation2 + $0x10] sm:$0x3]
        %v761 = vsel %vm759, %v747, %v760
        %762 = vst [vmem:[#allocation2 + $0x10] sm:$0x3] %v761
        %v764 = vunpack.c.l.b16 %v665
        %v765 = vunpack.c.h.b16 %v665
        %v766 = vpack.c.b16 %v764, %v764
        %v767 = vpack.c.b16 %v765, %v765
        %vm768 = vsmask.f32 2304
        %vm769 = vsmask.f32 6416
        %vm770 = vmor %vm768, %vm769
        %v772 = vshrl.u32 %v766, 16
        %v774 = vrot.slane %v772, 5
        %v775 = vshll.u32 %v766, 16
        %v777 = vrot.slane %v775, 6
        %v778 = vor.u32 %v774, %v777
        %v779 = vrot.slane %v778, 4
        %v781 = vshrl.u32 %v767, 16
        %v783 = vrot.slane %v781, 5
        %v784 = vshll.u32 %v767, 16
        %v786 = vrot.slane %v784, 6
        %v787 = vor.u32 %v783, %v786
        %v788 = vsel %vm770, %v779, %v787
        %v789 = vrot.slane %v787, 4
        %vm793 = vcmask 1043458
        %vm794 = vsmask.f32 7946
        %vm795 = vmand %vm793, %vm794
        %v796 = vld [vmem:[#allocation2 + $0x10] sm:$0xc]
        %v797 = vsel %vm795, %v778, %v796
        %798 = vst [vmem:[#allocation2 + $0x10] sm:$0xc] %v797
        %799 = vst [vmem:[#allocation2 + $0x14] sm:$0xf] %v788
        %vm800 = vcmask 1042432
        %vm801 = vmand %vm800, %vm768
        %v802 = vld [vmem:[#allocation2 + $0x18] sm:$0x7]
        %v803 = vsel %vm801, %v789, %v802
        %804 = vst [vmem:[#allocation2 + $0x18] sm:$0x7] %v803
        %v806 = vunpack.c.l.b16 %v666
        %v807 = vunpack.c.h.b16 %v666
        %v808 = vpack.c.b16 %v806, %v806
        %v809 = vpack.c.b16 %v807, %v807
        %vm810 = vsmask.f32 3328
        %vm811 = vsmask.f32 7440
        %vm812 = vmor %vm810, %vm811
        %v814 = vshll.u32 %v808, 16
        %v816 = vrot.slane %v814, 5
        %v817 = vshrl.u32 %v808, 16
        %v819 = vrot.slane %v817, 4
        %v820 = vor.u32 %v819, %v816
        %v821 = vrot.slane %v820, 4
        %v823 = vshll.u32 %v809, 16
        %v825 = vrot.slane %v823, 5
        %v826 = vsel %vm812, %v821, %v825
        %v827 = vshrl.u32 %v809, 16
        %v829 = vrot.slane %v827, 4
        %v830 = vor.u32 %v829, %v825
        %v831 = vrot.slane %v830, 4
        %vm835 = vcmask 1043459
        %vm836 = vsmask.f32 7950
        %vm837 = vmand %vm835, %vm836
        %v838 = vld [vmem:[#allocation2 + $0x18] sm:$0x8]
        %v839 = vsel %vm837, %v816, %v838
        %840 = vst [vmem:[#allocation2 + $0x18] sm:$0x8] %v839
        %841 = vst [vmem:[#allocation2 + $0x1c] sm:$0xf] %v826
        %vm842 = vcmask 1043456
        %vm843 = vmand %vm842, %vm810
        %v844 = vld [vmem:[#allocation2 + $0x20] sm:$0xf]
        %v845 = vsel %vm843, %v831, %v844
        %846 = vst [vmem:[#allocation2 + $0x20] sm:$0xf] %v845
        %v848 = vunpack.c.l.b16 %v667
        %v849 = vunpack.c.h.b16 %v667
        %v850 = vpack.c.b16 %v848, %v848
        %v851 = vpack.c.b16 %v849, %v849
        %vm852 = vsmask.f32 256
        %vm853 = vsmask.f32 4368
        %vm854 = vmor %vm852, %vm853
        %v856 = vshrl.u32 %v850, 16
        %v858 = vrot.slane %v856, 7
        %v859 = vshll.u32 %v850, 16
        %v861 = vor.u32 %v858, %v859
        %v862 = vrot.slane %v858, 4
        %v864 = vshrl.u32 %v851, 16
        %v866 = vrot.slane %v864, 7
        %v867 = vshll.u32 %v851, 16
        %v869 = vor.u32 %v866, %v867
        %v870 = vsel %vm854, %v862, %v869
        %v871 = vrot.slane %v866, 4
        %vm875 = vsmask.f32 7938
        %vm876 = vmand %vm842, %vm875
        %v877 = vld [vmem:[#allocation2 + $0x24] sm:$0xf]
        %v878 = vsel %vm876, %v861, %v877
        %879 = vst [vmem:[#allocation2 + $0x24] sm:$0xf] %v878
        %880 = vst [vmem:[#allocation2 + $0x28] sm:$0xf] %v870
        %vm881 = vcmask 1040384
        %vm882 = vmand %vm881, %vm852
        %v883 = vld [vmem:[#allocation2 + $0x2c] sm:$0x1]
        %v884 = vsel %vm882, %v871, %v883
        %885 = vst [vmem:[#allocation2 + $0x2c] sm:$0x1] %v884
        %v887 = vunpack.c.l.b16 %v668
        %v888 = vunpack.c.h.b16 %v668
        %v889 = vpack.c.b16 %v887, %v887
        %v890 = vpack.c.b16 %v888, %v888
        %v892 = vshrl.u32 %v889, 16
        %v894 = vrot.slane %v892, 6
        %v895 = vshll.u32 %v889, 16
        %v897 = vrot.slane %v895, 7
        %v898 = vor.u32 %v894, %v897
        %v899 = vrot.slane %v898, 4
        %v901 = vshrl.u32 %v890, 16
        %v903 = vrot.slane %v901, 6
        %v904 = vshll.u32 %v890, 16
        %v906 = vrot.slane %v904, 7
        %v907 = vor.u32 %v903, %v906
        %v908 = vsel %vm728, %v899, %v907
        %v909 = vrot.slane %v907, 4
        %v913 = vld [vmem:[#allocation2 + $0x2c] sm:$0xe]
        %v914 = vsel %vm753, %v898, %v913
        %915 = vst [vmem:[#allocation2 + $0x2c] sm:$0xe] %v914
        %916 = vst [vmem:[#allocation2 + $0x30] sm:$0xf] %v908
        %v917 = vld [vmem:[#allocation2 + $0x34] sm:$0x3]
        %v918 = vsel %vm759, %v909, %v917
        %919 = vst [vmem:[#allocation2 + $0x34] sm:$0x3] %v918
        %v921 = vunpack.c.l.b16 %v669
        %v922 = vunpack.c.h.b16 %v669
        %v923 = vpack.c.b16 %v921, %v921
        %v924 = vpack.c.b16 %v922, %v922
        %v926 = vshrl.u32 %v923, 16
        %v928 = vrot.slane %v926, 5
        %v929 = vshll.u32 %v923, 16
        %v931 = vrot.slane %v929, 6
        %v932 = vor.u32 %v928, %v931
        %v933 = vrot.slane %v932, 4
        %v935 = vshrl.u32 %v924, 16
        %v937 = vrot.slane %v935, 5
        %v938 = vshll.u32 %v924, 16
        %v940 = vrot.slane %v938, 6
        %v941 = vor.u32 %v937, %v940
        %v942 = vsel %vm770, %v933, %v941
        %v943 = vrot.slane %v941, 4
        %v947 = vld [vmem:[#allocation2 + $0x34] sm:$0xc]
        %v948 = vsel %vm795, %v932, %v947
        %949 = vst [vmem:[#allocation2 + $0x34] sm:$0xc] %v948
        %950 = vst [vmem:[#allocation2 + $0x38] sm:$0xf] %v942
        %v951 = vld [vmem:[#allocation2 + $0x3c] sm:$0x7]
        %v952 = vsel %vm801, %v943, %v951
        %953 = vst [vmem:[#allocation2 + $0x3c] sm:$0x7] %v952
        %v955 = vunpack.c.l.b16 %v670
        %v956 = vunpack.c.h.b16 %v670
        %v957 = vpack.c.b16 %v955, %v955
        %v958 = vpack.c.b16 %v956, %v956
        %v960 = vshll.u32 %v957, 16
        %v962 = vrot.slane %v960, 5
        %v963 = vshrl.u32 %v957, 16
        %v965 = vrot.slane %v963, 4
        %v966 = vor.u32 %v965, %v962
        %v967 = vrot.slane %v966, 4
        %v969 = vshll.u32 %v958, 16
        %v971 = vrot.slane %v969, 5
        %v972 = vsel %vm812, %v967, %v971
        %v973 = vshrl.u32 %v958, 16
        %v975 = vrot.slane %v973, 4
        %v976 = vor.u32 %v975, %v971
        %v977 = vrot.slane %v976, 4
        %v981 = vld [vmem:[#allocation2 + $0x3c] sm:$0x8]
        %v982 = vsel %vm837, %v962, %v981
        %983 = vst [vmem:[#allocation2 + $0x3c] sm:$0x8] %v982
        %984 = vst [vmem:[#allocation2 + $0x40] sm:$0xf] %v972
        %v985 = vld [vmem:[#allocation2 + $0x44] sm:$0xf]
        %v986 = vsel %vm843, %v977, %v985
        %987 = vst [vmem:[#allocation2 + $0x44] sm:$0xf] %v986
        %v989 = vunpack.c.l.b16 %v671
        %v990 = vunpack.c.h.b16 %v671
        %v991 = vpack.c.b16 %v989, %v989
        %v992 = vpack.c.b16 %v990, %v990
        %v994 = vshrl.u32 %v991, 16
        %v996 = vrot.slane %v994, 7
        %v997 = vshll.u32 %v991, 16
        %v999 = vor.u32 %v996, %v997
        %v1000 = vrot.slane %v996, 4
        %v1002 = vshrl.u32 %v992, 16
        %v1004 = vrot.slane %v1002, 7
        %v1005 = vshll.u32 %v992, 16
        %v1007 = vor.u32 %v1004, %v1005
        %v1008 = vsel %vm854, %v1000, %v1007
        %v1009 = vrot.slane %v1004, 4
        %v1013 = vld [vmem:[#allocation2 + $0x48] sm:$0xf]
        %v1014 = vsel %vm876, %v999, %v1013
        %1015 = vst [vmem:[#allocation2 + $0x48] sm:$0xf] %v1014
        %1016 = vst [vmem:[#allocation2 + $0x4c] sm:$0xf] %v1008
        %v1017 = vld [vmem:[#allocation2 + $0x50] sm:$0x1]
        %v1018 = vsel %vm882, %v1009, %v1017
        %1019 = vst [vmem:[#allocation2 + $0x50] sm:$0x1] %v1018
        %v1021 = vunpack.c.l.b16 %v672
        %v1022 = vunpack.c.h.b16 %v672
        %v1023 = vpack.c.b16 %v1021, %v1021
        %v1024 = vpack.c.b16 %v1022, %v1022
        %v1026 = vshrl.u32 %v1023, 16
        %v1028 = vrot.slane %v1026, 6
        %v1029 = vshll.u32 %v1023, 16
        %v1031 = vrot.slane %v1029, 7
        %v1032 = vor.u32 %v1028, %v1031
        %v1033 = vrot.slane %v1032, 4
        %v1035 = vshrl.u32 %v1024, 16
        %v1037 = vrot.slane %v1035, 6
        %v1038 = vshll.u32 %v1024, 16
        %v1040 = vrot.slane %v1038, 7
        %v1041 = vor.u32 %v1037, %v1040
        %v1042 = vsel %vm728, %v1033, %v1041
        %v1043 = vrot.slane %v1041, 4
        %v1047 = vld [vmem:[#allocation2 + $0x50] sm:$0xe]
        %v1048 = vsel %vm753, %v1032, %v1047
        %1049 = vst [vmem:[#allocation2 + $0x50] sm:$0xe] %v1048
        %1050 = vst [vmem:[#allocation2 + $0x54] sm:$0xf] %v1042
        %v1051 = vld [vmem:[#allocation2 + $0x58] sm:$0x3]
        %v1052 = vsel %vm759, %v1043, %v1051
        %1053 = vst [vmem:[#allocation2 + $0x58] sm:$0x3] %v1052
        %v1055 = vunpack.c.l.b16 %v673
        %v1056 = vunpack.c.h.b16 %v673
        %v1057 = vpack.c.b16 %v1055, %v1055
        %v1058 = vpack.c.b16 %v1056, %v1056
        %v1060 = vshrl.u32 %v1057, 16
        %v1062 = vrot.slane %v1060, 5
        %v1063 = vshll.u32 %v1057, 16
        %v1065 = vrot.slane %v1063, 6
        %v1066 = vor.u32 %v1062, %v1065
        %v1067 = vrot.slane %v1066, 4
        %v1069 = vshrl.u32 %v1058, 16
        %v1071 = vrot.slane %v1069, 5
        %v1072 = vshll.u32 %v1058, 16
        %v1074 = vrot.slane %v1072, 6
        %v1075 = vor.u32 %v1071, %v1074
        %v1076 = vsel %vm770, %v1067, %v1075
        %v1077 = vrot.slane %v1075, 4
        %v1081 = vld [vmem:[#allocation2 + $0x58] sm:$0xc]
        %v1082 = vsel %vm795, %v1066, %v1081
        %1083 = vst [vmem:[#allocation2 + $0x58] sm:$0xc] %v1082
        %1084 = vst [vmem:[#allocation2 + $0x5c] sm:$0xf] %v1076
        %v1085 = vld [vmem:[#allocation2 + $0x60] sm:$0x7]
        %v1086 = vsel %vm801, %v1077, %v1085
        %1087 = vst [vmem:[#allocation2 + $0x60] sm:$0x7] %v1086
        %v1089 = vunpack.c.l.b16 %v674
        %v1090 = vunpack.c.h.b16 %v674
        %v1091 = vpack.c.b16 %v1089, %v1089
        %v1092 = vpack.c.b16 %v1090, %v1090
        %v1094 = vshll.u32 %v1091, 16
        %v1096 = vrot.slane %v1094, 5
        %v1097 = vshrl.u32 %v1091, 16
        %v1099 = vrot.slane %v1097, 4
        %v1100 = vor.u32 %v1099, %v1096
        %v1101 = vrot.slane %v1100, 4
        %v1103 = vshll.u32 %v1092, 16
        %v1105 = vrot.slane %v1103, 5
        %v1106 = vsel %vm812, %v1101, %v1105
        %v1107 = vshrl.u32 %v1092, 16
        %v1109 = vrot.slane %v1107, 4
        %v1110 = vor.u32 %v1109, %v1105
        %v1111 = vrot.slane %v1110, 4
        %v1115 = vld [vmem:[#allocation2 + $0x60] sm:$0x8]
        %v1116 = vsel %vm837, %v1096, %v1115
        %1117 = vst [vmem:[#allocation2 + $0x60] sm:$0x8] %v1116
        %1118 = vst [vmem:[#allocation2 + $0x64] sm:$0xf] %v1106
        %v1119 = vld [vmem:[#allocation2 + $0x68] sm:$0xf]
        %v1120 = vsel %vm843, %v1111, %v1119
        %1121 = vst [vmem:[#allocation2 + $0x68] sm:$0xf] %v1120
        %v1123 = vunpack.c.l.b16 %v675
        %v1124 = vunpack.c.h.b16 %v675
        %v1125 = vpack.c.b16 %v1123, %v1123
        %v1126 = vpack.c.b16 %v1124, %v1124
        %v1128 = vshrl.u32 %v1125, 16
        %v1130 = vrot.slane %v1128, 7
        %v1131 = vshll.u32 %v1125, 16
        %v1133 = vor.u32 %v1130, %v1131
        %v1134 = vrot.slane %v1130, 4
        %v1136 = vshrl.u32 %v1126, 16
        %v1138 = vrot.slane %v1136, 7
        %v1139 = vshll.u32 %v1126, 16
        %v1141 = vor.u32 %v1138, %v1139
        %v1142 = vsel %vm854, %v1134, %v1141
        %v1143 = vrot.slane %v1138, 4
        %v1147 = vld [vmem:[#allocation2 + $0x6c] sm:$0xf]
        %v1148 = vsel %vm876, %v1133, %v1147
        %1149 = vst [vmem:[#allocation2 + $0x6c] sm:$0xf] %v1148
        %1150 = vst [vmem:[#allocation2 + $0x70] sm:$0xf] %v1142
        %v1151 = vld [vmem:[#allocation2 + $0x74] sm:$0x1]
        %v1152 = vsel %vm882, %v1143, %v1151
        %1153 = vst [vmem:[#allocation2 + $0x74] sm:$0x1] %v1152
        %v1155 = vunpack.c.l.b16 %v676
        %v1156 = vunpack.c.h.b16 %v676
        %v1157 = vpack.c.b16 %v1155, %v1155
        %v1158 = vpack.c.b16 %v1156, %v1156
        %v1160 = vshrl.u32 %v1157, 16
        %v1162 = vrot.slane %v1160, 6
        %v1163 = vshll.u32 %v1157, 16
        %v1165 = vrot.slane %v1163, 7
        %v1166 = vor.u32 %v1162, %v1165
        %v1167 = vrot.slane %v1166, 4
        %v1169 = vshrl.u32 %v1158, 16
        %v1171 = vrot.slane %v1169, 6
        %v1172 = vshll.u32 %v1158, 16
        %v1174 = vrot.slane %v1172, 7
        %v1175 = vor.u32 %v1171, %v1174
        %v1176 = vsel %vm728, %v1167, %v1175
        %v1177 = vrot.slane %v1175, 4
        %v1181 = vld [vmem:[#allocation2 + $0x74] sm:$0xe]
        %v1182 = vsel %vm753, %v1166, %v1181
        %1183 = vst [vmem:[#allocation2 + $0x74] sm:$0xe] %v1182
        %1184 = vst [vmem:[#allocation2 + $0x78] sm:$0xf] %v1176
        %v1185 = vld [vmem:[#allocation2 + $0x7c] sm:$0x3]
        %v1186 = vsel %vm759, %v1177, %v1185
        %1187 = vst [vmem:[#allocation2 + $0x7c] sm:$0x3] %v1186
        %v1189 = vunpack.c.l.b16 %v677
        %v1190 = vunpack.c.h.b16 %v677
        %v1191 = vpack.c.b16 %v1189, %v1189
        %v1192 = vpack.c.b16 %v1190, %v1190
        %v1194 = vshrl.u32 %v1191, 16
        %v1196 = vrot.slane %v1194, 5
        %v1197 = vshll.u32 %v1191, 16
        %v1199 = vrot.slane %v1197, 6
        %v1200 = vor.u32 %v1196, %v1199
        %v1201 = vrot.slane %v1200, 4
        %v1203 = vshrl.u32 %v1192, 16
        %v1205 = vrot.slane %v1203, 5
        %v1206 = vshll.u32 %v1192, 16
        %v1208 = vrot.slane %v1206, 6
        %v1209 = vor.u32 %v1205, %v1208
        %v1210 = vsel %vm770, %v1201, %v1209
        %v1211 = vrot.slane %v1209, 4
        %v1215 = vld [vmem:[#allocation2 + $0x7c] sm:$0xc]
        %v1216 = vsel %vm795, %v1200, %v1215
        %1217 = vst [vmem:[#allocation2 + $0x7c] sm:$0xc] %v1216
        %1218 = vst [vmem:[#allocation2 + $0x80] sm:$0xf] %v1210
        %v1219 = vld [vmem:[#allocation2 + $0x84] sm:$0x7]
        %v1220 = vsel %vm801, %v1211, %v1219
        %1221 = vst [vmem:[#allocation2 + $0x84] sm:$0x7] %v1220
        %v1223 = vunpack.c.l.b16 %v678
        %v1224 = vunpack.c.h.b16 %v678
        %v1225 = vpack.c.b16 %v1223, %v1223
        %v1226 = vpack.c.b16 %v1224, %v1224
        %v1228 = vshll.u32 %v1225, 16
        %v1230 = vrot.slane %v1228, 5
        %v1231 = vshrl.u32 %v1225, 16
        %v1233 = vrot.slane %v1231, 4
        %v1234 = vor.u32 %v1233, %v1230
        %v1235 = vrot.slane %v1234, 4
        %v1237 = vshll.u32 %v1226, 16
        %v1239 = vrot.slane %v1237, 5
        %v1240 = vsel %vm812, %v1235, %v1239
        %v1241 = vshrl.u32 %v1226, 16
        %v1243 = vrot.slane %v1241, 4
        %v1244 = vor.u32 %v1243, %v1239
        %v1245 = vrot.slane %v1244, 4
        %v1249 = vld [vmem:[#allocation2 + $0x84] sm:$0x8]
        %v1250 = vsel %vm837, %v1230, %v1249
        %1251 = vst [vmem:[#allocation2 + $0x84] sm:$0x8] %v1250
        %1252 = vst [vmem:[#allocation2 + $0x88] sm:$0xf] %v1240
        %v1253 = vld [vmem:[#allocation2 + $0x8c] sm:$0xf]
        %v1254 = vsel %vm843, %v1245, %v1253
        %1255 = vst [vmem:[#allocation2 + $0x8c] sm:$0xf] %v1254
        %v1257 = vunpack.c.l.b16 %v679
        %v1258 = vunpack.c.h.b16 %v679
        %v1259 = vpack.c.b16 %v1257, %v1257
        %v1260 = vpack.c.b16 %v1258, %v1258
        %v1262 = vshrl.u32 %v1259, 16
        %v1264 = vrot.slane %v1262, 7
        %v1265 = vshll.u32 %v1259, 16
        %v1267 = vor.u32 %v1264, %v1265
        %v1268 = vrot.slane %v1264, 4
        %v1270 = vshrl.u32 %v1260, 16
        %v1272 = vrot.slane %v1270, 7
        %v1273 = vshll.u32 %v1260, 16
        %v1275 = vor.u32 %v1272, %v1273
        %v1276 = vsel %vm854, %v1268, %v1275
        %v1277 = vrot.slane %v1272, 4
        %v1281 = vld [vmem:[#allocation2 + $0x90] sm:$0xf]
        %v1282 = vsel %vm876, %v1267, %v1281
        %1283 = vst [vmem:[#allocation2 + $0x90] sm:$0xf] %v1282
        %1284 = vst [vmem:[#allocation2 + $0x94] sm:$0xf] %v1276
        %v1285 = vld [vmem:[#allocation2 + $0x98] sm:$0x1]
        %v1286 = vsel %vm882, %v1277, %v1285
        %1287 = vst [vmem:[#allocation2 + $0x98] sm:$0x1] %v1286
        %v1288 = vld [vmem:[#allocation2] sm:$0xf]
        %v1289 = vld [vmem:[#allocation2 + $0x4] sm:$0xf]
        %v1290 = vld [vmem:[#allocation2 + $0x8] sm:$0xf]
        %v1291 = vld [vmem:[#allocation2 + $0xc] sm:$0xf]
        %v1292 = vld [vmem:[#allocation2 + $0x10] sm:$0xf]
        %v1293 = vld [vmem:[#allocation2 + $0x14] sm:$0xf]
        %v1294 = vld [vmem:[#allocation2 + $0x18] sm:$0xf]
        %v1295 = vld [vmem:[#allocation2 + $0x1c] sm:$0xf]
        %v1296 = vld [vmem:[#allocation2 + $0x20] sm:$0xf]
        %v1297 = vld [vmem:[#allocation2 + $0x24] sm:$0xf]
        %v1298 = vld [vmem:[#allocation2 + $0x28] sm:$0xf]
        %v1299 = vld [vmem:[#allocation2 + $0x2c] sm:$0xf]
        %v1300 = vld [vmem:[#allocation2 + $0x30] sm:$0xf]
        %v1301 = vld [vmem:[#allocation2 + $0x34] sm:$0xf]
        %v1302 = vld [vmem:[#allocation2 + $0x38] sm:$0xf]
        %v1303 = vld [vmem:[#allocation2 + $0x3c] sm:$0xf]
        %v1304 = vld [vmem:[#allocation2 + $0x40] sm:$0xf]
        %v1305 = vld [vmem:[#allocation2 + $0x44] sm:$0xf]
        %v1306 = vld [vmem:[#allocation2 + $0x48] sm:$0xf]
        %v1307 = vld [vmem:[#allocation2 + $0x4c] sm:$0xf]
        %v1308 = vld [vmem:[#allocation2 + $0x50] sm:$0xf]
        %v1309 = vld [vmem:[#allocation2 + $0x54] sm:$0xf]
        %v1310 = vld [vmem:[#allocation2 + $0x58] sm:$0xf]
        %v1311 = vld [vmem:[#allocation2 + $0x5c] sm:$0xf]
        %v1312 = vld [vmem:[#allocation2 + $0x60] sm:$0xf]
        %v1313 = vld [vmem:[#allocation2 + $0x64] sm:$0xf]
        %v1314 = vld [vmem:[#allocation2 + $0x68] sm:$0xf]
        %v1315 = vld [vmem:[#allocation2 + $0x6c] sm:$0xf]
        %v1316 = vld [vmem:[#allocation2 + $0x70] sm:$0xf]
        %v1317 = vld [vmem:[#allocation2 + $0x74] sm:$0xf]
        %v1318 = vld [vmem:[#allocation2 + $0x78] sm:$0xf]
        %v1319 = vld [vmem:[#allocation2 + $0x7c] sm:$0xf]
        %v1320 = vld [vmem:[#allocation2 + $0x80] sm:$0xf]
        %v1321 = vld [vmem:[#allocation2 + $0x84] sm:$0xf]
        %v1322 = vld [vmem:[#allocation2 + $0x88] sm:$0xf]
        %v1323 = vld [vmem:[#allocation2 + $0x8c] sm:$0xf]
        %v1324 = vld [vmem:[#allocation3] sm:$0xf]
        %v1325 = vld [vmem:[#allocation3 + $0x4] sm:$0xf]
        %v1326 = vld [vmem:[#allocation3 + $0x8] sm:$0xf]
        %v1327 = vld [vmem:[#allocation3 + $0xc] sm:$0xf]
        %v1328 = vld [vmem:[#allocation3 + $0x10] sm:$0xf]
        %v1329 = vld [vmem:[#allocation3 + $0x14] sm:$0xf]
        %v1330 = vld [vmem:[#allocation3 + $0x18] sm:$0xf]
        %v1331 = vld [vmem:[#allocation3 + $0x1c] sm:$0xf]
        %v1332 = vld [vmem:[#allocation3 + $0x20] sm:$0xf]
        %v1333 = vld [vmem:[#allocation3 + $0x24] sm:$0xf]
        %v1334 = vld [vmem:[#allocation3 + $0x28] sm:$0xf]
        %v1335 = vld [vmem:[#allocation3 + $0x2c] sm:$0xf]
        %v1336 = vld [vmem:[#allocation3 + $0x30] sm:$0xf]
        %v1337 = vld [vmem:[#allocation3 + $0x34] sm:$0xf]
        %v1338 = vld [vmem:[#allocation3 + $0x38] sm:$0xf]
        %v1339 = vld [vmem:[#allocation3 + $0x3c] sm:$0xf]
        %v1340 = vld [vmem:[#allocation2 + $0x90] sm:$0x1]
        %s1341 = scalar_lea.vmem [#allocation3], 64
        %v1342 = vld [vmem:[%s1341] sm:$0xf]
        %v1343 = vld [vmem:[%s1341 + $0x4] sm:$0xf]
        %v1344 = vld [vmem:[%s1341 + $0x8] sm:$0xf]
        %v1345 = vld [vmem:[%s1341 + $0xc] sm:$0xf]
        %v1346 = vld [vmem:[%s1341 + $0x10] sm:$0xf]
        %v1347 = vld [vmem:[%s1341 + $0x14] sm:$0xf]
        %v1348 = vld [vmem:[%s1341 + $0x18] sm:$0xf]
        %v1349 = vld [vmem:[%s1341 + $0x1c] sm:$0xf]
        %v1350 = vld [vmem:[%s1341 + $0x20] sm:$0xf]
        %v1351 = vld [vmem:[%s1341 + $0x24] sm:$0xf]
        %v1352 = vld [vmem:[%s1341 + $0x28] sm:$0xf]
        %v1353 = vld [vmem:[%s1341 + $0x2c] sm:$0xf]
        %v1354 = vld [vmem:[%s1341 + $0x30] sm:$0xf]
        %v1355 = vld [vmem:[%s1341 + $0x34] sm:$0xf]
        %v1356 = vld [vmem:[%s1341 + $0x38] sm:$0xf]
        %v1357 = vld [vmem:[%s1341 + $0x3c] sm:$0xf]
        %v1395 = vunpack.c.l.b16 %v1288
        %v1396 = vunpack.c.l.b16 %v1289
        %v1397 = vunpack.c.l.b16 %v1290
        %v1398 = vunpack.c.l.b16 %v1291
        %v1399 = vunpack.c.l.b16 %v1292
        %v1400 = vunpack.c.l.b16 %v1293
        %v1401 = vunpack.c.l.b16 %v1294
        %v1402 = vunpack.c.l.b16 %v1295
        %v1403 = vunpack.c.l.b16 %v1296
        %v1404 = vunpack.c.l.b16 %v1297
        %v1405 = vunpack.c.l.b16 %v1298
        %v1406 = vunpack.c.l.b16 %v1299
        %v1407 = vunpack.c.l.b16 %v1300
        %v1408 = vunpack.c.l.b16 %v1301
        %v1409 = vunpack.c.l.b16 %v1302
        %v1410 = vunpack.c.l.b16 %v1303
        %v1411 = vunpack.c.l.b16 %v1304
        %v1412 = vunpack.c.l.b16 %v1305
        %v1413 = vunpack.c.l.b16 %v1306
        %v1414 = vunpack.c.l.b16 %v1307
        %v1415 = vunpack.c.l.b16 %v1308
        %v1416 = vunpack.c.l.b16 %v1309
        %v1417 = vunpack.c.l.b16 %v1310
        %v1418 = vunpack.c.l.b16 %v1311
        %v1419 = vunpack.c.l.b16 %v1312
        %v1420 = vunpack.c.l.b16 %v1313
        %v1421 = vunpack.c.l.b16 %v1314
        %v1422 = vunpack.c.l.b16 %v1315
        %v1423 = vunpack.c.l.b16 %v1316
        %v1424 = vunpack.c.l.b16 %v1317
        %v1425 = vunpack.c.l.b16 %v1318
        %v1426 = vunpack.c.l.b16 %v1319
        %v1427 = vunpack.c.l.b16 %v1320
        %v1428 = vunpack.c.l.b16 %v1321
        %v1429 = vunpack.c.l.b16 %v1322
        %v1430 = vunpack.c.l.b16 %v1323
        %v1431 = vunpack.c.l.b16 %v1340
        %v1432 = vpack.c.b16 %v1396, %v1395
        %v1433 = vpack.c.b16 %v1398, %v1397
        %v1434 = vpack.c.b16 %v1400, %v1399
        %v1435 = vpack.c.b16 %v1402, %v1401
        %v1436 = vpack.c.b16 %v1404, %v1403
        %v1437 = vpack.c.b16 %v1406, %v1405
        %v1438 = vpack.c.b16 %v1408, %v1407
        %v1439 = vpack.c.b16 %v1410, %v1409
        %v1440 = vpack.c.b16 %v1412, %v1411
        %v1441 = vpack.c.b16 %v1414, %v1413
        %v1442 = vpack.c.b16 %v1416, %v1415
        %v1443 = vpack.c.b16 %v1418, %v1417
        %v1444 = vpack.c.b16 %v1420, %v1419
        %v1445 = vpack.c.b16 %v1422, %v1421
        %v1446 = vpack.c.b16 %v1424, %v1423
        %v1447 = vpack.c.b16 %v1426, %v1425
        %v1448 = vpack.c.b16 %v1428, %v1427
        %v1449 = vpack.c.b16 %v1430, %v1429
        %v1450 = vpack.c.b16 %v1431, %v1431
        %vm1451 = vsmask.f32 7424
        %v1453 = vshrl.u32 %v1432, 16
        %v1455 = vshll.u32 %v1432, 16
        %v1457 = vrot.slane %v1455, 1
        %v1458 = vor.u32 %v1453, %v1457
        %v1460 = vshll.u32 %v1433, 16
        %v1462 = vrot.slane %v1460, 1
        %v1463 = vsel %vm1451, %v1458, %v1462
        %v1464 = vshrl.u32 %v1433, 16
        %v1466 = vor.u32 %v1464, %v1462
        %v1468 = vshll.u32 %v1434, 16
        %v1470 = vrot.slane %v1468, 1
        %v1471 = vsel %vm1451, %v1466, %v1470
        %v1472 = vshrl.u32 %v1434, 16
        %v1474 = vor.u32 %v1472, %v1470
        %v1476 = vshll.u32 %v1435, 16
        %v1478 = vrot.slane %v1476, 1
        %v1479 = vsel %vm1451, %v1474, %v1478
        %v1480 = vshrl.u32 %v1435, 16
        %v1482 = vor.u32 %v1480, %v1478
        %v1484 = vshll.u32 %v1436, 16
        %v1486 = vrot.slane %v1484, 1
        %v1487 = vsel %vm1451, %v1482, %v1486
        %v1488 = vshrl.u32 %v1436, 16
        %v1490 = vor.u32 %v1488, %v1486
        %v1492 = vshll.u32 %v1437, 16
        %v1494 = vrot.slane %v1492, 1
        %v1495 = vsel %vm1451, %v1490, %v1494
        %v1496 = vshrl.u32 %v1437, 16
        %v1498 = vor.u32 %v1496, %v1494
        %v1500 = vshll.u32 %v1438, 16
        %v1502 = vrot.slane %v1500, 1
        %v1503 = vsel %vm1451, %v1498, %v1502
        %v1504 = vshrl.u32 %v1438, 16
        %v1506 = vor.u32 %v1504, %v1502
        %v1508 = vshll.u32 %v1439, 16
        %v1510 = vrot.slane %v1508, 1
        %v1511 = vsel %vm1451, %v1506, %v1510
        %v1512 = vshrl.u32 %v1439, 16
        %v1514 = vor.u32 %v1512, %v1510
        %v1516 = vshll.u32 %v1440, 16
        %v1518 = vrot.slane %v1516, 1
        %v1519 = vsel %vm1451, %v1514, %v1518
        %v1520 = vshrl.u32 %v1440, 16
        %v1522 = vor.u32 %v1520, %v1518
        %v1524 = vshll.u32 %v1441, 16
        %v1526 = vrot.slane %v1524, 1
        %v1527 = vsel %vm1451, %v1522, %v1526
        %v1528 = vshrl.u32 %v1441, 16
        %v1530 = vor.u32 %v1528, %v1526
        %v1532 = vshll.u32 %v1442, 16
        %v1534 = vrot.slane %v1532, 1
        %v1535 = vsel %vm1451, %v1530, %v1534
        %v1536 = vshrl.u32 %v1442, 16
        %v1538 = vor.u32 %v1536, %v1534
        %v1540 = vshll.u32 %v1443, 16
        %v1542 = vrot.slane %v1540, 1
        %v1543 = vsel %vm1451, %v1538, %v1542
        %v1544 = vshrl.u32 %v1443, 16
        %v1546 = vor.u32 %v1544, %v1542
        %v1548 = vshll.u32 %v1444, 16
        %v1550 = vrot.slane %v1548, 1
        %v1551 = vsel %vm1451, %v1546, %v1550
        %v1552 = vshrl.u32 %v1444, 16
        %v1554 = vor.u32 %v1552, %v1550
        %v1556 = vshll.u32 %v1445, 16
        %v1558 = vrot.slane %v1556, 1
        %v1559 = vsel %vm1451, %v1554, %v1558
        %v1560 = vshrl.u32 %v1445, 16
        %v1562 = vor.u32 %v1560, %v1558
        %v1564 = vshll.u32 %v1446, 16
        %v1566 = vrot.slane %v1564, 1
        %v1567 = vsel %vm1451, %v1562, %v1566
        %v1568 = vshrl.u32 %v1446, 16
        %v1570 = vor.u32 %v1568, %v1566
        %v1572 = vshll.u32 %v1447, 16
        %v1574 = vrot.slane %v1572, 1
        %v1575 = vsel %vm1451, %v1570, %v1574
        %v1576 = vshrl.u32 %v1447, 16
        %v1578 = vor.u32 %v1576, %v1574
        %v1580 = vshll.u32 %v1448, 16
        %v1582 = vrot.slane %v1580, 1
        %v1583 = vsel %vm1451, %v1578, %v1582
        %v1584 = vshrl.u32 %v1448, 16
        %v1586 = vor.u32 %v1584, %v1582
        %v1588 = vshll.u32 %v1449, 16
        %v1590 = vrot.slane %v1588, 1
        %v1591 = vsel %vm1451, %v1586, %v1590
        %v1592 = vshrl.u32 %v1449, 16
        %v1594 = vor.u32 %v1592, %v1590
        %v1596 = vshll.u32 %v1450, 16
        %v1598 = vrot.slane %v1596, 1
        %v1599 = vsel %vm1451, %v1594, %v1598
        %v1634 = vunpack.c.l.b16 %v1342
        %v1635 = vunpack.c.l.b16 %v1343
        %v1636 = vunpack.c.l.b16 %v1344
        %v1637 = vunpack.c.l.b16 %v1345
        %v1638 = vunpack.c.l.b16 %v1346
        %v1639 = vunpack.c.l.b16 %v1347
        %v1640 = vunpack.c.l.b16 %v1348
        %v1641 = vunpack.c.l.b16 %v1349
        %v1642 = vunpack.c.l.b16 %v1350
        %v1643 = vunpack.c.l.b16 %v1351
        %v1644 = vunpack.c.l.b16 %v1352
        %v1645 = vunpack.c.l.b16 %v1353
        %v1646 = vunpack.c.l.b16 %v1354
        %v1647 = vunpack.c.l.b16 %v1355
        %v1648 = vunpack.c.l.b16 %v1356
        %v1649 = vunpack.c.l.b16 %v1357
        %v1650 = vpack.c.b16 %v1635, %v1634
        %v1651 = vpack.c.b16 %v1637, %v1636
        %v1652 = vpack.c.b16 %v1639, %v1638
        %v1653 = vpack.c.b16 %v1641, %v1640
        %v1654 = vpack.c.b16 %v1643, %v1642
        %v1655 = vpack.c.b16 %v1645, %v1644
        %v1656 = vpack.c.b16 %v1647, %v1646
        %v1657 = vpack.c.b16 %v1649, %v1648
        %1666 = vmatprep.subr.bf16.mxu0 0
        %1667 = vmatpush1.bf16.msra.mxu0 %v1650
        %1668 = vmatprep.subr.bf16.mxu0 0
        %1669 = vmatpush1.bf16.msra.mxu0 %v1651
        %1670 = vmatprep.subr.bf16.mxu0 0
        %1671 = vmatpush1.bf16.msra.mxu0 %v1652
        %1672 = vmatprep.subr.bf16.mxu0 0
        %1673 = vmatpush1.bf16.msra.mxu0 %v1653
        %1674 = vmatprep.subr.bf16.mxu0 0
        %1675 = vmatpush1.bf16.msra.mxu0 %v1654
        %1676 = vmatprep.subr.bf16.mxu0 0
        %1677 = vmatpush1.bf16.msra.mxu0 %v1655
        %1678 = vmatprep.subr.bf16.mxu0 0
        %1679 = vmatpush1.bf16.msra.mxu0 %v1656
        %1680 = vmatprep.subr.bf16.mxu0 0
        %1681 = vmatpush1.bf16.msra.mxu0 %v1657
        %1682 = vmatprep.subr.bf16.mxu0 0
        %1683 = vmatpush1.bf16.msra.mxu0 0
        %1684 = vmatprep.subr.bf16.mxu0 0
        %1685 = vmatpush1.bf16.msra.mxu0 0
        %1686 = vmatprep.subr.bf16.mxu0 0
        %1687 = vmatpush1.bf16.msra.mxu0 0
        %1688 = vmatprep.subr.bf16.mxu0 0
        %1689 = vmatpush1.bf16.msra.mxu0 0
        %1690 = vmatprep.subr.bf16.mxu0 0
        %1691 = vmatpush1.bf16.msra.mxu0 0
        %1692 = vmatprep.subr.bf16.mxu0 0
        %1693 = vmatpush1.bf16.msra.mxu0 0
        %1694 = vmatprep.subr.bf16.mxu0 0
        %1695 = vmatpush1.bf16.msra.mxu0 0
        %1696 = vmatprep.subr.bf16.mxu0 0
        %1697 = vmatpush1.bf16.msra.mxu0 0
        %1698 = vmatprep.mubr.bf16.mxu0 0
        %1699 = vmatmul.mubr.bf16.gmra.mrb[0].mxu0 %v1463
        %v1700 = vpop.f32.mrb[0].mxu0
        %v1701 = vadd.f32 0.0, %v1700
        %v1702 = vpop.f32.mrb[0].mxu0
        %v1703 = vpop.f32.mrb[0].mxu0
        %v1704 = vadd.f32 0.0, %v1703
        %v1705 = vpop.f32.mrb[0].mxu0
        %1706 = vmatprep.mubr.bf16.mxu0 0
        %1707 = vmatmul.mubr.bf16.gmra.mrb[0].mxu0 %v1471
        %v1708 = vpop.f32.mrb[0].mxu0
        %v1709 = vadd.f32 0.0, %v1708
        %v1710 = vpop.f32.mrb[0].mxu0
        %v1711 = vpop.f32.mrb[0].mxu0
        %v1712 = vadd.f32 0.0, %v1711
        %v1713 = vpop.f32.mrb[0].mxu0
        %1714 = vmatprep.mubr.bf16.mxu0 0
        %1715 = vmatmul.mubr.bf16.gmra.mrb[0].mxu0 %v1479
        %v1716 = vpop.f32.mrb[0].mxu0
        %v1717 = vadd.f32 0.0, %v1716
        %v1718 = vpop.f32.mrb[0].mxu0
        %v1719 = vpop.f32.mrb[0].mxu0
        %v1720 = vadd.f32 0.0, %v1719
        %v1721 = vpop.f32.mrb[0].mxu0
        %1722 = vmatprep.mubr.bf16.mxu0 0
        %1723 = vmatmul.mubr.bf16.gmra.mrb[0].mxu0 %v1487
        %v1724 = vpop.f32.mrb[0].mxu0
        %v1725 = vadd.f32 0.0, %v1724
        %v1726 = vpop.f32.mrb[0].mxu0
        %v1727 = vpop.f32.mrb[0].mxu0
        %v1728 = vadd.f32 0.0, %v1727
        %v1729 = vpop.f32.mrb[0].mxu0
        %1730 = vmatprep.mubr.bf16.mxu0 0
        %1731 = vmatmul.mubr.bf16.gmra.mrb[0].mxu0 %v1495
        %v1732 = vpop.f32.mrb[0].mxu0
        %v1733 = vadd.f32 0.0, %v1732
        %v1734 = vpop.f32.mrb[0].mxu0
        %v1735 = vpop.f32.mrb[0].mxu0
        %v1736 = vadd.f32 0.0, %v1735
        %v1737 = vpop.f32.mrb[0].mxu0
        %1738 = vmatprep.mubr.bf16.mxu0 0
        %1739 = vmatmul.mubr.bf16.gmra.mrb[0].mxu0 %v1503
        %v1740 = vpop.f32.mrb[0].mxu0
        %v1741 = vadd.f32 0.0, %v1740
        %v1742 = vpop.f32.mrb[0].mxu0
        %v1743 = vpop.f32.mrb[0].mxu0
        %v1744 = vadd.f32 0.0, %v1743
        %v1745 = vpop.f32.mrb[0].mxu0
        %1746 = vmatprep.mubr.bf16.mxu0 0
        %1747 = vmatmul.mubr.bf16.gmra.mrb[0].mxu0 %v1511
        %v1748 = vpop.f32.mrb[0].mxu0
        %v1749 = vadd.f32 0.0, %v1748
        %v1750 = vpop.f32.mrb[0].mxu0
        %v1751 = vpop.f32.mrb[0].mxu0
        %v1752 = vadd.f32 0.0, %v1751
        %v1753 = vpop.f32.mrb[0].mxu0
        %1754 = vmatprep.mubr.bf16.mxu0 0
        %1755 = vmatmul.mubr.bf16.gmra.mrb[0].mxu0 %v1519
        %v1756 = vpop.f32.mrb[0].mxu0
        %v1757 = vadd.f32 0.0, %v1756
        %v1758 = vpop.f32.mrb[0].mxu0
        %v1759 = vpop.f32.mrb[0].mxu0
        %v1760 = vadd.f32 0.0, %v1759
        %v1761 = vpop.f32.mrb[0].mxu0
        %1762 = vmatprep.mubr.bf16.mxu0 0
        %1763 = vmatmul.mubr.bf16.gmra.mrb[0].mxu0 %v1527
        %v1764 = vpop.f32.mrb[0].mxu0
        %v1765 = vadd.f32 0.0, %v1764
        %v1766 = vpop.f32.mrb[0].mxu0
        %v1767 = vpop.f32.mrb[0].mxu0
        %v1768 = vadd.f32 0.0, %v1767
        %v1769 = vpop.f32.mrb[0].mxu0
        %1770 = vmatprep.mubr.bf16.mxu0 0
        %1771 = vmatmul.mubr.bf16.gmra.mrb[0].mxu0 %v1535
        %v1772 = vpop.f32.mrb[0].mxu0
        %v1773 = vadd.f32 0.0, %v1772
        %v1774 = vpop.f32.mrb[0].mxu0
        %v1775 = vpop.f32.mrb[0].mxu0
        %v1776 = vadd.f32 0.0, %v1775
        %v1777 = vpop.f32.mrb[0].mxu0
        %1778 = vmatprep.mubr.bf16.mxu0 0
        %1779 = vmatmul.mubr.bf16.gmra.mrb[0].mxu0 %v1543
        %v1780 = vpop.f32.mrb[0].mxu0
        %v1781 = vadd.f32 0.0, %v1780
        %v1782 = vpop.f32.mrb[0].mxu0
        %v1783 = vpop.f32.mrb[0].mxu0
        %v1784 = vadd.f32 0.0, %v1783
        %v1785 = vpop.f32.mrb[0].mxu0
        %1786 = vmatprep.mubr.bf16.mxu0 0
        %1787 = vmatmul.mubr.bf16.gmra.mrb[0].mxu0 %v1551
        %v1788 = vpop.f32.mrb[0].mxu0
        %v1789 = vadd.f32 0.0, %v1788
        %v1790 = vpop.f32.mrb[0].mxu0
        %v1791 = vpop.f32.mrb[0].mxu0
        %v1792 = vadd.f32 0.0, %v1791
        %v1793 = vpop.f32.mrb[0].mxu0
        %1794 = vmatprep.mubr.bf16.mxu0 0
        %1795 = vmatmul.mubr.bf16.gmra.mrb[0].mxu0 %v1559
        %v1796 = vpop.f32.mrb[0].mxu0
        %v1797 = vadd.f32 0.0, %v1796
        %v1798 = vpop.f32.mrb[0].mxu0
        %v1799 = vpop.f32.mrb[0].mxu0
        %v1800 = vadd.f32 0.0, %v1799
        %v1801 = vpop.f32.mrb[0].mxu0
        %1802 = vmatprep.mubr.bf16.mxu0 0
        %1803 = vmatmul.mubr.bf16.gmra.mrb[0].mxu0 %v1567
        %v1804 = vpop.f32.mrb[0].mxu0
        %v1805 = vadd.f32 0.0, %v1804
        %v1806 = vpop.f32.mrb[0].mxu0
        %v1807 = vpop.f32.mrb[0].mxu0
        %v1808 = vadd.f32 0.0, %v1807
        %v1809 = vpop.f32.mrb[0].mxu0
        %1810 = vmatprep.mubr.bf16.mxu0 0
        %1811 = vmatmul.mubr.bf16.gmra.mrb[0].mxu0 %v1575
        %v1812 = vpop.f32.mrb[0].mxu0
        %v1813 = vadd.f32 0.0, %v1812
        %v1814 = vpop.f32.mrb[0].mxu0
        %v1815 = vpop.f32.mrb[0].mxu0
        %v1816 = vadd.f32 0.0, %v1815
        %v1817 = vpop.f32.mrb[0].mxu0
        %1818 = vmatprep.mubr.bf16.mxu0 0
        %1819 = vmatmul.mubr.bf16.gmra.mrb[0].mxu0 %v1583
        %v1820 = vpop.f32.mrb[0].mxu0
        %v1821 = vadd.f32 0.0, %v1820
        %v1822 = vpop.f32.mrb[0].mxu0
        %v1823 = vpop.f32.mrb[0].mxu0
        %v1824 = vadd.f32 0.0, %v1823
        %v1825 = vpop.f32.mrb[0].mxu0
        %1826 = vmatprep.mubr.bf16.mxu0 0
        %1827 = vmatmul.mubr.bf16.gmra.mrb[0].mxu0 %v1591
        %v1828 = vpop.f32.mrb[0].mxu0
        %v1829 = vadd.f32 0.0, %v1828
        %v1830 = vpop.f32.mrb[0].mxu0
        %v1831 = vpop.f32.mrb[0].mxu0
        %v1832 = vadd.f32 0.0, %v1831
        %v1833 = vpop.f32.mrb[0].mxu0
        %1834 = vmatprep.mubr.bf16.mxu0 0
        %1835 = vmatmul.mubr.bf16.gmra.mrb[0].mxu0 %v1599
        %v1836 = vpop.f32.mrb[0].mxu0
        %v1837 = vadd.f32 0.0, %v1836
        %v1838 = vpop.f32.mrb[0].mxu0
        %v1839 = vpop.f32.mrb[0].mxu0
        %v1840 = vadd.f32 0.0, %v1839
        %v1841 = vpop.f32.mrb[0].mxu0
        %1842 = vdwg.mxu0
        %v1877 = vunpack.c.l.b16 %v1324
        %v1878 = vunpack.c.l.b16 %v1325
        %v1879 = vunpack.c.l.b16 %v1326
        %v1880 = vunpack.c.l.b16 %v1327
        %v1881 = vunpack.c.l.b16 %v1328
        %v1882 = vunpack.c.l.b16 %v1329
        %v1883 = vunpack.c.l.b16 %v1330
        %v1884 = vunpack.c.l.b16 %v1331
        %v1885 = vunpack.c.l.b16 %v1332
        %v1886 = vunpack.c.l.b16 %v1333
        %v1887 = vunpack.c.l.b16 %v1334
        %v1888 = vunpack.c.l.b16 %v1335
        %v1889 = vunpack.c.l.b16 %v1336
        %v1890 = vunpack.c.l.b16 %v1337
        %v1891 = vunpack.c.l.b16 %v1338
        %v1892 = vunpack.c.l.b16 %v1339
        %v1893 = vpack.c.b16 %v1878, %v1877
        %v1894 = vpack.c.b16 %v1880, %v1879
        %v1895 = vpack.c.b16 %v1882, %v1881
        %v1896 = vpack.c.b16 %v1884, %v1883
        %v1897 = vpack.c.b16 %v1886, %v1885
        %v1898 = vpack.c.b16 %v1888, %v1887
        %v1899 = vpack.c.b16 %v1890, %v1889
        %v1900 = vpack.c.b16 %v1892, %v1891
        %1909 = vmatprep.subr.bf16.mxu0 0
        %1910 = vmatpush1.bf16.msra.mxu0 %v1893
        %1911 = vmatprep.subr.bf16.mxu0 0
        %1912 = vmatpush1.bf16.msra.mxu0 %v1894
        %1913 = vmatprep.subr.bf16.mxu0 0
        %1914 = vmatpush1.bf16.msra.mxu0 %v1895
        %1915 = vmatprep.subr.bf16.mxu0 0
        %1916 = vmatpush1.bf16.msra.mxu0 %v1896
        %1917 = vmatprep.subr.bf16.mxu0 0
        %1918 = vmatpush1.bf16.msra.mxu0 %v1897
        %1919 = vmatprep.subr.bf16.mxu0 0
        %1920 = vmatpush1.bf16.msra.mxu0 %v1898
        %1921 = vmatprep.subr.bf16.mxu0 0
        %1922 = vmatpush1.bf16.msra.mxu0 %v1899
        %1923 = vmatprep.subr.bf16.mxu0 0
        %1924 = vmatpush1.bf16.msra.mxu0 %v1900
        %1925 = vmatprep.subr.bf16.mxu0 0
        %1926 = vmatpush1.bf16.msra.mxu0 0
        %1927 = vmatprep.subr.bf16.mxu0 0
        %1928 = vmatpush1.bf16.msra.mxu0 0
        %1929 = vmatprep.subr.bf16.mxu0 0
        %1930 = vmatpush1.bf16.msra.mxu0 0
        %1931 = vmatprep.subr.bf16.mxu0 0
        %1932 = vmatpush1.bf16.msra.mxu0 0
        %1933 = vmatprep.subr.bf16.mxu0 0
        %1934 = vmatpush1.bf16.msra.mxu0 0
        %1935 = vmatprep.subr.bf16.mxu0 0
        %1936 = vmatpush1.bf16.msra.mxu0 0
        %1937 = vmatprep.subr.bf16.mxu0 0
        %1938 = vmatpush1.bf16.msra.mxu0 0
        %1939 = vmatprep.subr.bf16.mxu0 0
        %1940 = vmatpush1.bf16.msra.mxu0 0
        %1941 = vmatprep.mubr.bf16.mxu0 0
        %1942 = vmatmul.mubr.bf16.gmra.mrb[0].mxu0 %v1432
        %v1943 = vpop.f32.mrb[0].mxu0
        %v1944 = vadd.f32 %v1701, %v1943
        %v1945 = vpop.f32.mrb[0].mxu0
        %v1946 = vpop.f32.mrb[0].mxu0
        %v1947 = vadd.f32 %v1704, %v1946
        %v1948 = vpop.f32.mrb[0].mxu0
        %1949 = vmatprep.mubr.bf16.mxu0 0
        %1950 = vmatmul.mubr.bf16.gmra.mrb[0].mxu0 %v1433
        %v1951 = vpop.f32.mrb[0].mxu0
        %v1952 = vadd.f32 %v1709, %v1951
        %v1953 = vpop.f32.mrb[0].mxu0
        %v1954 = vpop.f32.mrb[0].mxu0
        %v1955 = vadd.f32 %v1712, %v1954
        %v1956 = vpop.f32.mrb[0].mxu0
        %1957 = vmatprep.mubr.bf16.mxu0 0
        %1958 = vmatmul.mubr.bf16.gmra.mrb[0].mxu0 %v1434
        %v1959 = vpop.f32.mrb[0].mxu0
        %v1960 = vadd.f32 %v1717, %v1959
        %v1961 = vpop.f32.mrb[0].mxu0
        %v1962 = vpop.f32.mrb[0].mxu0
        %v1963 = vadd.f32 %v1720, %v1962
        %v1964 = vpop.f32.mrb[0].mxu0
        %1965 = vmatprep.mubr.bf16.mxu0 0
        %1966 = vmatmul.mubr.bf16.gmra.mrb[0].mxu0 %v1435
        %v1967 = vpop.f32.mrb[0].mxu0
        %v1968 = vadd.f32 %v1725, %v1967
        %v1969 = vpop.f32.mrb[0].mxu0
        %v1970 = vpop.f32.mrb[0].mxu0
        %v1971 = vadd.f32 %v1728, %v1970
        %v1972 = vpop.f32.mrb[0].mxu0
        %1973 = vmatprep.mubr.bf16.mxu0 0
        %1974 = vmatmul.mubr.bf16.gmra.mrb[0].mxu0 %v1436
        %v1975 = vpop.f32.mrb[0].mxu0
        %v1976 = vadd.f32 %v1733, %v1975
        %v1977 = vpop.f32.mrb[0].mxu0
        %v1978 = vpop.f32.mrb[0].mxu0
        %v1979 = vadd.f32 %v1736, %v1978
        %v1980 = vpop.f32.mrb[0].mxu0
        %1981 = vmatprep.mubr.bf16.mxu0 0
        %1982 = vmatmul.mubr.bf16.gmra.mrb[0].mxu0 %v1437
        %v1983 = vpop.f32.mrb[0].mxu0
        %v1984 = vadd.f32 %v1741, %v1983
        %v1985 = vpop.f32.mrb[0].mxu0
        %v1986 = vpop.f32.mrb[0].mxu0
        %v1987 = vadd.f32 %v1744, %v1986
        %v1988 = vpop.f32.mrb[0].mxu0
        %1989 = vmatprep.mubr.bf16.mxu0 0
        %1990 = vmatmul.mubr.bf16.gmra.mrb[0].mxu0 %v1438
        %v1991 = vpop.f32.mrb[0].mxu0
        %v1992 = vadd.f32 %v1749, %v1991
        %v1993 = vpop.f32.mrb[0].mxu0
        %v1994 = vpop.f32.mrb[0].mxu0
        %v1995 = vadd.f32 %v1752, %v1994
        %v1996 = vpop.f32.mrb[0].mxu0
        %1997 = vmatprep.mubr.bf16.mxu0 0
        %1998 = vmatmul.mubr.bf16.gmra.mrb[0].mxu0 %v1439
        %v1999 = vpop.f32.mrb[0].mxu0
        %v2000 = vadd.f32 %v1757, %v1999
        %v2001 = vpop.f32.mrb[0].mxu0
        %v2002 = vpop.f32.mrb[0].mxu0
        %v2003 = vadd.f32 %v1760, %v2002
        %v2004 = vpop.f32.mrb[0].mxu0
        %2005 = vmatprep.mubr.bf16.mxu0 0
        %2006 = vmatmul.mubr.bf16.gmra.mrb[0].mxu0 %v1440
        %v2007 = vpop.f32.mrb[0].mxu0
        %v2008 = vadd.f32 %v1765, %v2007
        %v2009 = vpop.f32.mrb[0].mxu0
        %v2010 = vpop.f32.mrb[0].mxu0
        %v2011 = vadd.f32 %v1768, %v2010
        %v2012 = vpop.f32.mrb[0].mxu0
        %2013 = vmatprep.mubr.bf16.mxu0 0
        %2014 = vmatmul.mubr.bf16.gmra.mrb[0].mxu0 %v1441
        %v2015 = vpop.f32.mrb[0].mxu0
        %v2016 = vadd.f32 %v1773, %v2015
        %v2017 = vpop.f32.mrb[0].mxu0
        %v2018 = vpop.f32.mrb[0].mxu0
        %v2019 = vadd.f32 %v1776, %v2018
        %v2020 = vpop.f32.mrb[0].mxu0
        %2021 = vmatprep.mubr.bf16.mxu0 0
        %2022 = vmatmul.mubr.bf16.gmra.mrb[0].mxu0 %v1442
        %v2023 = vpop.f32.mrb[0].mxu0
        %v2024 = vadd.f32 %v1781, %v2023
        %v2025 = vpop.f32.mrb[0].mxu0
        %v2026 = vpop.f32.mrb[0].mxu0
        %v2027 = vadd.f32 %v1784, %v2026
        %v2028 = vpop.f32.mrb[0].mxu0
        %2029 = vmatprep.mubr.bf16.mxu0 0
        %2030 = vmatmul.mubr.bf16.gmra.mrb[0].mxu0 %v1443
        %v2031 = vpop.f32.mrb[0].mxu0
        %v2032 = vadd.f32 %v1789, %v2031
        %v2033 = vpop.f32.mrb[0].mxu0
        %v2034 = vpop.f32.mrb[0].mxu0
        %v2035 = vadd.f32 %v1792, %v2034
        %v2036 = vpop.f32.mrb[0].mxu0
        %2037 = vmatprep.mubr.bf16.mxu0 0
        %2038 = vmatmul.mubr.bf16.gmra.mrb[0].mxu0 %v1444
        %v2039 = vpop.f32.mrb[0].mxu0
        %v2040 = vadd.f32 %v1797, %v2039
        %v2041 = vpop.f32.mrb[0].mxu0
        %v2042 = vpop.f32.mrb[0].mxu0
        %v2043 = vadd.f32 %v1800, %v2042
        %v2044 = vpop.f32.mrb[0].mxu0
        %2045 = vmatprep.mubr.bf16.mxu0 0
        %2046 = vmatmul.mubr.bf16.gmra.mrb[0].mxu0 %v1445
        %v2047 = vpop.f32.mrb[0].mxu0
        %v2048 = vadd.f32 %v1805, %v2047
        %v2049 = vpop.f32.mrb[0].mxu0
        %v2050 = vpop.f32.mrb[0].mxu0
        %v2051 = vadd.f32 %v1808, %v2050
        %v2052 = vpop.f32.mrb[0].mxu0
        %2053 = vmatprep.mubr.bf16.mxu0 0
        %2054 = vmatmul.mubr.bf16.gmra.mrb[0].mxu0 %v1446
        %v2055 = vpop.f32.mrb[0].mxu0
        %v2056 = vadd.f32 %v1813, %v2055
        %v2057 = vpop.f32.mrb[0].mxu0
        %v2058 = vpop.f32.mrb[0].mxu0
        %v2059 = vadd.f32 %v1816, %v2058
        %v2060 = vpop.f32.mrb[0].mxu0
        %2061 = vmatprep.mubr.bf16.mxu0 0
        %2062 = vmatmul.mubr.bf16.gmra.mrb[0].mxu0 %v1447
        %v2063 = vpop.f32.mrb[0].mxu0
        %v2064 = vadd.f32 %v1821, %v2063
        %v2065 = vpop.f32.mrb[0].mxu0
        %v2066 = vpop.f32.mrb[0].mxu0
        %v2067 = vadd.f32 %v1824, %v2066
        %v2068 = vpop.f32.mrb[0].mxu0
        %2069 = vmatprep.mubr.bf16.mxu0 0
        %2070 = vmatmul.mubr.bf16.gmra.mrb[0].mxu0 %v1448
        %v2071 = vpop.f32.mrb[0].mxu0
        %v2072 = vadd.f32 %v1829, %v2071
        %v2073 = vpop.f32.mrb[0].mxu0
        %v2074 = vpop.f32.mrb[0].mxu0
        %v2075 = vadd.f32 %v1832, %v2074
        %v2076 = vpop.f32.mrb[0].mxu0
        %2077 = vmatprep.mubr.bf16.mxu0 0
        %2078 = vmatmul.mubr.bf16.gmra.mrb[0].mxu0 %v1449
        %v2079 = vpop.f32.mrb[0].mxu0
        %v2080 = vadd.f32 %v1837, %v2079
        %v2081 = vpop.f32.mrb[0].mxu0
        %v2082 = vpop.f32.mrb[0].mxu0
        %v2083 = vadd.f32 %v1840, %v2082
        %v2084 = vpop.f32.mrb[0].mxu0
        %2085 = vdwg.mxu0
        %v2086 = vld [vmem:[#allocation2] sm:$0xe]
        %s2087 = scalar_lea.vmem [#allocation3], 128
        %v2088 = vld [vmem:[%s2087] sm:$0xf]
        %v2089 = vld [vmem:[%s2087 + $0x4] sm:$0xf]
        %v2090 = vld [vmem:[%s2087 + $0x8] sm:$0xf]
        %v2091 = vld [vmem:[%s2087 + $0xc] sm:$0xf]
        %v2092 = vld [vmem:[%s2087 + $0x10] sm:$0xf]
        %v2093 = vld [vmem:[%s2087 + $0x14] sm:$0xf]
        %v2094 = vld [vmem:[%s2087 + $0x18] sm:$0xf]
        %v2095 = vld [vmem:[%s2087 + $0x1c] sm:$0xf]
        %v2096 = vld [vmem:[%s2087 + $0x20] sm:$0xf]
        %v2097 = vld [vmem:[%s2087 + $0x24] sm:$0xf]
        %v2098 = vld [vmem:[%s2087 + $0x28] sm:$0xf]
        %v2099 = vld [vmem:[%s2087 + $0x2c] sm:$0xf]
        %v2100 = vld [vmem:[%s2087 + $0x30] sm:$0xf]
        %v2101 = vld [vmem:[%s2087 + $0x34] sm:$0xf]
        %v2102 = vld [vmem:[%s2087 + $0x38] sm:$0xf]
        %v2103 = vld [vmem:[%s2087 + $0x3c] sm:$0xf]
        %v2105 = vunpack.c.l.b16 %v2086
        %v2106 = vpack.c.b16 %v1396, %v2105
        %vm2107 = vcmask 1046528
        %v2108 = vrot.slane %v2106, 1
        %v2109 = vrot.slane %v1433, 1
        %v2110 = vsel %vm2107, %v2108, %v2109
        %v2111 = vrot.slane %v1434, 1
        %v2112 = vsel %vm2107, %v2109, %v2111
        %v2113 = vrot.slane %v1435, 1
        %v2114 = vsel %vm2107, %v2111, %v2113
        %v2115 = vrot.slane %v1436, 1
        %v2116 = vsel %vm2107, %v2113, %v2115
        %v2117 = vrot.slane %v1437, 1
        %v2118 = vsel %vm2107, %v2115, %v2117
        %v2119 = vrot.slane %v1438, 1
        %v2120 = vsel %vm2107, %v2117, %v2119
        %v2121 = vrot.slane %v1439, 1
        %v2122 = vsel %vm2107, %v2119, %v2121
        %v2123 = vrot.slane %v1440, 1
        %v2124 = vsel %vm2107, %v2121, %v2123
        %v2125 = vrot.slane %v1441, 1
        %v2126 = vsel %vm2107, %v2123, %v2125
        %v2127 = vrot.slane %v1442, 1
        %v2128 = vsel %vm2107, %v2125, %v2127
        %v2129 = vrot.slane %v1443, 1
        %v2130 = vsel %vm2107, %v2127, %v2129
        %v2131 = vrot.slane %v1444, 1
        %v2132 = vsel %vm2107, %v2129, %v2131
        %v2133 = vrot.slane %v1445, 1
        %v2134 = vsel %vm2107, %v2131, %v2133
        %v2135 = vrot.slane %v1446, 1
        %v2136 = vsel %vm2107, %v2133, %v2135
        %v2137 = vrot.slane %v1447, 1
        %v2138 = vsel %vm2107, %v2135, %v2137
        %v2139 = vrot.slane %v1448, 1
        %v2140 = vsel %vm2107, %v2137, %v2139
        %v2141 = vrot.slane %v1449, 1
        %v2142 = vsel %vm2107, %v2139, %v2141
        %v2143 = vrot.slane %v1450, 1
        %v2144 = vsel %vm2107, %v2141, %v2143
        %v2179 = vunpack.c.l.b16 %v2088
        %v2180 = vunpack.c.l.b16 %v2089
        %v2181 = vunpack.c.l.b16 %v2090
        %v2182 = vunpack.c.l.b16 %v2091
        %v2183 = vunpack.c.l.b16 %v2092
        %v2184 = vunpack.c.l.b16 %v2093
        %v2185 = vunpack.c.l.b16 %v2094
        %v2186 = vunpack.c.l.b16 %v2095
        %v2187 = vunpack.c.l.b16 %v2096
        %v2188 = vunpack.c.l.b16 %v2097
        %v2189 = vunpack.c.l.b16 %v2098
        %v2190 = vunpack.c.l.b16 %v2099
        %v2191 = vunpack.c.l.b16 %v2100
        %v2192 = vunpack.c.l.b16 %v2101
        %v2193 = vunpack.c.l.b16 %v2102
        %v2194 = vunpack.c.l.b16 %v2103
        %v2195 = vpack.c.b16 %v2180, %v2179
        %v2196 = vpack.c.b16 %v2182, %v2181
        %v2197 = vpack.c.b16 %v2184, %v2183
        %v2198 = vpack.c.b16 %v2186, %v2185
        %v2199 = vpack.c.b16 %v2188, %v2187
        %v2200 = vpack.c.b16 %v2190, %v2189
        %v2201 = vpack.c.b16 %v2192, %v2191
        %v2202 = vpack.c.b16 %v2194, %v2193
        %2211 = vmatprep.subr.bf16.mxu0 0
        %2212 = vmatpush1.bf16.msra.mxu0 %v2195
        %2213 = vmatprep.subr.bf16.mxu0 0
        %2214 = vmatpush1.bf16.msra.mxu0 %v2196
        %2215 = vmatprep.subr.bf16.mxu0 0
        %2216 = vmatpush1.bf16.msra.mxu0 %v2197
        %2217 = vmatprep.subr.bf16.mxu0 0
        %2218 = vmatpush1.bf16.msra.mxu0 %v2198
        %2219 = vmatprep.subr.bf16.mxu0 0
        %2220 = vmatpush1.bf16.msra.mxu0 %v2199
        %2221 = vmatprep.subr.bf16.mxu0 0
        %2222 = vmatpush1.bf16.msra.mxu0 %v2200
        %2223 = vmatprep.subr.bf16.mxu0 0
        %2224 = vmatpush1.bf16.msra.mxu0 %v2201
        %2225 = vmatprep.subr.bf16.mxu0 0
        %2226 = vmatpush1.bf16.msra.mxu0 %v2202
        %2227 = vmatprep.subr.bf16.mxu0 0
        %2228 = vmatpush1.bf16.msra.mxu0 0
        %2229 = vmatprep.subr.bf16.mxu0 0
        %2230 = vmatpush1.bf16.msra.mxu0 0
        %2231 = vmatprep.subr.bf16.mxu0 0
        %2232 = vmatpush1.bf16.msra.mxu0 0
        %2233 = vmatprep.subr.bf16.mxu0 0
        %2234 = vmatpush1.bf16.msra.mxu0 0
        %2235 = vmatprep.subr.bf16.mxu0 0
        %2236 = vmatpush1.bf16.msra.mxu0 0
        %2237 = vmatprep.subr.bf16.mxu0 0
        %2238 = vmatpush1.bf16.msra.mxu0 0
        %2239 = vmatprep.subr.bf16.mxu0 0
        %2240 = vmatpush1.bf16.msra.mxu0 0
        %2241 = vmatprep.subr.bf16.mxu0 0
        %2242 = vmatpush1.bf16.msra.mxu0 0
        %2243 = vmatprep.mubr.bf16.mxu0 0
        %2244 = vmatmul.mubr.bf16.gmra.mrb[0].mxu0 %v2110
        %v2245 = vpop.f32.mrb[0].mxu0
        %v2246 = vadd.f32 0.0, %v2245
        %v2247 = vpop.f32.mrb[0].mxu0
        %v2248 = vpop.f32.mrb[0].mxu0
        %v2249 = vadd.f32 0.0, %v2248
        %v2250 = vpop.f32.mrb[0].mxu0
        %2251 = vmatprep.mubr.bf16.mxu0 0
        %2252 = vmatmul.mubr.bf16.gmra.mrb[0].mxu0 %v2112
        %v2253 = vpop.f32.mrb[0].mxu0
        %v2254 = vadd.f32 0.0, %v2253
        %v2255 = vpop.f32.mrb[0].mxu0
        %v2256 = vpop.f32.mrb[0].mxu0
        %v2257 = vadd.f32 0.0, %v2256
        %v2258 = vpop.f32.mrb[0].mxu0
        %2259 = vmatprep.mubr.bf16.mxu0 0
        %2260 = vmatmul.mubr.bf16.gmra.mrb[0].mxu0 %v2114
        %v2261 = vpop.f32.mrb[0].mxu0
        %v2262 = vadd.f32 0.0, %v2261
        %v2263 = vpop.f32.mrb[0].mxu0
        %v2264 = vpop.f32.mrb[0].mxu0
        %v2265 = vadd.f32 0.0, %v2264
        %v2266 = vpop.f32.mrb[0].mxu0
        %2267 = vmatprep.mubr.bf16.mxu0 0
        %2268 = vmatmul.mubr.bf16.gmra.mrb[0].mxu0 %v2116
        %v2269 = vpop.f32.mrb[0].mxu0
        %v2270 = vadd.f32 0.0, %v2269
        %v2271 = vpop.f32.mrb[0].mxu0
        %v2272 = vpop.f32.mrb[0].mxu0
        %v2273 = vadd.f32 0.0, %v2272
        %v2274 = vpop.f32.mrb[0].mxu0
        %2275 = vmatprep.mubr.bf16.mxu0 0
        %2276 = vmatmul.mubr.bf16.gmra.mrb[0].mxu0 %v2118
        %v2277 = vpop.f32.mrb[0].mxu0
        %v2278 = vadd.f32 0.0, %v2277
        %v2279 = vpop.f32.mrb[0].mxu0
        %v2280 = vpop.f32.mrb[0].mxu0
        %v2281 = vadd.f32 0.0, %v2280
        %v2282 = vpop.f32.mrb[0].mxu0
        %2283 = vmatprep.mubr.bf16.mxu0 0
        %2284 = vmatmul.mubr.bf16.gmra.mrb[0].mxu0 %v2120
        %v2285 = vpop.f32.mrb[0].mxu0
        %v2286 = vadd.f32 0.0, %v2285
        %v2287 = vpop.f32.mrb[0].mxu0
        %v2288 = vpop.f32.mrb[0].mxu0
        %v2289 = vadd.f32 0.0, %v2288
        %v2290 = vpop.f32.mrb[0].mxu0
        %2291 = vmatprep.mubr.bf16.mxu0 0
        %2292 = vmatmul.mubr.bf16.gmra.mrb[0].mxu0 %v2122
        %v2293 = vpop.f32.mrb[0].mxu0
        %v2294 = vadd.f32 0.0, %v2293
        %v2295 = vpop.f32.mrb[0].mxu0
        %v2296 = vpop.f32.mrb[0].mxu0
        %v2297 = vadd.f32 0.0, %v2296
        %v2298 = vpop.f32.mrb[0].mxu0
        %2299 = vmatprep.mubr.bf16.mxu0 0
        %2300 = vmatmul.mubr.bf16.gmra.mrb[0].mxu0 %v2124
        %v2301 = vpop.f32.mrb[0].mxu0
        %v2302 = vadd.f32 0.0, %v2301
        %v2303 = vpop.f32.mrb[0].mxu0
        %v2304 = vpop.f32.mrb[0].mxu0
        %v2305 = vadd.f32 0.0, %v2304
        %v2306 = vpop.f32.mrb[0].mxu0
        %2307 = vmatprep.mubr.bf16.mxu0 0
        %2308 = vmatmul.mubr.bf16.gmra.mrb[0].mxu0 %v2126
        %v2309 = vpop.f32.mrb[0].mxu0
        %v2310 = vadd.f32 0.0, %v2309
        %v2311 = vpop.f32.mrb[0].mxu0
        %v2312 = vpop.f32.mrb[0].mxu0
        %v2313 = vadd.f32 0.0, %v2312
        %v2314 = vpop.f32.mrb[0].mxu0
        %2315 = vmatprep.mubr.bf16.mxu0 0
        %2316 = vmatmul.mubr.bf16.gmra.mrb[0].mxu0 %v2128
        %v2317 = vpop.f32.mrb[0].mxu0
        %v2318 = vadd.f32 0.0, %v2317
        %v2319 = vpop.f32.mrb[0].mxu0
        %v2320 = vpop.f32.mrb[0].mxu0
        %v2321 = vadd.f32 0.0, %v2320
        %v2322 = vpop.f32.mrb[0].mxu0
        %2323 = vmatprep.mubr.bf16.mxu0 0
        %2324 = vmatmul.mubr.bf16.gmra.mrb[0].mxu0 %v2130
        %v2325 = vpop.f32.mrb[0].mxu0
        %v2326 = vadd.f32 0.0, %v2325
        %v2327 = vpop.f32.mrb[0].mxu0
        %v2328 = vpop.f32.mrb[0].mxu0
        %v2329 = vadd.f32 0.0, %v2328
        %v2330 = vpop.f32.mrb[0].mxu0
        %2331 = vmatprep.mubr.bf16.mxu0 0
        %2332 = vmatmul.mubr.bf16.gmra.mrb[0].mxu0 %v2132
        %v2333 = vpop.f32.mrb[0].mxu0
        %v2334 = vadd.f32 0.0, %v2333
        %v2335 = vpop.f32.mrb[0].mxu0
        %v2336 = vpop.f32.mrb[0].mxu0
        %v2337 = vadd.f32 0.0, %v2336
        %v2338 = vpop.f32.mrb[0].mxu0
        %2339 = vmatprep.mubr.bf16.mxu0 0
        %2340 = vmatmul.mubr.bf16.gmra.mrb[0].mxu0 %v2134
        %v2341 = vpop.f32.mrb[0].mxu0
        %v2342 = vadd.f32 0.0, %v2341
        %v2343 = vpop.f32.mrb[0].mxu0
        %v2344 = vpop.f32.mrb[0].mxu0
        %v2345 = vadd.f32 0.0, %v2344
        %v2346 = vpop.f32.mrb[0].mxu0
        %2347 = vmatprep.mubr.bf16.mxu0 0
        %2348 = vmatmul.mubr.bf16.gmra.mrb[0].mxu0 %v2136
        %v2349 = vpop.f32.mrb[0].mxu0
        %v2350 = vadd.f32 0.0, %v2349
        %v2351 = vpop.f32.mrb[0].mxu0
        %v2352 = vpop.f32.mrb[0].mxu0
        %v2353 = vadd.f32 0.0, %v2352
        %v2354 = vpop.f32.mrb[0].mxu0
        %2355 = vmatprep.mubr.bf16.mxu0 0
        %2356 = vmatmul.mubr.bf16.gmra.mrb[0].mxu0 %v2138
        %v2357 = vpop.f32.mrb[0].mxu0
        %v2358 = vadd.f32 0.0, %v2357
        %v2359 = vpop.f32.mrb[0].mxu0
        %v2360 = vpop.f32.mrb[0].mxu0
        %v2361 = vadd.f32 0.0, %v2360
        %v2362 = vpop.f32.mrb[0].mxu0
        %2363 = vmatprep.mubr.bf16.mxu0 0
        %2364 = vmatmul.mubr.bf16.gmra.mrb[0].mxu0 %v2140
        %v2365 = vpop.f32.mrb[0].mxu0
        %v2366 = vadd.f32 0.0, %v2365
        %v2367 = vpop.f32.mrb[0].mxu0
        %v2368 = vpop.f32.mrb[0].mxu0
        %v2369 = vadd.f32 0.0, %v2368
        %v2370 = vpop.f32.mrb[0].mxu0
        %2371 = vmatprep.mubr.bf16.mxu0 0
        %2372 = vmatmul.mubr.bf16.gmra.mrb[0].mxu0 %v2142
        %v2373 = vpop.f32.mrb[0].mxu0
        %v2374 = vadd.f32 0.0, %v2373
        %v2375 = vpop.f32.mrb[0].mxu0
        %v2376 = vpop.f32.mrb[0].mxu0
        %v2377 = vadd.f32 0.0, %v2376
        %v2378 = vpop.f32.mrb[0].mxu0
        %2379 = vmatprep.mubr.bf16.mxu0 0
        %2380 = vmatmul.mubr.bf16.gmra.mrb[0].mxu0 %v2144
        %v2381 = vpop.f32.mrb[0].mxu0
        %v2382 = vadd.f32 0.0, %v2381
        %v2383 = vpop.f32.mrb[0].mxu0
        %v2384 = vpop.f32.mrb[0].mxu0
        %v2385 = vadd.f32 0.0, %v2384
        %v2386 = vpop.f32.mrb[0].mxu0
        %2387 = vdwg.mxu0
        %v2388 = vadd.f32 %v1944, %v2246
        %v2389 = vadd.f32 %v1947, %v2249
        %v2390 = vadd.f32 %v1952, %v2254
        %v2391 = vadd.f32 %v1955, %v2257
        %v2392 = vadd.f32 %v1960, %v2262
        %v2393 = vadd.f32 %v1963, %v2265
        %v2394 = vadd.f32 %v1968, %v2270
        %v2395 = vadd.f32 %v1971, %v2273
        %v2396 = vadd.f32 %v1976, %v2278
        %v2397 = vadd.f32 %v1979, %v2281
        %v2398 = vadd.f32 %v1984, %v2286
        %v2399 = vadd.f32 %v1987, %v2289
        %v2400 = vadd.f32 %v1992, %v2294
        %v2401 = vadd.f32 %v1995, %v2297
        %v2402 = vadd.f32 %v2000, %v2302
        %v2403 = vadd.f32 %v2003, %v2305
        %v2404 = vadd.f32 %v2008, %v2310
        %v2405 = vadd.f32 %v2011, %v2313
        %v2406 = vadd.f32 %v2016, %v2318
        %v2407 = vadd.f32 %v2019, %v2321
        %v2408 = vadd.f32 %v2024, %v2326
        %v2409 = vadd.f32 %v2027, %v2329
        %v2410 = vadd.f32 %v2032, %v2334
        %v2411 = vadd.f32 %v2035, %v2337
        %v2412 = vadd.f32 %v2040, %v2342
        %v2413 = vadd.f32 %v2043, %v2345
        %v2414 = vadd.f32 %v2048, %v2350
        %v2415 = vadd.f32 %v2051, %v2353
        %v2416 = vadd.f32 %v2056, %v2358
        %v2417 = vadd.f32 %v2059, %v2361
        %v2418 = vadd.f32 %v2064, %v2366
        %v2419 = vadd.f32 %v2067, %v2369
        %v2420 = vadd.f32 %v2072, %v2374
        %v2421 = vadd.f32 %v2075, %v2377
        %v2422 = vadd.f32 %v2080, %v2382
        %v2423 = vadd.f32 %v2083, %v2385
        %v2424 = vld [vmem:[#allocation2 + $0x8] sm:$0xe]
        %v2425 = vld [vmem:[#allocation2 + $0xc] sm:$0xf]
        %v2426 = vld [vmem:[#allocation2 + $0x10] sm:$0xf]
        %v2427 = vld [vmem:[#allocation2 + $0x14] sm:$0xf]
        %v2428 = vld [vmem:[#allocation2 + $0x18] sm:$0xf]
        %v2429 = vld [vmem:[#allocation2 + $0x1c] sm:$0xf]
        %v2430 = vld [vmem:[#allocation2 + $0x20] sm:$0xf]
        %v2431 = vld [vmem:[#allocation2 + $0x24] sm:$0xf]
        %v2432 = vld [vmem:[#allocation2 + $0x28] sm:$0xf]
        %v2433 = vld [vmem:[#allocation2 + $0x2c] sm:$0xf]
        %v2434 = vld [vmem:[#allocation2 + $0x30] sm:$0xf]
        %v2435 = vld [vmem:[#allocation2 + $0x34] sm:$0xf]
        %v2436 = vld [vmem:[#allocation2 + $0x38] sm:$0xf]
        %v2437 = vld [vmem:[#allocation2 + $0x3c] sm:$0xf]
        %v2438 = vld [vmem:[#allocation2 + $0x40] sm:$0xf]
        %v2439 = vld [vmem:[#allocation2 + $0x44] sm:$0xf]
        %v2440 = vld [vmem:[#allocation2 + $0x48] sm:$0xf]
        %v2441 = vld [vmem:[#allocation2 + $0x4c] sm:$0xf]
        %v2442 = vld [vmem:[#allocation2 + $0x50] sm:$0xf]
        %v2443 = vld [vmem:[#allocation2 + $0x54] sm:$0xf]
        %v2444 = vld [vmem:[#allocation2 + $0x58] sm:$0xf]
        %v2445 = vld [vmem:[#allocation2 + $0x5c] sm:$0xf]
        %v2446 = vld [vmem:[#allocation2 + $0x60] sm:$0xf]
        %v2447 = vld [vmem:[#allocation2 + $0x64] sm:$0xf]
        %v2448 = vld [vmem:[#allocation2 + $0x68] sm:$0xf]
        %v2449 = vld [vmem:[#allocation2 + $0x6c] sm:$0xf]
        %v2450 = vld [vmem:[#allocation2 + $0x70] sm:$0xf]
        %v2451 = vld [vmem:[#allocation2 + $0x74] sm:$0xf]
        %v2452 = vld [vmem:[#allocation2 + $0x78] sm:$0xf]
        %v2453 = vld [vmem:[#allocation2 + $0x7c] sm:$0xf]
        %v2454 = vld [vmem:[#allocation2 + $0x80] sm:$0xf]
        %v2455 = vld [vmem:[#allocation2 + $0x84] sm:$0xf]
        %v2456 = vld [vmem:[#allocation2 + $0x88] sm:$0xf]
        %v2457 = vld [vmem:[#allocation2 + $0x8c] sm:$0xf]
        %v2458 = vld [vmem:[#allocation2 + $0x90] sm:$0xf]
        %v2459 = vld [vmem:[#allocation2 + $0x94] sm:$0xf]
        %v2460 = vld [vmem:[#allocation2 + $0x98] sm:$0x1]
        %s2461 = scalar_lea.vmem [#allocation3], 192
        %v2462 = vld [vmem:[%s2461] sm:$0xf]
        %v2463 = vld [vmem:[%s2461 + $0x4] sm:$0xf]
        %v2464 = vld [vmem:[%s2461 + $0x8] sm:$0xf]
        %v2465 = vld [vmem:[%s2461 + $0xc] sm:$0xf]
        %v2466 = vld [vmem:[%s2461 + $0x10] sm:$0xf]
        %v2467 = vld [vmem:[%s2461 + $0x14] sm:$0xf]
        %v2468 = vld [vmem:[%s2461 + $0x18] sm:$0xf]
        %v2469 = vld [vmem:[%s2461 + $0x1c] sm:$0xf]
        %v2470 = vld [vmem:[%s2461 + $0x20] sm:$0xf]
        %v2471 = vld [vmem:[%s2461 + $0x24] sm:$0xf]
        %v2472 = vld [vmem:[%s2461 + $0x28] sm:$0xf]
        %v2473 = vld [vmem:[%s2461 + $0x2c] sm:$0xf]
        %v2474 = vld [vmem:[%s2461 + $0x30] sm:$0xf]
        %v2475 = vld [vmem:[%s2461 + $0x34] sm:$0xf]
        %v2476 = vld [vmem:[%s2461 + $0x38] sm:$0xf]
        %v2477 = vld [vmem:[%s2461 + $0x3c] sm:$0xf]
        %v2515 = vunpack.c.l.b16 %v2424
        %v2516 = vunpack.c.l.b16 %v2425
        %v2517 = vunpack.c.l.b16 %v2426
        %v2518 = vunpack.c.l.b16 %v2427
        %v2519 = vunpack.c.l.b16 %v2428
        %v2520 = vunpack.c.l.b16 %v2429
        %v2521 = vunpack.c.l.b16 %v2430
        %v2522 = vunpack.c.l.b16 %v2431
        %v2523 = vunpack.c.l.b16 %v2432
        %v2524 = vunpack.c.l.b16 %v2433
        %v2525 = vunpack.c.l.b16 %v2434
        %v2526 = vunpack.c.l.b16 %v2435
        %v2527 = vunpack.c.l.b16 %v2436
        %v2528 = vunpack.c.l.b16 %v2437
        %v2529 = vunpack.c.l.b16 %v2438
        %v2530 = vunpack.c.l.b16 %v2439
        %v2531 = vunpack.c.l.b16 %v2440
        %v2532 = vunpack.c.l.b16 %v2441
        %v2533 = vunpack.c.l.b16 %v2442
        %v2534 = vunpack.c.l.b16 %v2443
        %v2535 = vunpack.c.l.b16 %v2444
        %v2536 = vunpack.c.l.b16 %v2445
        %v2537 = vunpack.c.l.b16 %v2446
        %v2538 = vunpack.c.l.b16 %v2447
        %v2539 = vunpack.c.l.b16 %v2448
        %v2540 = vunpack.c.l.b16 %v2449
        %v2541 = vunpack.c.l.b16 %v2450
        %v2542 = vunpack.c.l.b16 %v2451
        %v2543 = vunpack.c.l.b16 %v2452
        %v2544 = vunpack.c.l.b16 %v2453
        %v2545 = vunpack.c.l.b16 %v2454
        %v2546 = vunpack.c.l.b16 %v2455
        %v2547 = vunpack.c.l.b16 %v2456
        %v2548 = vunpack.c.l.b16 %v2457
        %v2549 = vunpack.c.l.b16 %v2458
        %v2550 = vunpack.c.l.b16 %v2459
        %v2551 = vunpack.c.l.b16 %v2460
        %v2552 = vpack.c.b16 %v2516, %v2515
        %v2553 = vpack.c.b16 %v2518, %v2517
        %v2554 = vpack.c.b16 %v2520, %v2519
        %v2555 = vpack.c.b16 %v2522, %v2521
        %v2556 = vpack.c.b16 %v2524, %v2523
        %v2557 = vpack.c.b16 %v2526, %v2525
        %v2558 = vpack.c.b16 %v2528, %v2527
        %v2559 = vpack.c.b16 %v2530, %v2529
        %v2560 = vpack.c.b16 %v2532, %v2531
        %v2561 = vpack.c.b16 %v2534, %v2533
        %v2562 = vpack.c.b16 %v2536, %v2535
        %v2563 = vpack.c.b16 %v2538, %v2537
        %v2564 = vpack.c.b16 %v2540, %v2539
        %v2565 = vpack.c.b16 %v2542, %v2541
        %v2566 = vpack.c.b16 %v2544, %v2543
        %v2567 = vpack.c.b16 %v2546, %v2545
        %v2568 = vpack.c.b16 %v2548, %v2547
        %v2569 = vpack.c.b16 %v2550, %v2549
        %v2570 = vpack.c.b16 %v2551, %v2551
        %v2571 = vrot.slane %v2552, 1
        %v2572 = vrot.slane %v2553, 1
        %v2573 = vsel %vm2107, %v2571, %v2572
        %v2574 = vrot.slane %v2554, 1
        %v2575 = vsel %vm2107, %v2572, %v2574
        %v2576 = vrot.slane %v2555, 1
        %v2577 = vsel %vm2107, %v2574, %v2576
        %v2578 = vrot.slane %v2556, 1
        %v2579 = vsel %vm2107, %v2576, %v2578
        %v2580 = vrot.slane %v2557, 1
        %v2581 = vsel %vm2107, %v2578, %v2580
        %v2582 = vrot.slane %v2558, 1
        %v2583 = vsel %vm2107, %v2580, %v2582
        %v2584 = vrot.slane %v2559, 1
        %v2585 = vsel %vm2107, %v2582, %v2584
        %v2586 = vrot.slane %v2560, 1
        %v2587 = vsel %vm2107, %v2584, %v2586
        %v2588 = vrot.slane %v2561, 1
        %v2589 = vsel %vm2107, %v2586, %v2588
        %v2590 = vrot.slane %v2562, 1
        %v2591 = vsel %vm2107, %v2588, %v2590
        %v2592 = vrot.slane %v2563, 1
        %v2593 = vsel %vm2107, %v2590, %v2592
        %v2594 = vrot.slane %v2564, 1
        %v2595 = vsel %vm2107, %v2592, %v2594
        %v2596 = vrot.slane %v2565, 1
        %v2597 = vsel %vm2107, %v2594, %v2596
        %v2598 = vrot.slane %v2566, 1
        %v2599 = vsel %vm2107, %v2596, %v2598
        %v2600 = vrot.slane %v2567, 1
        %v2601 = vsel %vm2107, %v2598, %v2600
        %v2602 = vrot.slane %v2568, 1
        %v2603 = vsel %vm2107, %v2600, %v2602
        %v2604 = vrot.slane %v2569, 1
        %v2605 = vsel %vm2107, %v2602, %v2604
        %v2606 = vrot.slane %v2570, 1
        %v2607 = vsel %vm2107, %v2604, %v2606
        %v2642 = vunpack.c.l.b16 %v2462
        %v2643 = vunpack.c.l.b16 %v2463
        %v2644 = vunpack.c.l.b16 %v2464
        %v2645 = vunpack.c.l.b16 %v2465
        %v2646 = vunpack.c.l.b16 %v2466
        %v2647 = vunpack.c.l.b16 %v2467
        %v2648 = vunpack.c.l.b16 %v2468
        %v2649 = vunpack.c.l.b16 %v2469
        %v2650 = vunpack.c.l.b16 %v2470
        %v2651 = vunpack.c.l.b16 %v2471
        %v2652 = vunpack.c.l.b16 %v2472
        %v2653 = vunpack.c.l.b16 %v2473
        %v2654 = vunpack.c.l.b16 %v2474
        %v2655 = vunpack.c.l.b16 %v2475
        %v2656 = vunpack.c.l.b16 %v2476
        %v2657 = vunpack.c.l.b16 %v2477
        %v2658 = vpack.c.b16 %v2643, %v2642
        %v2659 = vpack.c.b16 %v2645, %v2644
        %v2660 = vpack.c.b16 %v2647, %v2646
        %v2661 = vpack.c.b16 %v2649, %v2648
        %v2662 = vpack.c.b16 %v2651, %v2650
        %v2663 = vpack.c.b16 %v2653, %v2652
        %v2664 = vpack.c.b16 %v2655, %v2654
        %v2665 = vpack.c.b16 %v2657, %v2656
        %2674 = vmatprep.subr.bf16.mxu0 0
        %2675 = vmatpush1.bf16.msra.mxu0 %v2658
        %2676 = vmatprep.subr.bf16.mxu0 0
        %2677 = vmatpush1.bf16.msra.mxu0 %v2659
        %2678 = vmatprep.subr.bf16.mxu0 0
        %2679 = vmatpush1.bf16.msra.mxu0 %v2660
        %2680 = vmatprep.subr.bf16.mxu0 0
        %2681 = vmatpush1.bf16.msra.mxu0 %v2661
        %2682 = vmatprep.subr.bf16.mxu0 0
        %2683 = vmatpush1.bf16.msra.mxu0 %v2662
        %2684 = vmatprep.subr.bf16.mxu0 0
        %2685 = vmatpush1.bf16.msra.mxu0 %v2663
        %2686 = vmatprep.subr.bf16.mxu0 0
        %2687 = vmatpush1.bf16.msra.mxu0 %v2664
        %2688 = vmatprep.subr.bf16.mxu0 0
        %2689 = vmatpush1.bf16.msra.mxu0 %v2665
        %2690 = vmatprep.subr.bf16.mxu0 0
        %2691 = vmatpush1.bf16.msra.mxu0 0
        %2692 = vmatprep.subr.bf16.mxu0 0
        %2693 = vmatpush1.bf16.msra.mxu0 0
        %2694 = vmatprep.subr.bf16.mxu0 0
        %2695 = vmatpush1.bf16.msra.mxu0 0
        %2696 = vmatprep.subr.bf16.mxu0 0
        %2697 = vmatpush1.bf16.msra.mxu0 0
        %2698 = vmatprep.subr.bf16.mxu0 0
        %2699 = vmatpush1.bf16.msra.mxu0 0
        %2700 = vmatprep.subr.bf16.mxu0 0
        %2701 = vmatpush1.bf16.msra.mxu0 0
        %2702 = vmatprep.subr.bf16.mxu0 0
        %2703 = vmatpush1.bf16.msra.mxu0 0
        %2704 = vmatprep.subr.bf16.mxu0 0
        %2705 = vmatpush1.bf16.msra.mxu0 0
        %2706 = vmatprep.mubr.bf16.mxu0 0
        %2707 = vmatmul.mubr.bf16.gmra.mrb[0].mxu0 %v2573
        %v2708 = vpop.f32.mrb[0].mxu0
        %v2709 = vadd.f32 0.0, %v2708
        %v2710 = vpop.f32.mrb[0].mxu0
        %v2711 = vpop.f32.mrb[0].mxu0
        %v2712 = vadd.f32 0.0, %v2711
        %v2713 = vpop.f32.mrb[0].mxu0
        %2714 = vmatprep.mubr.bf16.mxu0 0
        %2715 = vmatmul.mubr.bf16.gmra.mrb[0].mxu0 %v2575
        %v2716 = vpop.f32.mrb[0].mxu0
        %v2717 = vadd.f32 0.0, %v2716
        %v2718 = vpop.f32.mrb[0].mxu0
        %v2719 = vpop.f32.mrb[0].mxu0
        %v2720 = vadd.f32 0.0, %v2719
        %v2721 = vpop.f32.mrb[0].mxu0
        %2722 = vmatprep.mubr.bf16.mxu0 0
        %2723 = vmatmul.mubr.bf16.gmra.mrb[0].mxu0 %v2577
        %v2724 = vpop.f32.mrb[0].mxu0
        %v2725 = vadd.f32 0.0, %v2724
        %v2726 = vpop.f32.mrb[0].mxu0
        %v2727 = vpop.f32.mrb[0].mxu0
        %v2728 = vadd.f32 0.0, %v2727
        %v2729 = vpop.f32.mrb[0].mxu0
        %2730 = vmatprep.mubr.bf16.mxu0 0
        %2731 = vmatmul.mubr.bf16.gmra.mrb[0].mxu0 %v2579
        %v2732 = vpop.f32.mrb[0].mxu0
        %v2733 = vadd.f32 0.0, %v2732
        %v2734 = vpop.f32.mrb[0].mxu0
        %v2735 = vpop.f32.mrb[0].mxu0
        %v2736 = vadd.f32 0.0, %v2735
        %v2737 = vpop.f32.mrb[0].mxu0
        %2738 = vmatprep.mubr.bf16.mxu0 0
        %2739 = vmatmul.mubr.bf16.gmra.mrb[0].mxu0 %v2581
        %v2740 = vpop.f32.mrb[0].mxu0
        %v2741 = vadd.f32 0.0, %v2740
        %v2742 = vpop.f32.mrb[0].mxu0
        %v2743 = vpop.f32.mrb[0].mxu0
        %v2744 = vadd.f32 0.0, %v2743
        %v2745 = vpop.f32.mrb[0].mxu0
        %2746 = vmatprep.mubr.bf16.mxu0 0
        %2747 = vmatmul.mubr.bf16.gmra.mrb[0].mxu0 %v2583
        %v2748 = vpop.f32.mrb[0].mxu0
        %v2749 = vadd.f32 0.0, %v2748
        %v2750 = vpop.f32.mrb[0].mxu0
        %v2751 = vpop.f32.mrb[0].mxu0
        %v2752 = vadd.f32 0.0, %v2751
        %v2753 = vpop.f32.mrb[0].mxu0
        %2754 = vmatprep.mubr.bf16.mxu0 0
        %2755 = vmatmul.mubr.bf16.gmra.mrb[0].mxu0 %v2585
        %v2756 = vpop.f32.mrb[0].mxu0
        %v2757 = vadd.f32 0.0, %v2756
        %v2758 = vpop.f32.mrb[0].mxu0
        %v2759 = vpop.f32.mrb[0].mxu0
        %v2760 = vadd.f32 0.0, %v2759
        %v2761 = vpop.f32.mrb[0].mxu0
        %2762 = vmatprep.mubr.bf16.mxu0 0
        %2763 = vmatmul.mubr.bf16.gmra.mrb[0].mxu0 %v2587
        %v2764 = vpop.f32.mrb[0].mxu0
        %v2765 = vadd.f32 0.0, %v2764
        %v2766 = vpop.f32.mrb[0].mxu0
        %v2767 = vpop.f32.mrb[0].mxu0
        %v2768 = vadd.f32 0.0, %v2767
        %v2769 = vpop.f32.mrb[0].mxu0
        %2770 = vmatprep.mubr.bf16.mxu0 0
        %2771 = vmatmul.mubr.bf16.gmra.mrb[0].mxu0 %v2589
        %v2772 = vpop.f32.mrb[0].mxu0
        %v2773 = vadd.f32 0.0, %v2772
        %v2774 = vpop.f32.mrb[0].mxu0
        %v2775 = vpop.f32.mrb[0].mxu0
        %v2776 = vadd.f32 0.0, %v2775
        %v2777 = vpop.f32.mrb[0].mxu0
        %2778 = vmatprep.mubr.bf16.mxu0 0
        %2779 = vmatmul.mubr.bf16.gmra.mrb[0].mxu0 %v2591
        %v2780 = vpop.f32.mrb[0].mxu0
        %v2781 = vadd.f32 0.0, %v2780
        %v2782 = vpop.f32.mrb[0].mxu0
        %v2783 = vpop.f32.mrb[0].mxu0
        %v2784 = vadd.f32 0.0, %v2783
        %v2785 = vpop.f32.mrb[0].mxu0
        %2786 = vmatprep.mubr.bf16.mxu0 0
        %2787 = vmatmul.mubr.bf16.gmra.mrb[0].mxu0 %v2593
        %v2788 = vpop.f32.mrb[0].mxu0
        %v2789 = vadd.f32 0.0, %v2788
        %v2790 = vpop.f32.mrb[0].mxu0
        %v2791 = vpop.f32.mrb[0].mxu0
        %v2792 = vadd.f32 0.0, %v2791
        %v2793 = vpop.f32.mrb[0].mxu0
        %2794 = vmatprep.mubr.bf16.mxu0 0
        %2795 = vmatmul.mubr.bf16.gmra.mrb[0].mxu0 %v2595
        %v2796 = vpop.f32.mrb[0].mxu0
        %v2797 = vadd.f32 0.0, %v2796
        %v2798 = vpop.f32.mrb[0].mxu0
        %v2799 = vpop.f32.mrb[0].mxu0
        %v2800 = vadd.f32 0.0, %v2799
        %v2801 = vpop.f32.mrb[0].mxu0
        %2802 = vmatprep.mubr.bf16.mxu0 0
        %2803 = vmatmul.mubr.bf16.gmra.mrb[0].mxu0 %v2597
        %v2804 = vpop.f32.mrb[0].mxu0
        %v2805 = vadd.f32 0.0, %v2804
        %v2806 = vpop.f32.mrb[0].mxu0
        %v2807 = vpop.f32.mrb[0].mxu0
        %v2808 = vadd.f32 0.0, %v2807
        %v2809 = vpop.f32.mrb[0].mxu0
        %2810 = vmatprep.mubr.bf16.mxu0 0
        %2811 = vmatmul.mubr.bf16.gmra.mrb[0].mxu0 %v2599
        %v2812 = vpop.f32.mrb[0].mxu0
        %v2813 = vadd.f32 0.0, %v2812
        %v2814 = vpop.f32.mrb[0].mxu0
        %v2815 = vpop.f32.mrb[0].mxu0
        %v2816 = vadd.f32 0.0, %v2815
        %v2817 = vpop.f32.mrb[0].mxu0
        %2818 = vmatprep.mubr.bf16.mxu0 0
        %2819 = vmatmul.mubr.bf16.gmra.mrb[0].mxu0 %v2601
        %v2820 = vpop.f32.mrb[0].mxu0
        %v2821 = vadd.f32 0.0, %v2820
        %v2822 = vpop.f32.mrb[0].mxu0
        %v2823 = vpop.f32.mrb[0].mxu0
        %v2824 = vadd.f32 0.0, %v2823
        %v2825 = vpop.f32.mrb[0].mxu0
        %2826 = vmatprep.mubr.bf16.mxu0 0
        %2827 = vmatmul.mubr.bf16.gmra.mrb[0].mxu0 %v2603
        %v2828 = vpop.f32.mrb[0].mxu0
        %v2829 = vadd.f32 0.0, %v2828
        %v2830 = vpop.f32.mrb[0].mxu0
        %v2831 = vpop.f32.mrb[0].mxu0
        %v2832 = vadd.f32 0.0, %v2831
        %v2833 = vpop.f32.mrb[0].mxu0
        %2834 = vmatprep.mubr.bf16.mxu0 0
        %2835 = vmatmul.mubr.bf16.gmra.mrb[0].mxu0 %v2605
        %v2836 = vpop.f32.mrb[0].mxu0
        %v2837 = vadd.f32 0.0, %v2836
        %v2838 = vpop.f32.mrb[0].mxu0
        %v2839 = vpop.f32.mrb[0].mxu0
        %v2840 = vadd.f32 0.0, %v2839
        %v2841 = vpop.f32.mrb[0].mxu0
        %2842 = vmatprep.mubr.bf16.mxu0 0
        %2843 = vmatmul.mubr.bf16.gmra.mrb[0].mxu0 %v2607
        %v2844 = vpop.f32.mrb[0].mxu0
        %v2845 = vadd.f32 0.0, %v2844
        %v2846 = vpop.f32.mrb[0].mxu0
        %v2847 = vpop.f32.mrb[0].mxu0
        %v2848 = vadd.f32 0.0, %v2847
        %v2849 = vpop.f32.mrb[0].mxu0
        %2850 = vdwg.mxu0
        %v2851 = vadd.f32 %v2388, %v2709
        %v2852 = vadd.f32 %v2389, %v2712
        %v2853 = vadd.f32 %v2390, %v2717
        %v2854 = vadd.f32 %v2391, %v2720
        %v2855 = vadd.f32 %v2392, %v2725
        %v2856 = vadd.f32 %v2393, %v2728
        %v2857 = vadd.f32 %v2394, %v2733
        %v2858 = vadd.f32 %v2395, %v2736
        %v2859 = vadd.f32 %v2396, %v2741
        %v2860 = vadd.f32 %v2397, %v2744
        %v2861 = vadd.f32 %v2398, %v2749
        %v2862 = vadd.f32 %v2399, %v2752
        %v2863 = vadd.f32 %v2400, %v2757
        %v2864 = vadd.f32 %v2401, %v2760
        %v2865 = vadd.f32 %v2402, %v2765
        %v2866 = vadd.f32 %v2403, %v2768
        %v2867 = vadd.f32 %v2404, %v2773
        %v2868 = vadd.f32 %v2405, %v2776
        %v2869 = vadd.f32 %v2406, %v2781
        %v2870 = vadd.f32 %v2407, %v2784
        %v2871 = vadd.f32 %v2408, %v2789
        %v2872 = vadd.f32 %v2409, %v2792
        %v2873 = vadd.f32 %v2410, %v2797
        %v2874 = vadd.f32 %v2411, %v2800
        %v2875 = vadd.f32 %v2412, %v2805
        %v2876 = vadd.f32 %v2413, %v2808
        %v2877 = vadd.f32 %v2414, %v2813
        %v2878 = vadd.f32 %v2415, %v2816
        %v2879 = vadd.f32 %v2416, %v2821
        %v2880 = vadd.f32 %v2417, %v2824
        %v2881 = vadd.f32 %v2418, %v2829
        %v2882 = vadd.f32 %v2419, %v2832
        %v2883 = vadd.f32 %v2420, %v2837
        %v2884 = vadd.f32 %v2421, %v2840
        %v2885 = vadd.f32 %v2422, %v2845
        %v2886 = vadd.f32 %v2423, %v2848
        %v2887 = vld [vmem:[#allocation2 + $0x98] sm:$0x3]
        %s2888 = scalar_lea.vmem [#allocation3], 256
        %v2889 = vld [vmem:[%s2888] sm:$0xf]
        %v2890 = vld [vmem:[%s2888 + $0x4] sm:$0xf]
        %v2891 = vld [vmem:[%s2888 + $0x8] sm:$0xf]
        %v2892 = vld [vmem:[%s2888 + $0xc] sm:$0xf]
        %v2893 = vld [vmem:[%s2888 + $0x10] sm:$0xf]
        %v2894 = vld [vmem:[%s2888 + $0x14] sm:$0xf]
        %v2895 = vld [vmem:[%s2888 + $0x18] sm:$0xf]
        %v2896 = vld [vmem:[%s2888 + $0x1c] sm:$0xf]
        %v2897 = vld [vmem:[%s2888 + $0x20] sm:$0xf]
        %v2898 = vld [vmem:[%s2888 + $0x24] sm:$0xf]
        %v2899 = vld [vmem:[%s2888 + $0x28] sm:$0xf]
        %v2900 = vld [vmem:[%s2888 + $0x2c] sm:$0xf]
        %v2901 = vld [vmem:[%s2888 + $0x30] sm:$0xf]
        %v2902 = vld [vmem:[%s2888 + $0x34] sm:$0xf]
        %v2903 = vld [vmem:[%s2888 + $0x38] sm:$0xf]
        %v2904 = vld [vmem:[%s2888 + $0x3c] sm:$0xf]
        %v2906 = vunpack.c.l.b16 %v2887
        %v2907 = vpack.c.b16 %v2906, %v2906
        %vm2908 = vsmask.f32 6400
        %v2910 = vshrl.u32 %v2552, 16
        %v2912 = vrot.slane %v2910, 1
        %v2913 = vshll.u32 %v2552, 16
        %v2915 = vrot.slane %v2913, 2
        %v2916 = vor.u32 %v2912, %v2915
        %v2918 = vshrl.u32 %v2553, 16
        %v2920 = vrot.slane %v2918, 1
        %v2921 = vshll.u32 %v2553, 16
        %v2923 = vrot.slane %v2921, 2
        %v2924 = vor.u32 %v2920, %v2923
        %v2925 = vsel %vm2908, %v2916, %v2924
        %v2927 = vshrl.u32 %v2554, 16
        %v2929 = vrot.slane %v2927, 1
        %v2930 = vshll.u32 %v2554, 16
        %v2932 = vrot.slane %v2930, 2
        %v2933 = vor.u32 %v2929, %v2932
        %v2934 = vsel %vm2908, %v2924, %v2933
        %v2936 = vshrl.u32 %v2555, 16
        %v2938 = vrot.slane %v2936, 1
        %v2939 = vshll.u32 %v2555, 16
        %v2941 = vrot.slane %v2939, 2
        %v2942 = vor.u32 %v2938, %v2941
        %v2943 = vsel %vm2908, %v2933, %v2942
        %v2945 = vshrl.u32 %v2556, 16
        %v2947 = vrot.slane %v2945, 1
        %v2948 = vshll.u32 %v2556, 16
        %v2950 = vrot.slane %v2948, 2
        %v2951 = vor.u32 %v2947, %v2950
        %v2952 = vsel %vm2908, %v2942, %v2951
        %v2954 = vshrl.u32 %v2557, 16
        %v2956 = vrot.slane %v2954, 1
        %v2957 = vshll.u32 %v2557, 16
        %v2959 = vrot.slane %v2957, 2
        %v2960 = vor.u32 %v2956, %v2959
        %v2961 = vsel %vm2908, %v2951, %v2960
        %v2963 = vshrl.u32 %v2558, 16
        %v2965 = vrot.slane %v2963, 1
        %v2966 = vshll.u32 %v2558, 16
        %v2968 = vrot.slane %v2966, 2
        %v2969 = vor.u32 %v2965, %v2968
        %v2970 = vsel %vm2908, %v2960, %v2969
        %v2972 = vshrl.u32 %v2559, 16
        %v2974 = vrot.slane %v2972, 1
        %v2975 = vshll.u32 %v2559, 16
        %v2977 = vrot.slane %v2975, 2
        %v2978 = vor.u32 %v2974, %v2977
        %v2979 = vsel %vm2908, %v2969, %v2978
        %v2981 = vshrl.u32 %v2560, 16
        %v2983 = vrot.slane %v2981, 1
        %v2984 = vshll.u32 %v2560, 16
        %v2986 = vrot.slane %v2984, 2
        %v2987 = vor.u32 %v2983, %v2986
        %v2988 = vsel %vm2908, %v2978, %v2987
        %v2990 = vshrl.u32 %v2561, 16
        %v2992 = vrot.slane %v2990, 1
        %v2993 = vshll.u32 %v2561, 16
        %v2995 = vrot.slane %v2993, 2
        %v2996 = vor.u32 %v2992, %v2995
        %v2997 = vsel %vm2908, %v2987, %v2996
        %v2999 = vshrl.u32 %v2562, 16
        %v3001 = vrot.slane %v2999, 1
        %v3002 = vshll.u32 %v2562, 16
        %v3004 = vrot.slane %v3002, 2
        %v3005 = vor.u32 %v3001, %v3004
        %v3006 = vsel %vm2908, %v2996, %v3005
        %v3008 = vshrl.u32 %v2563, 16
        %v3010 = vrot.slane %v3008, 1
        %v3011 = vshll.u32 %v2563, 16
        %v3013 = vrot.slane %v3011, 2
        %v3014 = vor.u32 %v3010, %v3013
        %v3015 = vsel %vm2908, %v3005, %v3014
        %v3017 = vshrl.u32 %v2564, 16
        %v3019 = vrot.slane %v3017, 1
        %v3020 = vshll.u32 %v2564, 16
        %v3022 = vrot.slane %v3020, 2
        %v3023 = vor.u32 %v3019, %v3022
        %v3024 = vsel %vm2908, %v3014, %v3023
        %v3026 = vshrl.u32 %v2565, 16
        %v3028 = vrot.slane %v3026, 1
        %v3029 = vshll.u32 %v2565, 16
        %v3031 = vrot.slane %v3029, 2
        %v3032 = vor.u32 %v3028, %v3031
        %v3033 = vsel %vm2908, %v3023, %v3032
        %v3035 = vshrl.u32 %v2566, 16
        %v3037 = vrot.slane %v3035, 1
        %v3038 = vshll.u32 %v2566, 16
        %v3040 = vrot.slane %v3038, 2
        %v3041 = vor.u32 %v3037, %v3040
        %v3042 = vsel %vm2908, %v3032, %v3041
        %v3044 = vshrl.u32 %v2567, 16
        %v3046 = vrot.slane %v3044, 1
        %v3047 = vshll.u32 %v2567, 16
        %v3049 = vrot.slane %v3047, 2
        %v3050 = vor.u32 %v3046, %v3049
        %v3051 = vsel %vm2908, %v3041, %v3050
        %v3053 = vshrl.u32 %v2568, 16
        %v3055 = vrot.slane %v3053, 1
        %v3056 = vshll.u32 %v2568, 16
        %v3058 = vrot.slane %v3056, 2
        %v3059 = vor.u32 %v3055, %v3058
        %v3060 = vsel %vm2908, %v3050, %v3059
        %v3062 = vshrl.u32 %v2569, 16
        %v3064 = vrot.slane %v3062, 1
        %v3065 = vshll.u32 %v2569, 16
        %v3067 = vrot.slane %v3065, 2
        %v3068 = vor.u32 %v3064, %v3067
        %v3069 = vsel %vm2908, %v3059, %v3068
        %v3071 = vshrl.u32 %v2907, 16
        %v3073 = vrot.slane %v3071, 1
        %v3074 = vshll.u32 %v2907, 16
        %v3076 = vrot.slane %v3074, 2
        %v3077 = vor.u32 %v3073, %v3076
        %v3078 = vsel %vm2908, %v3068, %v3077
        %v3113 = vunpack.c.l.b16 %v2889
        %v3114 = vunpack.c.l.b16 %v2890
        %v3115 = vunpack.c.l.b16 %v2891
        %v3116 = vunpack.c.l.b16 %v2892
        %v3117 = vunpack.c.l.b16 %v2893
        %v3118 = vunpack.c.l.b16 %v2894
        %v3119 = vunpack.c.l.b16 %v2895
        %v3120 = vunpack.c.l.b16 %v2896
        %v3121 = vunpack.c.l.b16 %v2897
        %v3122 = vunpack.c.l.b16 %v2898
        %v3123 = vunpack.c.l.b16 %v2899
        %v3124 = vunpack.c.l.b16 %v2900
        %v3125 = vunpack.c.l.b16 %v2901
        %v3126 = vunpack.c.l.b16 %v2902
        %v3127 = vunpack.c.l.b16 %v2903
        %v3128 = vunpack.c.l.b16 %v2904
        %v3129 = vpack.c.b16 %v3114, %v3113
        %v3130 = vpack.c.b16 %v3116, %v3115
        %v3131 = vpack.c.b16 %v3118, %v3117
        %v3132 = vpack.c.b16 %v3120, %v3119
        %v3133 = vpack.c.b16 %v3122, %v3121
        %v3134 = vpack.c.b16 %v3124, %v3123
        %v3135 = vpack.c.b16 %v3126, %v3125
        %v3136 = vpack.c.b16 %v3128, %v3127
        %3145 = vmatprep.subr.bf16.mxu0 0
        %3146 = vmatpush1.bf16.msra.mxu0 %v3129
        %3147 = vmatprep.subr.bf16.mxu0 0
        %3148 = vmatpush1.bf16.msra.mxu0 %v3130
        %3149 = vmatprep.subr.bf16.mxu0 0
        %3150 = vmatpush1.bf16.msra.mxu0 %v3131
        %3151 = vmatprep.subr.bf16.mxu0 0
        %3152 = vmatpush1.bf16.msra.mxu0 %v3132
        %3153 = vmatprep.subr.bf16.mxu0 0
        %3154 = vmatpush1.bf16.msra.mxu0 %v3133
        %3155 = vmatprep.subr.bf16.mxu0 0
        %3156 = vmatpush1.bf16.msra.mxu0 %v3134
        %3157 = vmatprep.subr.bf16.mxu0 0
        %3158 = vmatpush1.bf16.msra.mxu0 %v3135
        %3159 = vmatprep.subr.bf16.mxu0 0
        %3160 = vmatpush1.bf16.msra.mxu0 %v3136
        %3161 = vmatprep.subr.bf16.mxu0 0
        %3162 = vmatpush1.bf16.msra.mxu0 0
        %3163 = vmatprep.subr.bf16.mxu0 0
        %3164 = vmatpush1.bf16.msra.mxu0 0
        %3165 = vmatprep.subr.bf16.mxu0 0
        %3166 = vmatpush1.bf16.msra.mxu0 0
        %3167 = vmatprep.subr.bf16.mxu0 0
        %3168 = vmatpush1.bf16.msra.mxu0 0
        %3169 = vmatprep.subr.bf16.mxu0 0
        %3170 = vmatpush1.bf16.msra.mxu0 0
        %3171 = vmatprep.subr.bf16.mxu0 0
        %3172 = vmatpush1.bf16.msra.mxu0 0
        %3173 = vmatprep.subr.bf16.mxu0 0
        %3174 = vmatpush1.bf16.msra.mxu0 0
        %3175 = vmatprep.subr.bf16.mxu0 0
        %3176 = vmatpush1.bf16.msra.mxu0 0
        %3177 = vmatprep.mubr.bf16.mxu0 0
        %3178 = vmatmul.mubr.bf16.gmra.mrb[0].mxu0 %v2925
        %v3179 = vpop.f32.mrb[0].mxu0
        %v3180 = vadd.f32 0.0, %v3179
        %v3181 = vpop.f32.mrb[0].mxu0
        %v3182 = vpop.f32.mrb[0].mxu0
        %v3183 = vadd.f32 0.0, %v3182
        %v3184 = vpop.f32.mrb[0].mxu0
        %3185 = vmatprep.mubr.bf16.mxu0 0
        %3186 = vmatmul.mubr.bf16.gmra.mrb[0].mxu0 %v2934
        %v3187 = vpop.f32.mrb[0].mxu0
        %v3188 = vadd.f32 0.0, %v3187
        %v3189 = vpop.f32.mrb[0].mxu0
        %v3190 = vpop.f32.mrb[0].mxu0
        %v3191 = vadd.f32 0.0, %v3190
        %v3192 = vpop.f32.mrb[0].mxu0
        %3193 = vmatprep.mubr.bf16.mxu0 0
        %3194 = vmatmul.mubr.bf16.gmra.mrb[0].mxu0 %v2943
        %v3195 = vpop.f32.mrb[0].mxu0
        %v3196 = vadd.f32 0.0, %v3195
        %v3197 = vpop.f32.mrb[0].mxu0
        %v3198 = vpop.f32.mrb[0].mxu0
        %v3199 = vadd.f32 0.0, %v3198
        %v3200 = vpop.f32.mrb[0].mxu0
        %3201 = vmatprep.mubr.bf16.mxu0 0
        %3202 = vmatmul.mubr.bf16.gmra.mrb[0].mxu0 %v2952
        %v3203 = vpop.f32.mrb[0].mxu0
        %v3204 = vadd.f32 0.0, %v3203
        %v3205 = vpop.f32.mrb[0].mxu0
        %v3206 = vpop.f32.mrb[0].mxu0
        %v3207 = vadd.f32 0.0, %v3206
        %v3208 = vpop.f32.mrb[0].mxu0
        %3209 = vmatprep.mubr.bf16.mxu0 0
        %3210 = vmatmul.mubr.bf16.gmra.mrb[0].mxu0 %v2961
        %v3211 = vpop.f32.mrb[0].mxu0
        %v3212 = vadd.f32 0.0, %v3211
        %v3213 = vpop.f32.mrb[0].mxu0
        %v3214 = vpop.f32.mrb[0].mxu0
        %v3215 = vadd.f32 0.0, %v3214
        %v3216 = vpop.f32.mrb[0].mxu0
        %3217 = vmatprep.mubr.bf16.mxu0 0
        %3218 = vmatmul.mubr.bf16.gmra.mrb[0].mxu0 %v2970
        %v3219 = vpop.f32.mrb[0].mxu0
        %v3220 = vadd.f32 0.0, %v3219
        %v3221 = vpop.f32.mrb[0].mxu0
        %v3222 = vpop.f32.mrb[0].mxu0
        %v3223 = vadd.f32 0.0, %v3222
        %v3224 = vpop.f32.mrb[0].mxu0
        %3225 = vmatprep.mubr.bf16.mxu0 0
        %3226 = vmatmul.mubr.bf16.gmra.mrb[0].mxu0 %v2979
        %v3227 = vpop.f32.mrb[0].mxu0
        %v3228 = vadd.f32 0.0, %v3227
        %v3229 = vpop.f32.mrb[0].mxu0
        %v3230 = vpop.f32.mrb[0].mxu0
        %v3231 = vadd.f32 0.0, %v3230
        %v3232 = vpop.f32.mrb[0].mxu0
        %3233 = vmatprep.mubr.bf16.mxu0 0
        %3234 = vmatmul.mubr.bf16.gmra.mrb[0].mxu0 %v2988
        %v3235 = vpop.f32.mrb[0].mxu0
        %v3236 = vadd.f32 0.0, %v3235
        %v3237 = vpop.f32.mrb[0].mxu0
        %v3238 = vpop.f32.mrb[0].mxu0
        %v3239 = vadd.f32 0.0, %v3238
        %v3240 = vpop.f32.mrb[0].mxu0
        %3241 = vmatprep.mubr.bf16.mxu0 0
        %3242 = vmatmul.mubr.bf16.gmra.mrb[0].mxu0 %v2997
        %v3243 = vpop.f32.mrb[0].mxu0
        %v3244 = vadd.f32 0.0, %v3243
        %v3245 = vpop.f32.mrb[0].mxu0
        %v3246 = vpop.f32.mrb[0].mxu0
        %v3247 = vadd.f32 0.0, %v3246
        %v3248 = vpop.f32.mrb[0].mxu0
        %3249 = vmatprep.mubr.bf16.mxu0 0
        %3250 = vmatmul.mubr.bf16.gmra.mrb[0].mxu0 %v3006
        %v3251 = vpop.f32.mrb[0].mxu0
        %v3252 = vadd.f32 0.0, %v3251
        %v3253 = vpop.f32.mrb[0].mxu0
        %v3254 = vpop.f32.mrb[0].mxu0
        %v3255 = vadd.f32 0.0, %v3254
        %v3256 = vpop.f32.mrb[0].mxu0
        %3257 = vmatprep.mubr.bf16.mxu0 0
        %3258 = vmatmul.mubr.bf16.gmra.mrb[0].mxu0 %v3015
        %v3259 = vpop.f32.mrb[0].mxu0
        %v3260 = vadd.f32 0.0, %v3259
        %v3261 = vpop.f32.mrb[0].mxu0
        %v3262 = vpop.f32.mrb[0].mxu0
        %v3263 = vadd.f32 0.0, %v3262
        %v3264 = vpop.f32.mrb[0].mxu0
        %3265 = vmatprep.mubr.bf16.mxu0 0
        %3266 = vmatmul.mubr.bf16.gmra.mrb[0].mxu0 %v3024
        %v3267 = vpop.f32.mrb[0].mxu0
        %v3268 = vadd.f32 0.0, %v3267
        %v3269 = vpop.f32.mrb[0].mxu0
        %v3270 = vpop.f32.mrb[0].mxu0
        %v3271 = vadd.f32 0.0, %v3270
        %v3272 = vpop.f32.mrb[0].mxu0
        %3273 = vmatprep.mubr.bf16.mxu0 0
        %3274 = vmatmul.mubr.bf16.gmra.mrb[0].mxu0 %v3033
        %v3275 = vpop.f32.mrb[0].mxu0
        %v3276 = vadd.f32 0.0, %v3275
        %v3277 = vpop.f32.mrb[0].mxu0
        %v3278 = vpop.f32.mrb[0].mxu0
        %v3279 = vadd.f32 0.0, %v3278
        %v3280 = vpop.f32.mrb[0].mxu0
        %3281 = vmatprep.mubr.bf16.mxu0 0
        %3282 = vmatmul.mubr.bf16.gmra.mrb[0].mxu0 %v3042
        %v3283 = vpop.f32.mrb[0].mxu0
        %v3284 = vadd.f32 0.0, %v3283
        %v3285 = vpop.f32.mrb[0].mxu0
        %v3286 = vpop.f32.mrb[0].mxu0
        %v3287 = vadd.f32 0.0, %v3286
        %v3288 = vpop.f32.mrb[0].mxu0
        %3289 = vmatprep.mubr.bf16.mxu0 0
        %3290 = vmatmul.mubr.bf16.gmra.mrb[0].mxu0 %v3051
        %v3291 = vpop.f32.mrb[0].mxu0
        %v3292 = vadd.f32 0.0, %v3291
        %v3293 = vpop.f32.mrb[0].mxu0
        %v3294 = vpop.f32.mrb[0].mxu0
        %v3295 = vadd.f32 0.0, %v3294
        %v3296 = vpop.f32.mrb[0].mxu0
        %3297 = vmatprep.mubr.bf16.mxu0 0
        %3298 = vmatmul.mubr.bf16.gmra.mrb[0].mxu0 %v3060
        %v3299 = vpop.f32.mrb[0].mxu0
        %v3300 = vadd.f32 0.0, %v3299
        %v3301 = vpop.f32.mrb[0].mxu0
        %v3302 = vpop.f32.mrb[0].mxu0
        %v3303 = vadd.f32 0.0, %v3302
        %v3304 = vpop.f32.mrb[0].mxu0
        %3305 = vmatprep.mubr.bf16.mxu0 0
        %3306 = vmatmul.mubr.bf16.gmra.mrb[0].mxu0 %v3069
        %v3307 = vpop.f32.mrb[0].mxu0
        %v3308 = vadd.f32 0.0, %v3307
        %v3309 = vpop.f32.mrb[0].mxu0
        %v3310 = vpop.f32.mrb[0].mxu0
        %v3311 = vadd.f32 0.0, %v3310
        %v3312 = vpop.f32.mrb[0].mxu0
        %3313 = vmatprep.mubr.bf16.mxu0 0
        %3314 = vmatmul.mubr.bf16.gmra.mrb[0].mxu0 %v3078
        %v3315 = vpop.f32.mrb[0].mxu0
        %v3316 = vadd.f32 0.0, %v3315
        %v3317 = vpop.f32.mrb[0].mxu0
        %v3318 = vpop.f32.mrb[0].mxu0
        %v3319 = vadd.f32 0.0, %v3318
        %v3320 = vpop.f32.mrb[0].mxu0
        %3321 = vdwg.mxu0
        %v3322 = vadd.f32 %v2851, %v3180
        %v3323 = vadd.f32 %v2852, %v3183
        %v3324 = vadd.f32 %v2853, %v3188
        %v3325 = vadd.f32 %v2854, %v3191
        %v3326 = vadd.f32 %v2855, %v3196
        %v3327 = vadd.f32 %v2856, %v3199
        %v3328 = vadd.f32 %v2857, %v3204
        %v3329 = vadd.f32 %v2858, %v3207
        %v3330 = vadd.f32 %v2859, %v3212
        %v3331 = vadd.f32 %v2860, %v3215
        %v3332 = vadd.f32 %v2861, %v3220
        %v3333 = vadd.f32 %v2862, %v3223
        %v3334 = vadd.f32 %v2863, %v3228
        %v3335 = vadd.f32 %v2864, %v3231
        %v3336 = vadd.f32 %v2865, %v3236
        %v3337 = vadd.f32 %v2866, %v3239
        %v3338 = vadd.f32 %v2867, %v3244
        %v3339 = vadd.f32 %v2868, %v3247
        %v3340 = vadd.f32 %v2869, %v3252
        %v3341 = vadd.f32 %v2870, %v3255
        %v3342 = vadd.f32 %v2871, %v3260
        %v3343 = vadd.f32 %v2872, %v3263
        %v3344 = vadd.f32 %v2873, %v3268
        %v3345 = vadd.f32 %v2874, %v3271
        %v3346 = vadd.f32 %v2875, %v3276
        %v3347 = vadd.f32 %v2876, %v3279
        %v3348 = vadd.f32 %v2877, %v3284
        %v3349 = vadd.f32 %v2878, %v3287
        %v3350 = vadd.f32 %v2879, %v3292
        %v3351 = vadd.f32 %v2880, %v3295
        %v3352 = vadd.f32 %v2881, %v3300
        %v3353 = vadd.f32 %v2882, %v3303
        %v3354 = vadd.f32 %v2883, %v3308
        %v3355 = vadd.f32 %v2884, %v3311
        %v3356 = vadd.f32 %v2885, %v3316
        %v3357 = vadd.f32 %v2886, %v3319
        %v3358 = vld [vmem:[#allocation2 + $0x8] sm:$0xc]
        %s3359 = scalar_lea.vmem [#allocation3], 320
        %v3360 = vld [vmem:[%s3359] sm:$0xf]
        %v3361 = vld [vmem:[%s3359 + $0x4] sm:$0xf]
        %v3362 = vld [vmem:[%s3359 + $0x8] sm:$0xf]
        %v3363 = vld [vmem:[%s3359 + $0xc] sm:$0xf]
        %v3364 = vld [vmem:[%s3359 + $0x10] sm:$0xf]
        %v3365 = vld [vmem:[%s3359 + $0x14] sm:$0xf]
        %v3366 = vld [vmem:[%s3359 + $0x18] sm:$0xf]
        %v3367 = vld [vmem:[%s3359 + $0x1c] sm:$0xf]
        %v3368 = vld [vmem:[%s3359 + $0x20] sm:$0xf]
        %v3369 = vld [vmem:[%s3359 + $0x24] sm:$0xf]
        %v3370 = vld [vmem:[%s3359 + $0x28] sm:$0xf]
        %v3371 = vld [vmem:[%s3359 + $0x2c] sm:$0xf]
        %v3372 = vld [vmem:[%s3359 + $0x30] sm:$0xf]
        %v3373 = vld [vmem:[%s3359 + $0x34] sm:$0xf]
        %v3374 = vld [vmem:[%s3359 + $0x38] sm:$0xf]
        %v3375 = vld [vmem:[%s3359 + $0x3c] sm:$0xf]
        %v3377 = vunpack.c.l.b16 %v3358
        %v3378 = vpack.c.b16 %v2516, %v3377
        %vm3379 = vcmask 1045504
        %v3380 = vrot.slane %v3378, 2
        %v3381 = vrot.slane %v2553, 2
        %v3382 = vsel %vm3379, %v3380, %v3381
        %v3383 = vrot.slane %v2554, 2
        %v3384 = vsel %vm3379, %v3381, %v3383
        %v3385 = vrot.slane %v2555, 2
        %v3386 = vsel %vm3379, %v3383, %v3385
        %v3387 = vrot.slane %v2556, 2
        %v3388 = vsel %vm3379, %v3385, %v3387
        %v3389 = vrot.slane %v2557, 2
        %v3390 = vsel %vm3379, %v3387, %v3389
        %v3391 = vrot.slane %v2558, 2
        %v3392 = vsel %vm3379, %v3389, %v3391
        %v3393 = vrot.slane %v2559, 2
        %v3394 = vsel %vm3379, %v3391, %v3393
        %v3395 = vrot.slane %v2560, 2
        %v3396 = vsel %vm3379, %v3393, %v3395
        %v3397 = vrot.slane %v2561, 2
        %v3398 = vsel %vm3379, %v3395, %v3397
        %v3399 = vrot.slane %v2562, 2
        %v3400 = vsel %vm3379, %v3397, %v3399
        %v3401 = vrot.slane %v2563, 2
        %v3402 = vsel %vm3379, %v3399, %v3401
        %v3403 = vrot.slane %v2564, 2
        %v3404 = vsel %vm3379, %v3401, %v3403
        %v3405 = vrot.slane %v2565, 2
        %v3406 = vsel %vm3379, %v3403, %v3405
        %v3407 = vrot.slane %v2566, 2
        %v3408 = vsel %vm3379, %v3405, %v3407
        %v3409 = vrot.slane %v2567, 2
        %v3410 = vsel %vm3379, %v3407, %v3409
        %v3411 = vrot.slane %v2568, 2
        %v3412 = vsel %vm3379, %v3409, %v3411
        %v3413 = vrot.slane %v2569, 2
        %v3414 = vsel %vm3379, %v3411, %v3413
        %v3415 = vrot.slane %v2907, 2
        %v3416 = vsel %vm3379, %v3413, %v3415
        %v3451 = vunpack.c.l.b16 %v3360
        %v3452 = vunpack.c.l.b16 %v3361
        %v3453 = vunpack.c.l.b16 %v3362
        %v3454 = vunpack.c.l.b16 %v3363
        %v3455 = vunpack.c.l.b16 %v3364
        %v3456 = vunpack.c.l.b16 %v3365
        %v3457 = vunpack.c.l.b16 %v3366
        %v3458 = vunpack.c.l.b16 %v3367
        %v3459 = vunpack.c.l.b16 %v3368
        %v3460 = vunpack.c.l.b16 %v3369
        %v3461 = vunpack.c.l.b16 %v3370
        %v3462 = vunpack.c.l.b16 %v3371
        %v3463 = vunpack.c.l.b16 %v3372
        %v3464 = vunpack.c.l.b16 %v3373
        %v3465 = vunpack.c.l.b16 %v3374
        %v3466 = vunpack.c.l.b16 %v3375
        %v3467 = vpack.c.b16 %v3452, %v3451
        %v3468 = vpack.c.b16 %v3454, %v3453
        %v3469 = vpack.c.b16 %v3456, %v3455
        %v3470 = vpack.c.b16 %v3458, %v3457
        %v3471 = vpack.c.b16 %v3460, %v3459
        %v3472 = vpack.c.b16 %v3462, %v3461
        %v3473 = vpack.c.b16 %v3464, %v3463
        %v3474 = vpack.c.b16 %v3466, %v3465
        %3483 = vmatprep.subr.bf16.mxu0 0
        %3484 = vmatpush1.bf16.msra.mxu0 %v3467
        %3485 = vmatprep.subr.bf16.mxu0 0
        %3486 = vmatpush1.bf16.msra.mxu0 %v3468
        %3487 = vmatprep.subr.bf16.mxu0 0
        %3488 = vmatpush1.bf16.msra.mxu0 %v3469
        %3489 = vmatprep.subr.bf16.mxu0 0
        %3490 = vmatpush1.bf16.msra.mxu0 %v3470
        %3491 = vmatprep.subr.bf16.mxu0 0
        %3492 = vmatpush1.bf16.msra.mxu0 %v3471
        %3493 = vmatprep.subr.bf16.mxu0 0
        %3494 = vmatpush1.bf16.msra.mxu0 %v3472
        %3495 = vmatprep.subr.bf16.mxu0 0
        %3496 = vmatpush1.bf16.msra.mxu0 %v3473
        %3497 = vmatprep.subr.bf16.mxu0 0
        %3498 = vmatpush1.bf16.msra.mxu0 %v3474
        %3499 = vmatprep.subr.bf16.mxu0 0
        %3500 = vmatpush1.bf16.msra.mxu0 0
        %3501 = vmatprep.subr.bf16.mxu0 0
        %3502 = vmatpush1.bf16.msra.mxu0 0
        %3503 = vmatprep.subr.bf16.mxu0 0
        %3504 = vmatpush1.bf16.msra.mxu0 0
        %3505 = vmatprep.subr.bf16.mxu0 0
        %3506 = vmatpush1.bf16.msra.mxu0 0
        %3507 = vmatprep.subr.bf16.mxu0 0
        %3508 = vmatpush1.bf16.msra.mxu0 0
        %3509 = vmatprep.subr.bf16.mxu0 0
        %3510 = vmatpush1.bf16.msra.mxu0 0
        %3511 = vmatprep.subr.bf16.mxu0 0
        %3512 = vmatpush1.bf16.msra.mxu0 0
        %3513 = vmatprep.subr.bf16.mxu0 0
        %3514 = vmatpush1.bf16.msra.mxu0 0
        %3515 = vmatprep.mubr.bf16.mxu0 0
        %3516 = vmatmul.mubr.bf16.gmra.mrb[0].mxu0 %v3382
        %v3517 = vpop.f32.mrb[0].mxu0
        %v3518 = vadd.f32 0.0, %v3517
        %v3519 = vpop.f32.mrb[0].mxu0
        %v3520 = vpop.f32.mrb[0].mxu0
        %v3521 = vadd.f32 0.0, %v3520
        %v3522 = vpop.f32.mrb[0].mxu0
        %3523 = vmatprep.mubr.bf16.mxu0 0
        %3524 = vmatmul.mubr.bf16.gmra.mrb[0].mxu0 %v3384
        %v3525 = vpop.f32.mrb[0].mxu0
        %v3526 = vadd.f32 0.0, %v3525
        %v3527 = vpop.f32.mrb[0].mxu0
        %v3528 = vpop.f32.mrb[0].mxu0
        %v3529 = vadd.f32 0.0, %v3528
        %v3530 = vpop.f32.mrb[0].mxu0
        %3531 = vmatprep.mubr.bf16.mxu0 0
        %3532 = vmatmul.mubr.bf16.gmra.mrb[0].mxu0 %v3386
        %v3533 = vpop.f32.mrb[0].mxu0
        %v3534 = vadd.f32 0.0, %v3533
        %v3535 = vpop.f32.mrb[0].mxu0
        %v3536 = vpop.f32.mrb[0].mxu0
        %v3537 = vadd.f32 0.0, %v3536
        %v3538 = vpop.f32.mrb[0].mxu0
        %3539 = vmatprep.mubr.bf16.mxu0 0
        %3540 = vmatmul.mubr.bf16.gmra.mrb[0].mxu0 %v3388
        %v3541 = vpop.f32.mrb[0].mxu0
        %v3542 = vadd.f32 0.0, %v3541
        %v3543 = vpop.f32.mrb[0].mxu0
        %v3544 = vpop.f32.mrb[0].mxu0
        %v3545 = vadd.f32 0.0, %v3544
        %v3546 = vpop.f32.mrb[0].mxu0
        %3547 = vmatprep.mubr.bf16.mxu0 0
        %3548 = vmatmul.mubr.bf16.gmra.mrb[0].mxu0 %v3390
        %v3549 = vpop.f32.mrb[0].mxu0
        %v3550 = vadd.f32 0.0, %v3549
        %v3551 = vpop.f32.mrb[0].mxu0
        %v3552 = vpop.f32.mrb[0].mxu0
        %v3553 = vadd.f32 0.0, %v3552
        %v3554 = vpop.f32.mrb[0].mxu0
        %3555 = vmatprep.mubr.bf16.mxu0 0
        %3556 = vmatmul.mubr.bf16.gmra.mrb[0].mxu0 %v3392
        %v3557 = vpop.f32.mrb[0].mxu0
        %v3558 = vadd.f32 0.0, %v3557
        %v3559 = vpop.f32.mrb[0].mxu0
        %v3560 = vpop.f32.mrb[0].mxu0
        %v3561 = vadd.f32 0.0, %v3560
        %v3562 = vpop.f32.mrb[0].mxu0
        %3563 = vmatprep.mubr.bf16.mxu0 0
        %3564 = vmatmul.mubr.bf16.gmra.mrb[0].mxu0 %v3394
        %v3565 = vpop.f32.mrb[0].mxu0
        %v3566 = vadd.f32 0.0, %v3565
        %v3567 = vpop.f32.mrb[0].mxu0
        %v3568 = vpop.f32.mrb[0].mxu0
        %v3569 = vadd.f32 0.0, %v3568
        %v3570 = vpop.f32.mrb[0].mxu0
        %3571 = vmatprep.mubr.bf16.mxu0 0
        %3572 = vmatmul.mubr.bf16.gmra.mrb[0].mxu0 %v3396
        %v3573 = vpop.f32.mrb[0].mxu0
        %v3574 = vadd.f32 0.0, %v3573
        %v3575 = vpop.f32.mrb[0].mxu0
        %v3576 = vpop.f32.mrb[0].mxu0
        %v3577 = vadd.f32 0.0, %v3576
        %v3578 = vpop.f32.mrb[0].mxu0
        %3579 = vmatprep.mubr.bf16.mxu0 0
        %3580 = vmatmul.mubr.bf16.gmra.mrb[0].mxu0 %v3398
        %v3581 = vpop.f32.mrb[0].mxu0
        %v3582 = vadd.f32 0.0, %v3581
        %v3583 = vpop.f32.mrb[0].mxu0
        %v3584 = vpop.f32.mrb[0].mxu0
        %v3585 = vadd.f32 0.0, %v3584
        %v3586 = vpop.f32.mrb[0].mxu0
        %3587 = vmatprep.mubr.bf16.mxu0 0
        %3588 = vmatmul.mubr.bf16.gmra.mrb[0].mxu0 %v3400
        %v3589 = vpop.f32.mrb[0].mxu0
        %v3590 = vadd.f32 0.0, %v3589
        %v3591 = vpop.f32.mrb[0].mxu0
        %v3592 = vpop.f32.mrb[0].mxu0
        %v3593 = vadd.f32 0.0, %v3592
        %v3594 = vpop.f32.mrb[0].mxu0
        %3595 = vmatprep.mubr.bf16.mxu0 0
        %3596 = vmatmul.mubr.bf16.gmra.mrb[0].mxu0 %v3402
        %v3597 = vpop.f32.mrb[0].mxu0
        %v3598 = vadd.f32 0.0, %v3597
        %v3599 = vpop.f32.mrb[0].mxu0
        %v3600 = vpop.f32.mrb[0].mxu0
        %v3601 = vadd.f32 0.0, %v3600
        %v3602 = vpop.f32.mrb[0].mxu0
        %3603 = vmatprep.mubr.bf16.mxu0 0
        %3604 = vmatmul.mubr.bf16.gmra.mrb[0].mxu0 %v3404
        %v3605 = vpop.f32.mrb[0].mxu0
        %v3606 = vadd.f32 0.0, %v3605
        %v3607 = vpop.f32.mrb[0].mxu0
        %v3608 = vpop.f32.mrb[0].mxu0
        %v3609 = vadd.f32 0.0, %v3608
        %v3610 = vpop.f32.mrb[0].mxu0
        %3611 = vmatprep.mubr.bf16.mxu0 0
        %3612 = vmatmul.mubr.bf16.gmra.mrb[0].mxu0 %v3406
        %v3613 = vpop.f32.mrb[0].mxu0
        %v3614 = vadd.f32 0.0, %v3613
        %v3615 = vpop.f32.mrb[0].mxu0
        %v3616 = vpop.f32.mrb[0].mxu0
        %v3617 = vadd.f32 0.0, %v3616
        %v3618 = vpop.f32.mrb[0].mxu0
        %3619 = vmatprep.mubr.bf16.mxu0 0
        %3620 = vmatmul.mubr.bf16.gmra.mrb[0].mxu0 %v3408
        %v3621 = vpop.f32.mrb[0].mxu0
        %v3622 = vadd.f32 0.0, %v3621
        %v3623 = vpop.f32.mrb[0].mxu0
        %v3624 = vpop.f32.mrb[0].mxu0
        %v3625 = vadd.f32 0.0, %v3624
        %v3626 = vpop.f32.mrb[0].mxu0
        %3627 = vmatprep.mubr.bf16.mxu0 0
        %3628 = vmatmul.mubr.bf16.gmra.mrb[0].mxu0 %v3410
        %v3629 = vpop.f32.mrb[0].mxu0
        %v3630 = vadd.f32 0.0, %v3629
        %v3631 = vpop.f32.mrb[0].mxu0
        %v3632 = vpop.f32.mrb[0].mxu0
        %v3633 = vadd.f32 0.0, %v3632
        %v3634 = vpop.f32.mrb[0].mxu0
        %3635 = vmatprep.mubr.bf16.mxu0 0
        %3636 = vmatmul.mubr.bf16.gmra.mrb[0].mxu0 %v3412
        %v3637 = vpop.f32.mrb[0].mxu0
        %v3638 = vadd.f32 0.0, %v3637
        %v3639 = vpop.f32.mrb[0].mxu0
        %v3640 = vpop.f32.mrb[0].mxu0
        %v3641 = vadd.f32 0.0, %v3640
        %v3642 = vpop.f32.mrb[0].mxu0
        %3643 = vmatprep.mubr.bf16.mxu0 0
        %3644 = vmatmul.mubr.bf16.gmra.mrb[0].mxu0 %v3414
        %v3645 = vpop.f32.mrb[0].mxu0
        %v3646 = vadd.f32 0.0, %v3645
        %v3647 = vpop.f32.mrb[0].mxu0
        %v3648 = vpop.f32.mrb[0].mxu0
        %v3649 = vadd.f32 0.0, %v3648
        %v3650 = vpop.f32.mrb[0].mxu0
        %3651 = vmatprep.mubr.bf16.mxu0 0
        %3652 = vmatmul.mubr.bf16.gmra.mrb[0].mxu0 %v3416
        %v3653 = vpop.f32.mrb[0].mxu0
        %v3654 = vadd.f32 0.0, %v3653
        %v3655 = vpop.f32.mrb[0].mxu0
        %v3656 = vpop.f32.mrb[0].mxu0
        %v3657 = vadd.f32 0.0, %v3656
        %v3658 = vpop.f32.mrb[0].mxu0
        %3659 = vdwg.mxu0
        %v3660 = vadd.f32 %v3322, %v3518
        %v3661 = vadd.f32 %v3323, %v3521
        %v3662 = vadd.f32 %v3324, %v3526
        %v3663 = vadd.f32 %v3325, %v3529
        %v3664 = vadd.f32 %v3326, %v3534
        %v3665 = vadd.f32 %v3327, %v3537
        %v3666 = vadd.f32 %v3328, %v3542
        %v3667 = vadd.f32 %v3329, %v3545
        %v3668 = vadd.f32 %v3330, %v3550
        %v3669 = vadd.f32 %v3331, %v3553
        %v3670 = vadd.f32 %v3332, %v3558
        %v3671 = vadd.f32 %v3333, %v3561
        %v3672 = vadd.f32 %v3334, %v3566
        %v3673 = vadd.f32 %v3335, %v3569
        %v3674 = vadd.f32 %v3336, %v3574
        %v3675 = vadd.f32 %v3337, %v3577
        %v3676 = vadd.f32 %v3338, %v3582
        %v3677 = vadd.f32 %v3339, %v3585
        %v3678 = vadd.f32 %v3340, %v3590
        %v3679 = vadd.f32 %v3341, %v3593
        %v3680 = vadd.f32 %v3342, %v3598
        %v3681 = vadd.f32 %v3343, %v3601
        %v3682 = vadd.f32 %v3344, %v3606
        %v3683 = vadd.f32 %v3345, %v3609
        %v3684 = vadd.f32 %v3346, %v3614
        %v3685 = vadd.f32 %v3347, %v3617
        %v3686 = vadd.f32 %v3348, %v3622
        %v3687 = vadd.f32 %v3349, %v3625
        %v3688 = vadd.f32 %v3350, %v3630
        %v3689 = vadd.f32 %v3351, %v3633
        %v3690 = vadd.f32 %v3352, %v3638
        %v3691 = vadd.f32 %v3353, %v3641
        %v3692 = vadd.f32 %v3354, %v3646
        %v3693 = vadd.f32 %v3355, %v3649
        %v3694 = vadd.f32 %v3356, %v3654
        %v3695 = vadd.f32 %v3357, %v3657
        %v3696 = vld [vmem:[#allocation2 + $0x10] sm:$0xc]
        %v3697 = vld [vmem:[#allocation2 + $0x14] sm:$0xf]
        %v3698 = vld [vmem:[#allocation2 + $0x18] sm:$0xf]
        %v3699 = vld [vmem:[#allocation2 + $0x1c] sm:$0xf]
        %v3700 = vld [vmem:[#allocation2 + $0x20] sm:$0xf]
        %v3701 = vld [vmem:[#allocation2 + $0x24] sm:$0xf]
        %v3702 = vld [vmem:[#allocation2 + $0x28] sm:$0xf]
        %v3703 = vld [vmem:[#allocation2 + $0x2c] sm:$0xf]
        %v3704 = vld [vmem:[#allocation2 + $0x30] sm:$0xf]
        %v3705 = vld [vmem:[#allocation2 + $0x34] sm:$0xf]
        %v3706 = vld [vmem:[#allocation2 + $0x38] sm:$0xf]
        %v3707 = vld [vmem:[#allocation2 + $0x3c] sm:$0xf]
        %v3708 = vld [vmem:[#allocation2 + $0x40] sm:$0xf]
        %v3709 = vld [vmem:[#allocation2 + $0x44] sm:$0xf]
        %v3710 = vld [vmem:[#allocation2 + $0x48] sm:$0xf]
        %v3711 = vld [vmem:[#allocation2 + $0x4c] sm:$0xf]
        %v3712 = vld [vmem:[#allocation2 + $0x50] sm:$0xf]
        %v3713 = vld [vmem:[#allocation2 + $0x54] sm:$0xf]
        %v3714 = vld [vmem:[#allocation2 + $0x58] sm:$0xf]
        %v3715 = vld [vmem:[#allocation2 + $0x5c] sm:$0xf]
        %v3716 = vld [vmem:[#allocation2 + $0x60] sm:$0xf]
        %v3717 = vld [vmem:[#allocation2 + $0x64] sm:$0xf]
        %v3718 = vld [vmem:[#allocation2 + $0x68] sm:$0xf]
        %v3719 = vld [vmem:[#allocation2 + $0x6c] sm:$0xf]
        %v3720 = vld [vmem:[#allocation2 + $0x70] sm:$0xf]
        %v3721 = vld [vmem:[#allocation2 + $0x74] sm:$0xf]
        %v3722 = vld [vmem:[#allocation2 + $0x78] sm:$0xf]
        %v3723 = vld [vmem:[#allocation2 + $0x7c] sm:$0xf]
        %v3724 = vld [vmem:[#allocation2 + $0x80] sm:$0xf]
        %v3725 = vld [vmem:[#allocation2 + $0x84] sm:$0xf]
        %v3726 = vld [vmem:[#allocation2 + $0x88] sm:$0xf]
        %v3727 = vld [vmem:[#allocation2 + $0x8c] sm:$0xf]
        %v3728 = vld [vmem:[#allocation2 + $0x90] sm:$0xf]
        %v3729 = vld [vmem:[#allocation2 + $0x94] sm:$0xf]
        %v3730 = vld [vmem:[#allocation2 + $0x98] sm:$0xf]
        %v3731 = vld [vmem:[#allocation2 + $0x9c] sm:$0xf]
        %v3732 = vld [vmem:[#allocation2 + $0xa0] sm:$0x3]
        %s3733 = scalar_lea.vmem [#allocation3], 384
        %v3734 = vld [vmem:[%s3733] sm:$0xf]
        %v3735 = vld [vmem:[%s3733 + $0x4] sm:$0xf]
        %v3736 = vld [vmem:[%s3733 + $0x8] sm:$0xf]
        %v3737 = vld [vmem:[%s3733 + $0xc] sm:$0xf]
        %v3738 = vld [vmem:[%s3733 + $0x10] sm:$0xf]
        %v3739 = vld [vmem:[%s3733 + $0x14] sm:$0xf]
        %v3740 = vld [vmem:[%s3733 + $0x18] sm:$0xf]
        %v3741 = vld [vmem:[%s3733 + $0x1c] sm:$0xf]
        %v3742 = vld [vmem:[%s3733 + $0x20] sm:$0xf]
        %v3743 = vld [vmem:[%s3733 + $0x24] sm:$0xf]
        %v3744 = vld [vmem:[%s3733 + $0x28] sm:$0xf]
        %v3745 = vld [vmem:[%s3733 + $0x2c] sm:$0xf]
        %v3746 = vld [vmem:[%s3733 + $0x30] sm:$0xf]
        %v3747 = vld [vmem:[%s3733 + $0x34] sm:$0xf]
        %v3748 = vld [vmem:[%s3733 + $0x38] sm:$0xf]
        %v3749 = vld [vmem:[%s3733 + $0x3c] sm:$0xf]
        %v3787 = vunpack.c.l.b16 %v3696
        %v3788 = vunpack.c.l.b16 %v3697
        %v3789 = vunpack.c.l.b16 %v3698
        %v3790 = vunpack.c.l.b16 %v3699
        %v3791 = vunpack.c.l.b16 %v3700
        %v3792 = vunpack.c.l.b16 %v3701
        %v3793 = vunpack.c.l.b16 %v3702
        %v3794 = vunpack.c.l.b16 %v3703
        %v3795 = vunpack.c.l.b16 %v3704
        %v3796 = vunpack.c.l.b16 %v3705
        %v3797 = vunpack.c.l.b16 %v3706
        %v3798 = vunpack.c.l.b16 %v3707
        %v3799 = vunpack.c.l.b16 %v3708
        %v3800 = vunpack.c.l.b16 %v3709
        %v3801 = vunpack.c.l.b16 %v3710
        %v3802 = vunpack.c.l.b16 %v3711
        %v3803 = vunpack.c.l.b16 %v3712
        %v3804 = vunpack.c.l.b16 %v3713
        %v3805 = vunpack.c.l.b16 %v3714
        %v3806 = vunpack.c.l.b16 %v3715
        %v3807 = vunpack.c.l.b16 %v3716
        %v3808 = vunpack.c.l.b16 %v3717
        %v3809 = vunpack.c.l.b16 %v3718
        %v3810 = vunpack.c.l.b16 %v3719
        %v3811 = vunpack.c.l.b16 %v3720
        %v3812 = vunpack.c.l.b16 %v3721
        %v3813 = vunpack.c.l.b16 %v3722
        %v3814 = vunpack.c.l.b16 %v3723
        %v3815 = vunpack.c.l.b16 %v3724
        %v3816 = vunpack.c.l.b16 %v3725
        %v3817 = vunpack.c.l.b16 %v3726
        %v3818 = vunpack.c.l.b16 %v3727
        %v3819 = vunpack.c.l.b16 %v3728
        %v3820 = vunpack.c.l.b16 %v3729
        %v3821 = vunpack.c.l.b16 %v3730
        %v3822 = vunpack.c.l.b16 %v3731
        %v3823 = vunpack.c.l.b16 %v3732
        %v3824 = vpack.c.b16 %v3788, %v3787
        %v3825 = vpack.c.b16 %v3790, %v3789
        %v3826 = vpack.c.b16 %v3792, %v3791
        %v3827 = vpack.c.b16 %v3794, %v3793
        %v3828 = vpack.c.b16 %v3796, %v3795
        %v3829 = vpack.c.b16 %v3798, %v3797
        %v3830 = vpack.c.b16 %v3800, %v3799
        %v3831 = vpack.c.b16 %v3802, %v3801
        %v3832 = vpack.c.b16 %v3804, %v3803
        %v3833 = vpack.c.b16 %v3806, %v3805
        %v3834 = vpack.c.b16 %v3808, %v3807
        %v3835 = vpack.c.b16 %v3810, %v3809
        %v3836 = vpack.c.b16 %v3812, %v3811
        %v3837 = vpack.c.b16 %v3814, %v3813
        %v3838 = vpack.c.b16 %v3816, %v3815
        %v3839 = vpack.c.b16 %v3818, %v3817
        %v3840 = vpack.c.b16 %v3820, %v3819
        %v3841 = vpack.c.b16 %v3822, %v3821
        %v3842 = vpack.c.b16 %v3823, %v3823
        %v3843 = vrot.slane %v3824, 2
        %v3844 = vrot.slane %v3825, 2
        %v3845 = vsel %vm3379, %v3843, %v3844
        %v3846 = vrot.slane %v3826, 2
        %v3847 = vsel %vm3379, %v3844, %v3846
        %v3848 = vrot.slane %v3827, 2
        %v3849 = vsel %vm3379, %v3846, %v3848
        %v3850 = vrot.slane %v3828, 2
        %v3851 = vsel %vm3379, %v3848, %v3850
        %v3852 = vrot.slane %v3829, 2
        %v3853 = vsel %vm3379, %v3850, %v3852
        %v3854 = vrot.slane %v3830, 2
        %v3855 = vsel %vm3379, %v3852, %v3854
        %v3856 = vrot.slane %v3831, 2
        %v3857 = vsel %vm3379, %v3854, %v3856
        %v3858 = vrot.slane %v3832, 2
        %v3859 = vsel %vm3379, %v3856, %v3858
        %v3860 = vrot.slane %v3833, 2
        %v3861 = vsel %vm3379, %v3858, %v3860
        %v3862 = vrot.slane %v3834, 2
        %v3863 = vsel %vm3379, %v3860, %v3862
        %v3864 = vrot.slane %v3835, 2
        %v3865 = vsel %vm3379, %v3862, %v3864
        %v3866 = vrot.slane %v3836, 2
        %v3867 = vsel %vm3379, %v3864, %v3866
        %v3868 = vrot.slane %v3837, 2
        %v3869 = vsel %vm3379, %v3866, %v3868
        %v3870 = vrot.slane %v3838, 2
        %v3871 = vsel %vm3379, %v3868, %v3870
        %v3872 = vrot.slane %v3839, 2
        %v3873 = vsel %vm3379, %v3870, %v3872
        %v3874 = vrot.slane %v3840, 2
        %v3875 = vsel %vm3379, %v3872, %v3874
        %v3876 = vrot.slane %v3841, 2
        %v3877 = vsel %vm3379, %v3874, %v3876
        %v3878 = vrot.slane %v3842, 2
        %v3879 = vsel %vm3379, %v3876, %v3878
        %v3914 = vunpack.c.l.b16 %v3734
        %v3915 = vunpack.c.l.b16 %v3735
        %v3916 = vunpack.c.l.b16 %v3736
        %v3917 = vunpack.c.l.b16 %v3737
        %v3918 = vunpack.c.l.b16 %v3738
        %v3919 = vunpack.c.l.b16 %v3739
        %v3920 = vunpack.c.l.b16 %v3740
        %v3921 = vunpack.c.l.b16 %v3741
        %v3922 = vunpack.c.l.b16 %v3742
        %v3923 = vunpack.c.l.b16 %v3743
        %v3924 = vunpack.c.l.b16 %v3744
        %v3925 = vunpack.c.l.b16 %v3745
        %v3926 = vunpack.c.l.b16 %v3746
        %v3927 = vunpack.c.l.b16 %v3747
        %v3928 = vunpack.c.l.b16 %v3748
        %v3929 = vunpack.c.l.b16 %v3749
        %v3930 = vpack.c.b16 %v3915, %v3914
        %v3931 = vpack.c.b16 %v3917, %v3916
        %v3932 = vpack.c.b16 %v3919, %v3918
        %v3933 = vpack.c.b16 %v3921, %v3920
        %v3934 = vpack.c.b16 %v3923, %v3922
        %v3935 = vpack.c.b16 %v3925, %v3924
        %v3936 = vpack.c.b16 %v3927, %v3926
        %v3937 = vpack.c.b16 %v3929, %v3928
        %3946 = vmatprep.subr.bf16.mxu0 0
        %3947 = vmatpush1.bf16.msra.mxu0 %v3930
        %3948 = vmatprep.subr.bf16.mxu0 0
        %3949 = vmatpush1.bf16.msra.mxu0 %v3931
        %3950 = vmatprep.subr.bf16.mxu0 0
        %3951 = vmatpush1.bf16.msra.mxu0 %v3932
        %3952 = vmatprep.subr.bf16.mxu0 0
        %3953 = vmatpush1.bf16.msra.mxu0 %v3933
        %3954 = vmatprep.subr.bf16.mxu0 0
        %3955 = vmatpush1.bf16.msra.mxu0 %v3934
        %3956 = vmatprep.subr.bf16.mxu0 0
        %3957 = vmatpush1.bf16.msra.mxu0 %v3935
        %3958 = vmatprep.subr.bf16.mxu0 0
        %3959 = vmatpush1.bf16.msra.mxu0 %v3936
        %3960 = vmatprep.subr.bf16.mxu0 0
        %3961 = vmatpush1.bf16.msra.mxu0 %v3937
        %3962 = vmatprep.subr.bf16.mxu0 0
        %3963 = vmatpush1.bf16.msra.mxu0 0
        %3964 = vmatprep.subr.bf16.mxu0 0
        %3965 = vmatpush1.bf16.msra.mxu0 0
        %3966 = vmatprep.subr.bf16.mxu0 0
        %3967 = vmatpush1.bf16.msra.mxu0 0
        %3968 = vmatprep.subr.bf16.mxu0 0
        %3969 = vmatpush1.bf16.msra.mxu0 0
        %3970 = vmatprep.subr.bf16.mxu0 0
        %3971 = vmatpush1.bf16.msra.mxu0 0
        %3972 = vmatprep.subr.bf16.mxu0 0
        %3973 = vmatpush1.bf16.msra.mxu0 0
        %3974 = vmatprep.subr.bf16.mxu0 0
        %3975 = vmatpush1.bf16.msra.mxu0 0
        %3976 = vmatprep.subr.bf16.mxu0 0
        %3977 = vmatpush1.bf16.msra.mxu0 0
        %3978 = vmatprep.mubr.bf16.mxu0 0
        %3979 = vmatmul.mubr.bf16.gmra.mrb[0].mxu0 %v3845
        %v3980 = vpop.f32.mrb[0].mxu0
        %v3981 = vadd.f32 0.0, %v3980
        %v3982 = vpop.f32.mrb[0].mxu0
        %v3983 = vpop.f32.mrb[0].mxu0
        %v3984 = vadd.f32 0.0, %v3983
        %v3985 = vpop.f32.mrb[0].mxu0
        %3986 = vmatprep.mubr.bf16.mxu0 0
        %3987 = vmatmul.mubr.bf16.gmra.mrb[0].mxu0 %v3847
        %v3988 = vpop.f32.mrb[0].mxu0
        %v3989 = vadd.f32 0.0, %v3988
        %v3990 = vpop.f32.mrb[0].mxu0
        %v3991 = vpop.f32.mrb[0].mxu0
        %v3992 = vadd.f32 0.0, %v3991
        %v3993 = vpop.f32.mrb[0].mxu0
        %3994 = vmatprep.mubr.bf16.mxu0 0
        %3995 = vmatmul.mubr.bf16.gmra.mrb[0].mxu0 %v3849
        %v3996 = vpop.f32.mrb[0].mxu0
        %v3997 = vadd.f32 0.0, %v3996
        %v3998 = vpop.f32.mrb[0].mxu0
        %v3999 = vpop.f32.mrb[0].mxu0
        %v4000 = vadd.f32 0.0, %v3999
        %v4001 = vpop.f32.mrb[0].mxu0
        %4002 = vmatprep.mubr.bf16.mxu0 0
        %4003 = vmatmul.mubr.bf16.gmra.mrb[0].mxu0 %v3851
        %v4004 = vpop.f32.mrb[0].mxu0
        %v4005 = vadd.f32 0.0, %v4004
        %v4006 = vpop.f32.mrb[0].mxu0
        %v4007 = vpop.f32.mrb[0].mxu0
        %v4008 = vadd.f32 0.0, %v4007
        %v4009 = vpop.f32.mrb[0].mxu0
        %4010 = vmatprep.mubr.bf16.mxu0 0
        %4011 = vmatmul.mubr.bf16.gmra.mrb[0].mxu0 %v3853
        %v4012 = vpop.f32.mrb[0].mxu0
        %v4013 = vadd.f32 0.0, %v4012
        %v4014 = vpop.f32.mrb[0].mxu0
        %v4015 = vpop.f32.mrb[0].mxu0
        %v4016 = vadd.f32 0.0, %v4015
        %v4017 = vpop.f32.mrb[0].mxu0
        %4018 = vmatprep.mubr.bf16.mxu0 0
        %4019 = vmatmul.mubr.bf16.gmra.mrb[0].mxu0 %v3855
        %v4020 = vpop.f32.mrb[0].mxu0
        %v4021 = vadd.f32 0.0, %v4020
        %v4022 = vpop.f32.mrb[0].mxu0
        %v4023 = vpop.f32.mrb[0].mxu0
        %v4024 = vadd.f32 0.0, %v4023
        %v4025 = vpop.f32.mrb[0].mxu0
        %4026 = vmatprep.mubr.bf16.mxu0 0
        %4027 = vmatmul.mubr.bf16.gmra.mrb[0].mxu0 %v3857
        %v4028 = vpop.f32.mrb[0].mxu0
        %v4029 = vadd.f32 0.0, %v4028
        %v4030 = vpop.f32.mrb[0].mxu0
        %v4031 = vpop.f32.mrb[0].mxu0
        %v4032 = vadd.f32 0.0, %v4031
        %v4033 = vpop.f32.mrb[0].mxu0
        %4034 = vmatprep.mubr.bf16.mxu0 0
        %4035 = vmatmul.mubr.bf16.gmra.mrb[0].mxu0 %v3859
        %v4036 = vpop.f32.mrb[0].mxu0
        %v4037 = vadd.f32 0.0, %v4036
        %v4038 = vpop.f32.mrb[0].mxu0
        %v4039 = vpop.f32.mrb[0].mxu0
        %v4040 = vadd.f32 0.0, %v4039
        %v4041 = vpop.f32.mrb[0].mxu0
        %4042 = vmatprep.mubr.bf16.mxu0 0
        %4043 = vmatmul.mubr.bf16.gmra.mrb[0].mxu0 %v3861
        %v4044 = vpop.f32.mrb[0].mxu0
        %v4045 = vadd.f32 0.0, %v4044
        %v4046 = vpop.f32.mrb[0].mxu0
        %v4047 = vpop.f32.mrb[0].mxu0
        %v4048 = vadd.f32 0.0, %v4047
        %v4049 = vpop.f32.mrb[0].mxu0
        %4050 = vmatprep.mubr.bf16.mxu0 0
        %4051 = vmatmul.mubr.bf16.gmra.mrb[0].mxu0 %v3863
        %v4052 = vpop.f32.mrb[0].mxu0
        %v4053 = vadd.f32 0.0, %v4052
        %v4054 = vpop.f32.mrb[0].mxu0
        %v4055 = vpop.f32.mrb[0].mxu0
        %v4056 = vadd.f32 0.0, %v4055
        %v4057 = vpop.f32.mrb[0].mxu0
        %4058 = vmatprep.mubr.bf16.mxu0 0
        %4059 = vmatmul.mubr.bf16.gmra.mrb[0].mxu0 %v3865
        %v4060 = vpop.f32.mrb[0].mxu0
        %v4061 = vadd.f32 0.0, %v4060
        %v4062 = vpop.f32.mrb[0].mxu0
        %v4063 = vpop.f32.mrb[0].mxu0
        %v4064 = vadd.f32 0.0, %v4063
        %v4065 = vpop.f32.mrb[0].mxu0
        %4066 = vmatprep.mubr.bf16.mxu0 0
        %4067 = vmatmul.mubr.bf16.gmra.mrb[0].mxu0 %v3867
        %v4068 = vpop.f32.mrb[0].mxu0
        %v4069 = vadd.f32 0.0, %v4068
        %v4070 = vpop.f32.mrb[0].mxu0
        %v4071 = vpop.f32.mrb[0].mxu0
        %v4072 = vadd.f32 0.0, %v4071
        %v4073 = vpop.f32.mrb[0].mxu0
        %4074 = vmatprep.mubr.bf16.mxu0 0
        %4075 = vmatmul.mubr.bf16.gmra.mrb[0].mxu0 %v3869
        %v4076 = vpop.f32.mrb[0].mxu0
        %v4077 = vadd.f32 0.0, %v4076
        %v4078 = vpop.f32.mrb[0].mxu0
        %v4079 = vpop.f32.mrb[0].mxu0
        %v4080 = vadd.f32 0.0, %v4079
        %v4081 = vpop.f32.mrb[0].mxu0
        %4082 = vmatprep.mubr.bf16.mxu0 0
        %4083 = vmatmul.mubr.bf16.gmra.mrb[0].mxu0 %v3871
        %v4084 = vpop.f32.mrb[0].mxu0
        %v4085 = vadd.f32 0.0, %v4084
        %v4086 = vpop.f32.mrb[0].mxu0
        %v4087 = vpop.f32.mrb[0].mxu0
        %v4088 = vadd.f32 0.0, %v4087
        %v4089 = vpop.f32.mrb[0].mxu0
        %4090 = vmatprep.mubr.bf16.mxu0 0
        %4091 = vmatmul.mubr.bf16.gmra.mrb[0].mxu0 %v3873
        %v4092 = vpop.f32.mrb[0].mxu0
        %v4093 = vadd.f32 0.0, %v4092
        %v4094 = vpop.f32.mrb[0].mxu0
        %v4095 = vpop.f32.mrb[0].mxu0
        %v4096 = vadd.f32 0.0, %v4095
        %v4097 = vpop.f32.mrb[0].mxu0
        %4098 = vmatprep.mubr.bf16.mxu0 0
        %4099 = vmatmul.mubr.bf16.gmra.mrb[0].mxu0 %v3875
        %v4100 = vpop.f32.mrb[0].mxu0
        %v4101 = vadd.f32 0.0, %v4100
        %v4102 = vpop.f32.mrb[0].mxu0
        %v4103 = vpop.f32.mrb[0].mxu0
        %v4104 = vadd.f32 0.0, %v4103
        %v4105 = vpop.f32.mrb[0].mxu0
        %4106 = vmatprep.mubr.bf16.mxu0 0
        %4107 = vmatmul.mubr.bf16.gmra.mrb[0].mxu0 %v3877
        %v4108 = vpop.f32.mrb[0].mxu0
        %v4109 = vadd.f32 0.0, %v4108
        %v4110 = vpop.f32.mrb[0].mxu0
        %v4111 = vpop.f32.mrb[0].mxu0
        %v4112 = vadd.f32 0.0, %v4111
        %v4113 = vpop.f32.mrb[0].mxu0
        %4114 = vmatprep.mubr.bf16.mxu0 0
        %4115 = vmatmul.mubr.bf16.gmra.mrb[0].mxu0 %v3879
        %v4116 = vpop.f32.mrb[0].mxu0
        %v4117 = vadd.f32 0.0, %v4116
        %v4118 = vpop.f32.mrb[0].mxu0
        %v4119 = vpop.f32.mrb[0].mxu0
        %v4120 = vadd.f32 0.0, %v4119
        %v4121 = vpop.f32.mrb[0].mxu0
        %4122 = vdwg.mxu0
        %v4123 = vadd.f32 %v3660, %v3981
        %v4124 = vadd.f32 %v3661, %v3984
        %v4125 = vadd.f32 %v3662, %v3989
        %v4126 = vadd.f32 %v3663, %v3992
        %v4127 = vadd.f32 %v3664, %v3997
        %v4128 = vadd.f32 %v3665, %v4000
        %v4129 = vadd.f32 %v3666, %v4005
        %v4130 = vadd.f32 %v3667, %v4008
        %v4131 = vadd.f32 %v3668, %v4013
        %v4132 = vadd.f32 %v3669, %v4016
        %v4133 = vadd.f32 %v3670, %v4021
        %v4134 = vadd.f32 %v3671, %v4024
        %v4135 = vadd.f32 %v3672, %v4029
        %v4136 = vadd.f32 %v3673, %v4032
        %v4137 = vadd.f32 %v3674, %v4037
        %v4138 = vadd.f32 %v3675, %v4040
        %v4139 = vadd.f32 %v3676, %v4045
        %v4140 = vadd.f32 %v3677, %v4048
        %v4141 = vadd.f32 %v3678, %v4053
        %v4142 = vadd.f32 %v3679, %v4056
        %v4143 = vadd.f32 %v3680, %v4061
        %v4144 = vadd.f32 %v3681, %v4064
        %v4145 = vadd.f32 %v3682, %v4069
        %v4146 = vadd.f32 %v3683, %v4072
        %v4147 = vadd.f32 %v3684, %v4077
        %v4148 = vadd.f32 %v3685, %v4080
        %v4149 = vadd.f32 %v3686, %v4085
        %v4150 = vadd.f32 %v3687, %v4088
        %v4151 = vadd.f32 %v3688, %v4093
        %v4152 = vadd.f32 %v3689, %v4096
        %v4153 = vadd.f32 %v3690, %v4101
        %v4154 = vadd.f32 %v3691, %v4104
        %v4155 = vadd.f32 %v3692, %v4109
        %v4156 = vadd.f32 %v3693, %v4112
        %v4157 = vadd.f32 %v3694, %v4117
        %v4158 = vadd.f32 %v3695, %v4120
        %v4159 = vld [vmem:[#allocation2 + $0xa0] sm:$0x7]
        %s4160 = scalar_lea.vmem [#allocation3], 448
        %v4161 = vld [vmem:[%s4160] sm:$0xf]
        %v4162 = vld [vmem:[%s4160 + $0x4] sm:$0xf]
        %v4163 = vld [vmem:[%s4160 + $0x8] sm:$0xf]
        %v4164 = vld [vmem:[%s4160 + $0xc] sm:$0xf]
        %v4165 = vld [vmem:[%s4160 + $0x10] sm:$0xf]
        %v4166 = vld [vmem:[%s4160 + $0x14] sm:$0xf]
        %v4167 = vld [vmem:[%s4160 + $0x18] sm:$0xf]
        %v4168 = vld [vmem:[%s4160 + $0x1c] sm:$0xf]
        %v4169 = vld [vmem:[%s4160 + $0x20] sm:$0xf]
        %v4170 = vld [vmem:[%s4160 + $0x24] sm:$0xf]
        %v4171 = vld [vmem:[%s4160 + $0x28] sm:$0xf]
        %v4172 = vld [vmem:[%s4160 + $0x2c] sm:$0xf]
        %v4173 = vld [vmem:[%s4160 + $0x30] sm:$0xf]
        %v4174 = vld [vmem:[%s4160 + $0x34] sm:$0xf]
        %v4175 = vld [vmem:[%s4160 + $0x38] sm:$0xf]
        %v4176 = vld [vmem:[%s4160 + $0x3c] sm:$0xf]
        %v4178 = vunpack.c.l.b16 %v4159
        %v4179 = vpack.c.b16 %v4178, %v4178
        %vm4180 = vsmask.f32 5376
        %v4182 = vshrl.u32 %v3824, 16
        %v4184 = vrot.slane %v4182, 2
        %v4185 = vshll.u32 %v3824, 16
        %v4187 = vrot.slane %v4185, 3
        %v4188 = vor.u32 %v4184, %v4187
        %v4190 = vshrl.u32 %v3825, 16
        %v4192 = vrot.slane %v4190, 2
        %v4193 = vshll.u32 %v3825, 16
        %v4195 = vrot.slane %v4193, 3
        %v4196 = vor.u32 %v4192, %v4195
        %v4197 = vsel %vm4180, %v4188, %v4196
        %v4199 = vshrl.u32 %v3826, 16
        %v4201 = vrot.slane %v4199, 2
        %v4202 = vshll.u32 %v3826, 16
        %v4204 = vrot.slane %v4202, 3
        %v4205 = vor.u32 %v4201, %v4204
        %v4206 = vsel %vm4180, %v4196, %v4205
        %v4208 = vshrl.u32 %v3827, 16
        %v4210 = vrot.slane %v4208, 2
        %v4211 = vshll.u32 %v3827, 16
        %v4213 = vrot.slane %v4211, 3
        %v4214 = vor.u32 %v4210, %v4213
        %v4215 = vsel %vm4180, %v4205, %v4214
        %v4217 = vshrl.u32 %v3828, 16
        %v4219 = vrot.slane %v4217, 2
        %v4220 = vshll.u32 %v3828, 16
        %v4222 = vrot.slane %v4220, 3
        %v4223 = vor.u32 %v4219, %v4222
        %v4224 = vsel %vm4180, %v4214, %v4223
        %v4226 = vshrl.u32 %v3829, 16
        %v4228 = vrot.slane %v4226, 2
        %v4229 = vshll.u32 %v3829, 16
        %v4231 = vrot.slane %v4229, 3
        %v4232 = vor.u32 %v4228, %v4231
        %v4233 = vsel %vm4180, %v4223, %v4232
        %v4235 = vshrl.u32 %v3830, 16
        %v4237 = vrot.slane %v4235, 2
        %v4238 = vshll.u32 %v3830, 16
        %v4240 = vrot.slane %v4238, 3
        %v4241 = vor.u32 %v4237, %v4240
        %v4242 = vsel %vm4180, %v4232, %v4241
        %v4244 = vshrl.u32 %v3831, 16
        %v4246 = vrot.slane %v4244, 2
        %v4247 = vshll.u32 %v3831, 16
        %v4249 = vrot.slane %v4247, 3
        %v4250 = vor.u32 %v4246, %v4249
        %v4251 = vsel %vm4180, %v4241, %v4250
        %v4253 = vshrl.u32 %v3832, 16
        %v4255 = vrot.slane %v4253, 2
        %v4256 = vshll.u32 %v3832, 16
        %v4258 = vrot.slane %v4256, 3
        %v4259 = vor.u32 %v4255, %v4258
        %v4260 = vsel %vm4180, %v4250, %v4259
        %v4262 = vshrl.u32 %v3833, 16
        %v4264 = vrot.slane %v4262, 2
        %v4265 = vshll.u32 %v3833, 16
        %v4267 = vrot.slane %v4265, 3
        %v4268 = vor.u32 %v4264, %v4267
        %v4269 = vsel %vm4180, %v4259, %v4268
        %v4271 = vshrl.u32 %v3834, 16
        %v4273 = vrot.slane %v4271, 2
        %v4274 = vshll.u32 %v3834, 16
        %v4276 = vrot.slane %v4274, 3
        %v4277 = vor.u32 %v4273, %v4276
        %v4278 = vsel %vm4180, %v4268, %v4277
        %v4280 = vshrl.u32 %v3835, 16
        %v4282 = vrot.slane %v4280, 2
        %v4283 = vshll.u32 %v3835, 16
        %v4285 = vrot.slane %v4283, 3
        %v4286 = vor.u32 %v4282, %v4285
        %v4287 = vsel %vm4180, %v4277, %v4286
        %v4289 = vshrl.u32 %v3836, 16
        %v4291 = vrot.slane %v4289, 2
        %v4292 = vshll.u32 %v3836, 16
        %v4294 = vrot.slane %v4292, 3
        %v4295 = vor.u32 %v4291, %v4294
        %v4296 = vsel %vm4180, %v4286, %v4295
        %v4298 = vshrl.u32 %v3837, 16
        %v4300 = vrot.slane %v4298, 2
        %v4301 = vshll.u32 %v3837, 16
        %v4303 = vrot.slane %v4301, 3
        %v4304 = vor.u32 %v4300, %v4303
        %v4305 = vsel %vm4180, %v4295, %v4304
        %v4307 = vshrl.u32 %v3838, 16
        %v4309 = vrot.slane %v4307, 2
        %v4310 = vshll.u32 %v3838, 16
        %v4312 = vrot.slane %v4310, 3
        %v4313 = vor.u32 %v4309, %v4312
        %v4314 = vsel %vm4180, %v4304, %v4313
        %v4316 = vshrl.u32 %v3839, 16
        %v4318 = vrot.slane %v4316, 2
        %v4319 = vshll.u32 %v3839, 16
        %v4321 = vrot.slane %v4319, 3
        %v4322 = vor.u32 %v4318, %v4321
        %v4323 = vsel %vm4180, %v4313, %v4322
        %v4325 = vshrl.u32 %v3840, 16
        %v4327 = vrot.slane %v4325, 2
        %v4328 = vshll.u32 %v3840, 16
        %v4330 = vrot.slane %v4328, 3
        %v4331 = vor.u32 %v4327, %v4330
        %v4332 = vsel %vm4180, %v4322, %v4331
        %v4334 = vshrl.u32 %v3841, 16
        %v4336 = vrot.slane %v4334, 2
        %v4337 = vshll.u32 %v3841, 16
        %v4339 = vrot.slane %v4337, 3
        %v4340 = vor.u32 %v4336, %v4339
        %v4341 = vsel %vm4180, %v4331, %v4340
        %v4343 = vshrl.u32 %v4179, 16
        %v4345 = vrot.slane %v4343, 2
        %v4346 = vshll.u32 %v4179, 16
        %v4348 = vrot.slane %v4346, 3
        %v4349 = vor.u32 %v4345, %v4348
        %v4350 = vsel %vm4180, %v4340, %v4349
        %v4385 = vunpack.c.l.b16 %v4161
        %v4386 = vunpack.c.l.b16 %v4162
        %v4387 = vunpack.c.l.b16 %v4163
        %v4388 = vunpack.c.l.b16 %v4164
        %v4389 = vunpack.c.l.b16 %v4165
        %v4390 = vunpack.c.l.b16 %v4166
        %v4391 = vunpack.c.l.b16 %v4167
        %v4392 = vunpack.c.l.b16 %v4168
        %v4393 = vunpack.c.l.b16 %v4169
        %v4394 = vunpack.c.l.b16 %v4170
        %v4395 = vunpack.c.l.b16 %v4171
        %v4396 = vunpack.c.l.b16 %v4172
        %v4397 = vunpack.c.l.b16 %v4173
        %v4398 = vunpack.c.l.b16 %v4174
        %v4399 = vunpack.c.l.b16 %v4175
        %v4400 = vunpack.c.l.b16 %v4176
        %v4401 = vpack.c.b16 %v4386, %v4385
        %v4402 = vpack.c.b16 %v4388, %v4387
        %v4403 = vpack.c.b16 %v4390, %v4389
        %v4404 = vpack.c.b16 %v4392, %v4391
        %v4405 = vpack.c.b16 %v4394, %v4393
        %v4406 = vpack.c.b16 %v4396, %v4395
        %v4407 = vpack.c.b16 %v4398, %v4397
        %v4408 = vpack.c.b16 %v4400, %v4399
        %4417 = vmatprep.subr.bf16.mxu0 0
        %4418 = vmatpush1.bf16.msra.mxu0 %v4401
        %4419 = vmatprep.subr.bf16.mxu0 0
        %4420 = vmatpush1.bf16.msra.mxu0 %v4402
        %4421 = vmatprep.subr.bf16.mxu0 0
        %4422 = vmatpush1.bf16.msra.mxu0 %v4403
        %4423 = vmatprep.subr.bf16.mxu0 0
        %4424 = vmatpush1.bf16.msra.mxu0 %v4404
        %4425 = vmatprep.subr.bf16.mxu0 0
        %4426 = vmatpush1.bf16.msra.mxu0 %v4405
        %4427 = vmatprep.subr.bf16.mxu0 0
        %4428 = vmatpush1.bf16.msra.mxu0 %v4406
        %4429 = vmatprep.subr.bf16.mxu0 0
        %4430 = vmatpush1.bf16.msra.mxu0 %v4407
        %4431 = vmatprep.subr.bf16.mxu0 0
        %4432 = vmatpush1.bf16.msra.mxu0 %v4408
        %4433 = vmatprep.subr.bf16.mxu0 0
        %4434 = vmatpush1.bf16.msra.mxu0 0
        %4435 = vmatprep.subr.bf16.mxu0 0
        %4436 = vmatpush1.bf16.msra.mxu0 0
        %4437 = vmatprep.subr.bf16.mxu0 0
        %4438 = vmatpush1.bf16.msra.mxu0 0
        %4439 = vmatprep.subr.bf16.mxu0 0
        %4440 = vmatpush1.bf16.msra.mxu0 0
        %4441 = vmatprep.subr.bf16.mxu0 0
        %4442 = vmatpush1.bf16.msra.mxu0 0
        %4443 = vmatprep.subr.bf16.mxu0 0
        %4444 = vmatpush1.bf16.msra.mxu0 0
        %4445 = vmatprep.subr.bf16.mxu0 0
        %4446 = vmatpush1.bf16.msra.mxu0 0
        %4447 = vmatprep.subr.bf16.mxu0 0
        %4448 = vmatpush1.bf16.msra.mxu0 0
        %4449 = vmatprep.mubr.bf16.mxu0 0
        %4450 = vmatmul.mubr.bf16.gmra.mrb[0].mxu0 %v4197
        %v4451 = vpop.f32.mrb[0].mxu0
        %v4452 = vadd.f32 0.0, %v4451
        %v4453 = vpop.f32.mrb[0].mxu0
        %v4454 = vpop.f32.mrb[0].mxu0
        %v4455 = vadd.f32 0.0, %v4454
        %v4456 = vpop.f32.mrb[0].mxu0
        %4457 = vmatprep.mubr.bf16.mxu0 0
        %4458 = vmatmul.mubr.bf16.gmra.mrb[0].mxu0 %v4206
        %v4459 = vpop.f32.mrb[0].mxu0
        %v4460 = vadd.f32 0.0, %v4459
        %v4461 = vpop.f32.mrb[0].mxu0
        %v4462 = vpop.f32.mrb[0].mxu0
        %v4463 = vadd.f32 0.0, %v4462
        %v4464 = vpop.f32.mrb[0].mxu0
        %4465 = vmatprep.mubr.bf16.mxu0 0
        %4466 = vmatmul.mubr.bf16.gmra.mrb[0].mxu0 %v4215
        %v4467 = vpop.f32.mrb[0].mxu0
        %v4468 = vadd.f32 0.0, %v4467
        %v4469 = vpop.f32.mrb[0].mxu0
        %v4470 = vpop.f32.mrb[0].mxu0
        %v4471 = vadd.f32 0.0, %v4470
        %v4472 = vpop.f32.mrb[0].mxu0
        %4473 = vmatprep.mubr.bf16.mxu0 0
        %4474 = vmatmul.mubr.bf16.gmra.mrb[0].mxu0 %v4224
        %v4475 = vpop.f32.mrb[0].mxu0
        %v4476 = vadd.f32 0.0, %v4475
        %v4477 = vpop.f32.mrb[0].mxu0
        %v4478 = vpop.f32.mrb[0].mxu0
        %v4479 = vadd.f32 0.0, %v4478
        %v4480 = vpop.f32.mrb[0].mxu0
        %4481 = vmatprep.mubr.bf16.mxu0 0
        %4482 = vmatmul.mubr.bf16.gmra.mrb[0].mxu0 %v4233
        %v4483 = vpop.f32.mrb[0].mxu0
        %v4484 = vadd.f32 0.0, %v4483
        %v4485 = vpop.f32.mrb[0].mxu0
        %v4486 = vpop.f32.mrb[0].mxu0
        %v4487 = vadd.f32 0.0, %v4486
        %v4488 = vpop.f32.mrb[0].mxu0
        %4489 = vmatprep.mubr.bf16.mxu0 0
        %4490 = vmatmul.mubr.bf16.gmra.mrb[0].mxu0 %v4242
        %v4491 = vpop.f32.mrb[0].mxu0
        %v4492 = vadd.f32 0.0, %v4491
        %v4493 = vpop.f32.mrb[0].mxu0
        %v4494 = vpop.f32.mrb[0].mxu0
        %v4495 = vadd.f32 0.0, %v4494
        %v4496 = vpop.f32.mrb[0].mxu0
        %4497 = vmatprep.mubr.bf16.mxu0 0
        %4498 = vmatmul.mubr.bf16.gmra.mrb[0].mxu0 %v4251
        %v4499 = vpop.f32.mrb[0].mxu0
        %v4500 = vadd.f32 0.0, %v4499
        %v4501 = vpop.f32.mrb[0].mxu0
        %v4502 = vpop.f32.mrb[0].mxu0
        %v4503 = vadd.f32 0.0, %v4502
        %v4504 = vpop.f32.mrb[0].mxu0
        %4505 = vmatprep.mubr.bf16.mxu0 0
        %4506 = vmatmul.mubr.bf16.gmra.mrb[0].mxu0 %v4260
        %v4507 = vpop.f32.mrb[0].mxu0
        %v4508 = vadd.f32 0.0, %v4507
        %v4509 = vpop.f32.mrb[0].mxu0
        %v4510 = vpop.f32.mrb[0].mxu0
        %v4511 = vadd.f32 0.0, %v4510
        %v4512 = vpop.f32.mrb[0].mxu0
        %4513 = vmatprep.mubr.bf16.mxu0 0
        %4514 = vmatmul.mubr.bf16.gmra.mrb[0].mxu0 %v4269
        %v4515 = vpop.f32.mrb[0].mxu0
        %v4516 = vadd.f32 0.0, %v4515
        %v4517 = vpop.f32.mrb[0].mxu0
        %v4518 = vpop.f32.mrb[0].mxu0
        %v4519 = vadd.f32 0.0, %v4518
        %v4520 = vpop.f32.mrb[0].mxu0
        %4521 = vmatprep.mubr.bf16.mxu0 0
        %4522 = vmatmul.mubr.bf16.gmra.mrb[0].mxu0 %v4278
        %v4523 = vpop.f32.mrb[0].mxu0
        %v4524 = vadd.f32 0.0, %v4523
        %v4525 = vpop.f32.mrb[0].mxu0
        %v4526 = vpop.f32.mrb[0].mxu0
        %v4527 = vadd.f32 0.0, %v4526
        %v4528 = vpop.f32.mrb[0].mxu0
        %4529 = vmatprep.mubr.bf16.mxu0 0
        %4530 = vmatmul.mubr.bf16.gmra.mrb[0].mxu0 %v4287
        %v4531 = vpop.f32.mrb[0].mxu0
        %v4532 = vadd.f32 0.0, %v4531
        %v4533 = vpop.f32.mrb[0].mxu0
        %v4534 = vpop.f32.mrb[0].mxu0
        %v4535 = vadd.f32 0.0, %v4534
        %v4536 = vpop.f32.mrb[0].mxu0
        %4537 = vmatprep.mubr.bf16.mxu0 0
        %4538 = vmatmul.mubr.bf16.gmra.mrb[0].mxu0 %v4296
        %v4539 = vpop.f32.mrb[0].mxu0
        %v4540 = vadd.f32 0.0, %v4539
        %v4541 = vpop.f32.mrb[0].mxu0
        %v4542 = vpop.f32.mrb[0].mxu0
        %v4543 = vadd.f32 0.0, %v4542
        %v4544 = vpop.f32.mrb[0].mxu0
        %4545 = vmatprep.mubr.bf16.mxu0 0
        %4546 = vmatmul.mubr.bf16.gmra.mrb[0].mxu0 %v4305
        %v4547 = vpop.f32.mrb[0].mxu0
        %v4548 = vadd.f32 0.0, %v4547
        %v4549 = vpop.f32.mrb[0].mxu0
        %v4550 = vpop.f32.mrb[0].mxu0
        %v4551 = vadd.f32 0.0, %v4550
        %v4552 = vpop.f32.mrb[0].mxu0
        %4553 = vmatprep.mubr.bf16.mxu0 0
        %4554 = vmatmul.mubr.bf16.gmra.mrb[0].mxu0 %v4314
        %v4555 = vpop.f32.mrb[0].mxu0
        %v4556 = vadd.f32 0.0, %v4555
        %v4557 = vpop.f32.mrb[0].mxu0
        %v4558 = vpop.f32.mrb[0].mxu0
        %v4559 = vadd.f32 0.0, %v4558
        %v4560 = vpop.f32.mrb[0].mxu0
        %4561 = vmatprep.mubr.bf16.mxu0 0
        %4562 = vmatmul.mubr.bf16.gmra.mrb[0].mxu0 %v4323
        %v4563 = vpop.f32.mrb[0].mxu0
        %v4564 = vadd.f32 0.0, %v4563
        %v4565 = vpop.f32.mrb[0].mxu0
        %v4566 = vpop.f32.mrb[0].mxu0
        %v4567 = vadd.f32 0.0, %v4566
        %v4568 = vpop.f32.mrb[0].mxu0
        %4569 = vmatprep.mubr.bf16.mxu0 0
        %4570 = vmatmul.mubr.bf16.gmra.mrb[0].mxu0 %v4332
        %v4571 = vpop.f32.mrb[0].mxu0
        %v4572 = vadd.f32 0.0, %v4571
        %v4573 = vpop.f32.mrb[0].mxu0
        %v4574 = vpop.f32.mrb[0].mxu0
        %v4575 = vadd.f32 0.0, %v4574
        %v4576 = vpop.f32.mrb[0].mxu0
        %4577 = vmatprep.mubr.bf16.mxu0 0
        %4578 = vmatmul.mubr.bf16.gmra.mrb[0].mxu0 %v4341
        %v4579 = vpop.f32.mrb[0].mxu0
        %v4580 = vadd.f32 0.0, %v4579
        %v4581 = vpop.f32.mrb[0].mxu0
        %v4582 = vpop.f32.mrb[0].mxu0
        %v4583 = vadd.f32 0.0, %v4582
        %v4584 = vpop.f32.mrb[0].mxu0
        %4585 = vmatprep.mubr.bf16.mxu0 0
        %4586 = vmatmul.mubr.bf16.gmra.mrb[0].mxu0 %v4350
        %v4587 = vpop.f32.mrb[0].mxu0
        %v4588 = vadd.f32 0.0, %v4587
        %v4589 = vpop.f32.mrb[0].mxu0
        %v4590 = vpop.f32.mrb[0].mxu0
        %v4591 = vadd.f32 0.0, %v4590
        %v4592 = vpop.f32.mrb[0].mxu0
        %4593 = vdwg.mxu0
        %v4594 = vadd.f32 %v4123, %v4452
        %v4595 = vadd.f32 %v4124, %v4455
        %v4596 = vadd.f32 %v4125, %v4460
        %v4597 = vadd.f32 %v4126, %v4463
        %v4598 = vadd.f32 %v4127, %v4468
        %v4599 = vadd.f32 %v4128, %v4471
        %v4600 = vadd.f32 %v4129, %v4476
        %v4601 = vadd.f32 %v4130, %v4479
        %v4602 = vadd.f32 %v4131, %v4484
        %v4603 = vadd.f32 %v4132, %v4487
        %v4604 = vadd.f32 %v4133, %v4492
        %v4605 = vadd.f32 %v4134, %v4495
        %v4606 = vadd.f32 %v4135, %v4500
        %v4607 = vadd.f32 %v4136, %v4503
        %v4608 = vadd.f32 %v4137, %v4508
        %v4609 = vadd.f32 %v4138, %v4511
        %v4610 = vadd.f32 %v4139, %v4516
        %v4611 = vadd.f32 %v4140, %v4519
        %v4612 = vadd.f32 %v4141, %v4524
        %v4613 = vadd.f32 %v4142, %v4527
        %v4614 = vadd.f32 %v4143, %v4532
        %v4615 = vadd.f32 %v4144, %v4535
        %v4616 = vadd.f32 %v4145, %v4540
        %v4617 = vadd.f32 %v4146, %v4543
        %v4618 = vadd.f32 %v4147, %v4548
        %v4619 = vadd.f32 %v4148, %v4551
        %v4620 = vadd.f32 %v4149, %v4556
        %v4621 = vadd.f32 %v4150, %v4559
        %v4622 = vadd.f32 %v4151, %v4564
        %v4623 = vadd.f32 %v4152, %v4567
        %v4624 = vadd.f32 %v4153, %v4572
        %v4625 = vadd.f32 %v4154, %v4575
        %v4626 = vadd.f32 %v4155, %v4580
        %v4627 = vadd.f32 %v4156, %v4583
        %v4628 = vadd.f32 %v4157, %v4588
        %v4629 = vadd.f32 %v4158, %v4591
        %v4630 = vld [vmem:[#allocation2 + $0x10] sm:$0x8]
        %s4631 = scalar_lea.vmem [#allocation3], 512
        %v4632 = vld [vmem:[%s4631] sm:$0xf]
        %v4633 = vld [vmem:[%s4631 + $0x4] sm:$0xf]
        %v4634 = vld [vmem:[%s4631 + $0x8] sm:$0xf]
        %v4635 = vld [vmem:[%s4631 + $0xc] sm:$0xf]
        %v4636 = vld [vmem:[%s4631 + $0x10] sm:$0xf]
        %v4637 = vld [vmem:[%s4631 + $0x14] sm:$0xf]
        %v4638 = vld [vmem:[%s4631 + $0x18] sm:$0xf]
        %v4639 = vld [vmem:[%s4631 + $0x1c] sm:$0xf]
        %v4640 = vld [vmem:[%s4631 + $0x20] sm:$0xf]
        %v4641 = vld [vmem:[%s4631 + $0x24] sm:$0xf]
        %v4642 = vld [vmem:[%s4631 + $0x28] sm:$0xf]
        %v4643 = vld [vmem:[%s4631 + $0x2c] sm:$0xf]
        %v4644 = vld [vmem:[%s4631 + $0x30] sm:$0xf]
        %v4645 = vld [vmem:[%s4631 + $0x34] sm:$0xf]
        %v4646 = vld [vmem:[%s4631 + $0x38] sm:$0xf]
        %v4647 = vld [vmem:[%s4631 + $0x3c] sm:$0xf]
        %v4649 = vunpack.c.l.b16 %v4630
        %v4650 = vpack.c.b16 %v3788, %v4649
        %vm4651 = vcmask 1044480
        %v4652 = vrot.slane %v4650, 3
        %v4653 = vrot.slane %v3825, 3
        %v4654 = vsel %vm4651, %v4652, %v4653
        %v4655 = vrot.slane %v3826, 3
        %v4656 = vsel %vm4651, %v4653, %v4655
        %v4657 = vrot.slane %v3827, 3
        %v4658 = vsel %vm4651, %v4655, %v4657
        %v4659 = vrot.slane %v3828, 3
        %v4660 = vsel %vm4651, %v4657, %v4659
        %v4661 = vrot.slane %v3829, 3
        %v4662 = vsel %vm4651, %v4659, %v4661
        %v4663 = vrot.slane %v3830, 3
        %v4664 = vsel %vm4651, %v4661, %v4663
        %v4665 = vrot.slane %v3831, 3
        %v4666 = vsel %vm4651, %v4663, %v4665
        %v4667 = vrot.slane %v3832, 3
        %v4668 = vsel %vm4651, %v4665, %v4667
        %v4669 = vrot.slane %v3833, 3
        %v4670 = vsel %vm4651, %v4667, %v4669
        %v4671 = vrot.slane %v3834, 3
        %v4672 = vsel %vm4651, %v4669, %v4671
        %v4673 = vrot.slane %v3835, 3
        %v4674 = vsel %vm4651, %v4671, %v4673
        %v4675 = vrot.slane %v3836, 3
        %v4676 = vsel %vm4651, %v4673, %v4675
        %v4677 = vrot.slane %v3837, 3
        %v4678 = vsel %vm4651, %v4675, %v4677
        %v4679 = vrot.slane %v3838, 3
        %v4680 = vsel %vm4651, %v4677, %v4679
        %v4681 = vrot.slane %v3839, 3
        %v4682 = vsel %vm4651, %v4679, %v4681
        %v4683 = vrot.slane %v3840, 3
        %v4684 = vsel %vm4651, %v4681, %v4683
        %v4685 = vrot.slane %v3841, 3
        %v4686 = vsel %vm4651, %v4683, %v4685
        %v4687 = vrot.slane %v4179, 3
        %v4688 = vsel %vm4651, %v4685, %v4687
        %v4723 = vunpack.c.l.b16 %v4632
        %v4724 = vunpack.c.l.b16 %v4633
        %v4725 = vunpack.c.l.b16 %v4634
        %v4726 = vunpack.c.l.b16 %v4635
        %v4727 = vunpack.c.l.b16 %v4636
        %v4728 = vunpack.c.l.b16 %v4637
        %v4729 = vunpack.c.l.b16 %v4638
        %v4730 = vunpack.c.l.b16 %v4639
        %v4731 = vunpack.c.l.b16 %v4640
        %v4732 = vunpack.c.l.b16 %v4641
        %v4733 = vunpack.c.l.b16 %v4642
        %v4734 = vunpack.c.l.b16 %v4643
        %v4735 = vunpack.c.l.b16 %v4644
        %v4736 = vunpack.c.l.b16 %v4645
        %v4737 = vunpack.c.l.b16 %v4646
        %v4738 = vunpack.c.l.b16 %v4647
        %v4739 = vpack.c.b16 %v4724, %v4723
        %v4740 = vpack.c.b16 %v4726, %v4725
        %v4741 = vpack.c.b16 %v4728, %v4727
        %v4742 = vpack.c.b16 %v4730, %v4729
        %v4743 = vpack.c.b16 %v4732, %v4731
        %v4744 = vpack.c.b16 %v4734, %v4733
        %v4745 = vpack.c.b16 %v4736, %v4735
        %v4746 = vpack.c.b16 %v4738, %v4737
        %4755 = vmatprep.subr.bf16.mxu0 0
        %4756 = vmatpush1.bf16.msra.mxu0 %v4739
        %4757 = vmatprep.subr.bf16.mxu0 0
        %4758 = vmatpush1.bf16.msra.mxu0 %v4740
        %4759 = vmatprep.subr.bf16.mxu0 0
        %4760 = vmatpush1.bf16.msra.mxu0 %v4741
        %4761 = vmatprep.subr.bf16.mxu0 0
        %4762 = vmatpush1.bf16.msra.mxu0 %v4742
        %4763 = vmatprep.subr.bf16.mxu0 0
        %4764 = vmatpush1.bf16.msra.mxu0 %v4743
        %4765 = vmatprep.subr.bf16.mxu0 0
        %4766 = vmatpush1.bf16.msra.mxu0 %v4744
        %4767 = vmatprep.subr.bf16.mxu0 0
        %4768 = vmatpush1.bf16.msra.mxu0 %v4745
        %4769 = vmatprep.subr.bf16.mxu0 0
        %4770 = vmatpush1.bf16.msra.mxu0 %v4746
        %4771 = vmatprep.subr.bf16.mxu0 0
        %4772 = vmatpush1.bf16.msra.mxu0 0
        %4773 = vmatprep.subr.bf16.mxu0 0
        %4774 = vmatpush1.bf16.msra.mxu0 0
        %4775 = vmatprep.subr.bf16.mxu0 0
        %4776 = vmatpush1.bf16.msra.mxu0 0
        %4777 = vmatprep.subr.bf16.mxu0 0
        %4778 = vmatpush1.bf16.msra.mxu0 0
        %4779 = vmatprep.subr.bf16.mxu0 0
        %4780 = vmatpush1.bf16.msra.mxu0 0
        %4781 = vmatprep.subr.bf16.mxu0 0
        %4782 = vmatpush1.bf16.msra.mxu0 0
        %4783 = vmatprep.subr.bf16.mxu0 0
        %4784 = vmatpush1.bf16.msra.mxu0 0
        %4785 = vmatprep.subr.bf16.mxu0 0
        %4786 = vmatpush1.bf16.msra.mxu0 0
        %4787 = vmatprep.mubr.bf16.mxu0 0
        %4788 = vmatmul.mubr.bf16.gmra.mrb[0].mxu0 %v4654
        %v4789 = vpop.f32.mrb[0].mxu0
        %v4790 = vadd.f32 0.0, %v4789
        %v4791 = vpop.f32.mrb[0].mxu0
        %v4792 = vpop.f32.mrb[0].mxu0
        %v4793 = vadd.f32 0.0, %v4792
        %v4794 = vpop.f32.mrb[0].mxu0
        %4795 = vmatprep.mubr.bf16.mxu0 0
        %4796 = vmatmul.mubr.bf16.gmra.mrb[0].mxu0 %v4656
        %v4797 = vpop.f32.mrb[0].mxu0
        %v4798 = vadd.f32 0.0, %v4797
        %v4799 = vpop.f32.mrb[0].mxu0
        %v4800 = vpop.f32.mrb[0].mxu0
        %v4801 = vadd.f32 0.0, %v4800
        %v4802 = vpop.f32.mrb[0].mxu0
        %4803 = vmatprep.mubr.bf16.mxu0 0
        %4804 = vmatmul.mubr.bf16.gmra.mrb[0].mxu0 %v4658
        %v4805 = vpop.f32.mrb[0].mxu0
        %v4806 = vadd.f32 0.0, %v4805
        %v4807 = vpop.f32.mrb[0].mxu0
        %v4808 = vpop.f32.mrb[0].mxu0
        %v4809 = vadd.f32 0.0, %v4808
        %v4810 = vpop.f32.mrb[0].mxu0
        %4811 = vmatprep.mubr.bf16.mxu0 0
        %4812 = vmatmul.mubr.bf16.gmra.mrb[0].mxu0 %v4660
        %v4813 = vpop.f32.mrb[0].mxu0
        %v4814 = vadd.f32 0.0, %v4813
        %v4815 = vpop.f32.mrb[0].mxu0
        %v4816 = vpop.f32.mrb[0].mxu0
        %v4817 = vadd.f32 0.0, %v4816
        %v4818 = vpop.f32.mrb[0].mxu0
        %4819 = vmatprep.mubr.bf16.mxu0 0
        %4820 = vmatmul.mubr.bf16.gmra.mrb[0].mxu0 %v4662
        %v4821 = vpop.f32.mrb[0].mxu0
        %v4822 = vadd.f32 0.0, %v4821
        %v4823 = vpop.f32.mrb[0].mxu0
        %v4824 = vpop.f32.mrb[0].mxu0
        %v4825 = vadd.f32 0.0, %v4824
        %v4826 = vpop.f32.mrb[0].mxu0
        %4827 = vmatprep.mubr.bf16.mxu0 0
        %4828 = vmatmul.mubr.bf16.gmra.mrb[0].mxu0 %v4664
        %v4829 = vpop.f32.mrb[0].mxu0
        %v4830 = vadd.f32 0.0, %v4829
        %v4831 = vpop.f32.mrb[0].mxu0
        %v4832 = vpop.f32.mrb[0].mxu0
        %v4833 = vadd.f32 0.0, %v4832
        %v4834 = vpop.f32.mrb[0].mxu0
        %4835 = vmatprep.mubr.bf16.mxu0 0
        %4836 = vmatmul.mubr.bf16.gmra.mrb[0].mxu0 %v4666
        %v4837 = vpop.f32.mrb[0].mxu0
        %v4838 = vadd.f32 0.0, %v4837
        %v4839 = vpop.f32.mrb[0].mxu0
        %v4840 = vpop.f32.mrb[0].mxu0
        %v4841 = vadd.f32 0.0, %v4840
        %v4842 = vpop.f32.mrb[0].mxu0
        %4843 = vmatprep.mubr.bf16.mxu0 0
        %4844 = vmatmul.mubr.bf16.gmra.mrb[0].mxu0 %v4668
        %v4845 = vpop.f32.mrb[0].mxu0
        %v4846 = vadd.f32 0.0, %v4845
        %v4847 = vpop.f32.mrb[0].mxu0
        %v4848 = vpop.f32.mrb[0].mxu0
        %v4849 = vadd.f32 0.0, %v4848
        %v4850 = vpop.f32.mrb[0].mxu0
        %4851 = vmatprep.mubr.bf16.mxu0 0
        %4852 = vmatmul.mubr.bf16.gmra.mrb[0].mxu0 %v4670
        %v4853 = vpop.f32.mrb[0].mxu0
        %v4854 = vadd.f32 0.0, %v4853
        %v4855 = vpop.f32.mrb[0].mxu0
        %v4856 = vpop.f32.mrb[0].mxu0
        %v4857 = vadd.f32 0.0, %v4856
        %v4858 = vpop.f32.mrb[0].mxu0
        %4859 = vmatprep.mubr.bf16.mxu0 0
        %4860 = vmatmul.mubr.bf16.gmra.mrb[0].mxu0 %v4672
        %v4861 = vpop.f32.mrb[0].mxu0
        %v4862 = vadd.f32 0.0, %v4861
        %v4863 = vpop.f32.mrb[0].mxu0
        %v4864 = vpop.f32.mrb[0].mxu0
        %v4865 = vadd.f32 0.0, %v4864
        %v4866 = vpop.f32.mrb[0].mxu0
        %4867 = vmatprep.mubr.bf16.mxu0 0
        %4868 = vmatmul.mubr.bf16.gmra.mrb[0].mxu0 %v4674
        %v4869 = vpop.f32.mrb[0].mxu0
        %v4870 = vadd.f32 0.0, %v4869
        %v4871 = vpop.f32.mrb[0].mxu0
        %v4872 = vpop.f32.mrb[0].mxu0
        %v4873 = vadd.f32 0.0, %v4872
        %v4874 = vpop.f32.mrb[0].mxu0
        %4875 = vmatprep.mubr.bf16.mxu0 0
        %4876 = vmatmul.mubr.bf16.gmra.mrb[0].mxu0 %v4676
        %v4877 = vpop.f32.mrb[0].mxu0
        %v4878 = vadd.f32 0.0, %v4877
        %v4879 = vpop.f32.mrb[0].mxu0
        %v4880 = vpop.f32.mrb[0].mxu0
        %v4881 = vadd.f32 0.0, %v4880
        %v4882 = vpop.f32.mrb[0].mxu0
        %4883 = vmatprep.mubr.bf16.mxu0 0
        %4884 = vmatmul.mubr.bf16.gmra.mrb[0].mxu0 %v4678
        %v4885 = vpop.f32.mrb[0].mxu0
        %v4886 = vadd.f32 0.0, %v4885
        %v4887 = vpop.f32.mrb[0].mxu0
        %v4888 = vpop.f32.mrb[0].mxu0
        %v4889 = vadd.f32 0.0, %v4888
        %v4890 = vpop.f32.mrb[0].mxu0
        %4891 = vmatprep.mubr.bf16.mxu0 0
        %4892 = vmatmul.mubr.bf16.gmra.mrb[0].mxu0 %v4680
        %v4893 = vpop.f32.mrb[0].mxu0
        %v4894 = vadd.f32 0.0, %v4893
        %v4895 = vpop.f32.mrb[0].mxu0
        %v4896 = vpop.f32.mrb[0].mxu0
        %v4897 = vadd.f32 0.0, %v4896
        %v4898 = vpop.f32.mrb[0].mxu0
        %4899 = vmatprep.mubr.bf16.mxu0 0
        %4900 = vmatmul.mubr.bf16.gmra.mrb[0].mxu0 %v4682
        %v4901 = vpop.f32.mrb[0].mxu0
        %v4902 = vadd.f32 0.0, %v4901
        %v4903 = vpop.f32.mrb[0].mxu0
        %v4904 = vpop.f32.mrb[0].mxu0
        %v4905 = vadd.f32 0.0, %v4904
        %v4906 = vpop.f32.mrb[0].mxu0
        %4907 = vmatprep.mubr.bf16.mxu0 0
        %4908 = vmatmul.mubr.bf16.gmra.mrb[0].mxu0 %v4684
        %v4909 = vpop.f32.mrb[0].mxu0
        %v4910 = vadd.f32 0.0, %v4909
        %v4911 = vpop.f32.mrb[0].mxu0
        %v4912 = vpop.f32.mrb[0].mxu0
        %v4913 = vadd.f32 0.0, %v4912
        %v4914 = vpop.f32.mrb[0].mxu0
        %4915 = vmatprep.mubr.bf16.mxu0 0
        %4916 = vmatmul.mubr.bf16.gmra.mrb[0].mxu0 %v4686
        %v4917 = vpop.f32.mrb[0].mxu0
        %v4918 = vadd.f32 0.0, %v4917
        %v4919 = vpop.f32.mrb[0].mxu0
        %v4920 = vpop.f32.mrb[0].mxu0
        %v4921 = vadd.f32 0.0, %v4920
        %v4922 = vpop.f32.mrb[0].mxu0
        %4923 = vmatprep.mubr.bf16.mxu0 0
        %4924 = vmatmul.mubr.bf16.gmra.mrb[0].mxu0 %v4688
        %v4925 = vpop.f32.mrb[0].mxu0
        %v4926 = vadd.f32 0.0, %v4925
        %v4927 = vpop.f32.mrb[0].mxu0
        %v4928 = vpop.f32.mrb[0].mxu0
        %v4929 = vadd.f32 0.0, %v4928
        %v4930 = vpop.f32.mrb[0].mxu0
        %4931 = vdwg.mxu0
        %v4932 = vadd.f32 %v4594, %v4790
        %v4933 = vadd.f32 %v4595, %v4793
        %v4934 = vadd.f32 %v4596, %v4798
        %v4935 = vadd.f32 %v4597, %v4801
        %v4936 = vadd.f32 %v4598, %v4806
        %v4937 = vadd.f32 %v4599, %v4809
        %v4938 = vadd.f32 %v4600, %v4814
        %v4939 = vadd.f32 %v4601, %v4817
        %v4940 = vadd.f32 %v4602, %v4822
        %v4941 = vadd.f32 %v4603, %v4825
        %v4942 = vadd.f32 %v4604, %v4830
        %v4943 = vadd.f32 %v4605, %v4833
        %v4944 = vadd.f32 %v4606, %v4838
        %v4945 = vadd.f32 %v4607, %v4841
        %v4946 = vadd.f32 %v4608, %v4846
        %v4947 = vadd.f32 %v4609, %v4849
        %v4948 = vadd.f32 %v4610, %v4854
        %v4949 = vadd.f32 %v4611, %v4857
        %v4950 = vadd.f32 %v4612, %v4862
        %v4951 = vadd.f32 %v4613, %v4865
        %v4952 = vadd.f32 %v4614, %v4870
        %v4953 = vadd.f32 %v4615, %v4873
        %v4954 = vadd.f32 %v4616, %v4878
        %v4955 = vadd.f32 %v4617, %v4881
        %v4956 = vadd.f32 %v4618, %v4886
        %v4957 = vadd.f32 %v4619, %v4889
        %v4958 = vadd.f32 %v4620, %v4894
        %v4959 = vadd.f32 %v4621, %v4897
        %v4960 = vadd.f32 %v4622, %v4902
        %v4961 = vadd.f32 %v4623, %v4905
        %v4962 = vadd.f32 %v4624, %v4910
        %v4963 = vadd.f32 %v4625, %v4913
        %v4964 = vadd.f32 %v4626, %v4918
        %v4965 = vadd.f32 %v4627, %v4921
        %v4966 = vadd.f32 %v4628, %v4926
        %v4967 = vadd.f32 %v4629, %v4929
        %v4968 = vld [vmem:[%s4] sm:$0x1]
        %v4970 = vlaneseq
        %v4971 = vshrl.u32 %v4970, 7
        %v4972 = vsub.s32 0, %v4971
        %v4973 = vrot.slane %v4968, %v4972
        %v4975 = vadd.f32 %v4932, %v4973
        %v4976 = vadd.f32 %v4933, %v4973
        %v4977 = vadd.f32 %v4934, %v4973
        %v4978 = vadd.f32 %v4935, %v4973
        %v4979 = vadd.f32 %v4936, %v4973
        %v4980 = vadd.f32 %v4937, %v4973
        %v4981 = vadd.f32 %v4938, %v4973
        %v4982 = vadd.f32 %v4939, %v4973
        %v4983 = vadd.f32 %v4940, %v4973
        %v4984 = vadd.f32 %v4941, %v4973
        %v4985 = vadd.f32 %v4942, %v4973
        %v4986 = vadd.f32 %v4943, %v4973
        %v4987 = vadd.f32 %v4944, %v4973
        %v4988 = vadd.f32 %v4945, %v4973
        %v4989 = vadd.f32 %v4946, %v4973
        %v4990 = vadd.f32 %v4947, %v4973
        %v4991 = vadd.f32 %v4948, %v4973
        %v4992 = vadd.f32 %v4949, %v4973
        %v4993 = vadd.f32 %v4950, %v4973
        %v4994 = vadd.f32 %v4951, %v4973
        %v4995 = vadd.f32 %v4952, %v4973
        %v4996 = vadd.f32 %v4953, %v4973
        %v4997 = vadd.f32 %v4954, %v4973
        %v4998 = vadd.f32 %v4955, %v4973
        %v4999 = vadd.f32 %v4956, %v4973
        %v5000 = vadd.f32 %v4957, %v4973
        %v5001 = vadd.f32 %v4958, %v4973
        %v5002 = vadd.f32 %v4959, %v4973
        %v5003 = vadd.f32 %v4960, %v4973
        %v5004 = vadd.f32 %v4961, %v4973
        %v5005 = vadd.f32 %v4962, %v4973
        %v5006 = vadd.f32 %v4963, %v4973
        %v5007 = vadd.f32 %v4964, %v4973
        %v5008 = vadd.f32 %v4965, %v4973
        %v5009 = vadd.f32 %v4966, %v4973
        %v5010 = vadd.f32 %v4967, %v4973
        %v5011 = vmax.f32 %v4975, 0.0
        %v5012 = vmax.f32 %v4976, 0.0
        %v5013 = vmax.f32 %v4977, 0.0
        %v5014 = vmax.f32 %v4978, 0.0
        %v5015 = vmax.f32 %v4979, 0.0
        %v5016 = vmax.f32 %v4980, 0.0
        %v5017 = vmax.f32 %v4981, 0.0
        %v5018 = vmax.f32 %v4982, 0.0
        %v5019 = vmax.f32 %v4983, 0.0
        %v5020 = vmax.f32 %v4984, 0.0
        %v5021 = vmax.f32 %v4985, 0.0
        %v5022 = vmax.f32 %v4986, 0.0
        %v5023 = vmax.f32 %v4987, 0.0
        %v5024 = vmax.f32 %v4988, 0.0
        %v5025 = vmax.f32 %v4989, 0.0
        %v5026 = vmax.f32 %v4990, 0.0
        %v5027 = vmax.f32 %v4991, 0.0
        %v5028 = vmax.f32 %v4992, 0.0
        %v5029 = vmax.f32 %v4993, 0.0
        %v5030 = vmax.f32 %v4994, 0.0
        %v5031 = vmax.f32 %v4995, 0.0
        %v5032 = vmax.f32 %v4996, 0.0
        %v5033 = vmax.f32 %v4997, 0.0
        %v5034 = vmax.f32 %v4998, 0.0
        %v5035 = vmax.f32 %v4999, 0.0
        %v5036 = vmax.f32 %v5000, 0.0
        %v5037 = vmax.f32 %v5001, 0.0
        %v5038 = vmax.f32 %v5002, 0.0
        %v5039 = vmax.f32 %v5003, 0.0
        %v5040 = vmax.f32 %v5004, 0.0
        %v5041 = vmax.f32 %v5005, 0.0
        %v5042 = vmax.f32 %v5006, 0.0
        %v5043 = vmax.f32 %v5007, 0.0
        %v5044 = vmax.f32 %v5008, 0.0
        %v5045 = vmax.f32 %v5009, 0.0
        %v5046 = vmax.f32 %v5010, 0.0
        %v5047 = vpack.c.bf16 %v5012, %v5011
        %v5048 = vpack.c.bf16 %v5014, %v5013
        %v5049 = vpack.c.bf16 %v5016, %v5015
        %v5050 = vpack.c.bf16 %v5018, %v5017
        %v5051 = vpack.c.bf16 %v5020, %v5019
        %v5052 = vpack.c.bf16 %v5022, %v5021
        %v5053 = vpack.c.bf16 %v5024, %v5023
        %v5054 = vpack.c.bf16 %v5026, %v5025
        %v5055 = vpack.c.bf16 %v5028, %v5027
        %v5056 = vpack.c.bf16 %v5030, %v5029
        %v5057 = vpack.c.bf16 %v5032, %v5031
        %v5058 = vpack.c.bf16 %v5034, %v5033
        %v5059 = vpack.c.bf16 %v5036, %v5035
        %v5060 = vpack.c.bf16 %v5038, %v5037
        %v5061 = vpack.c.bf16 %v5040, %v5039
        %v5062 = vpack.c.bf16 %v5042, %v5041
        %v5063 = vpack.c.bf16 %v5044, %v5043
        %v5064 = vpack.c.bf16 %v5046, %v5045
        %v5065 = vld [vmem:[%s5] sm:$0xf]
        %v5066 = vld [vmem:[%s5 + $0x4] sm:$0xf]
        %v5067 = vld [vmem:[%s5 + $0x8] sm:$0xf]
        %v5068 = vld [vmem:[%s5 + $0xc] sm:$0xf]
        %v5069 = vld [vmem:[%s5 + $0x10] sm:$0xf]
        %v5070 = vld [vmem:[%s5 + $0x14] sm:$0xf]
        %v5071 = vld [vmem:[%s5 + $0x18] sm:$0xf]
        %v5072 = vld [vmem:[%s5 + $0x1c] sm:$0xf]
        %v5073 = vld [vmem:[%s5 + $0x20] sm:$0xf]
        %v5074 = vld [vmem:[%s5 + $0x24] sm:$0xf]
        %v5075 = vld [vmem:[%s5 + $0x28] sm:$0xf]
        %v5076 = vld [vmem:[%s5 + $0x2c] sm:$0xf]
        %v5077 = vld [vmem:[%s5 + $0x30] sm:$0xf]
        %v5078 = vld [vmem:[%s5 + $0x34] sm:$0xf]
        %v5079 = vld [vmem:[%s5 + $0x38] sm:$0xf]
        %v5080 = vld [vmem:[%s5 + $0x3c] sm:$0xf]
        %v5097 = vunpack.c.l.b16 %v5065
        %v5098 = vunpack.c.l.b16 %v5066
        %v5099 = vunpack.c.l.b16 %v5067
        %v5100 = vunpack.c.l.b16 %v5068
        %v5101 = vunpack.c.l.b16 %v5069
        %v5102 = vunpack.c.l.b16 %v5070
        %v5103 = vunpack.c.l.b16 %v5071
        %v5104 = vunpack.c.l.b16 %v5072
        %v5105 = vunpack.c.l.b16 %v5073
        %v5106 = vunpack.c.l.b16 %v5074
        %v5107 = vunpack.c.l.b16 %v5075
        %v5108 = vunpack.c.l.b16 %v5076
        %v5109 = vunpack.c.l.b16 %v5077
        %v5110 = vunpack.c.l.b16 %v5078
        %v5111 = vunpack.c.l.b16 %v5079
        %v5112 = vunpack.c.l.b16 %v5080
        %v5113 = vpack.c.b16 %v5098, %v5097
        %v5114 = vpack.c.b16 %v5100, %v5099
        %v5115 = vpack.c.b16 %v5102, %v5101
        %v5116 = vpack.c.b16 %v5104, %v5103
        %v5117 = vpack.c.b16 %v5106, %v5105
        %v5118 = vpack.c.b16 %v5108, %v5107
        %v5119 = vpack.c.b16 %v5110, %v5109
        %v5120 = vpack.c.b16 %v5112, %v5111
        %5129 = vmatprep.subr.bf16.mxu0 0
        %5130 = vmatpush1.bf16.msra.mxu0 %v5113
        %5131 = vmatprep.subr.bf16.mxu0 0
        %5132 = vmatpush1.bf16.msra.mxu0 %v5114
        %5133 = vmatprep.subr.bf16.mxu0 0
        %5134 = vmatpush1.bf16.msra.mxu0 %v5115
        %5135 = vmatprep.subr.bf16.mxu0 0
        %5136 = vmatpush1.bf16.msra.mxu0 %v5116
        %5137 = vmatprep.subr.bf16.mxu0 0
        %5138 = vmatpush1.bf16.msra.mxu0 %v5117
        %5139 = vmatprep.subr.bf16.mxu0 0
        %5140 = vmatpush1.bf16.msra.mxu0 %v5118
        %5141 = vmatprep.subr.bf16.mxu0 0
        %5142 = vmatpush1.bf16.msra.mxu0 %v5119
        %5143 = vmatprep.subr.bf16.mxu0 0
        %5144 = vmatpush1.bf16.msra.mxu0 %v5120
        %5145 = vmatprep.subr.bf16.mxu0 0
        %5146 = vmatpush1.bf16.msra.mxu0 0
        %5147 = vmatprep.subr.bf16.mxu0 0
        %5148 = vmatpush1.bf16.msra.mxu0 0
        %5149 = vmatprep.subr.bf16.mxu0 0
        %5150 = vmatpush1.bf16.msra.mxu0 0
        %5151 = vmatprep.subr.bf16.mxu0 0
        %5152 = vmatpush1.bf16.msra.mxu0 0
        %5153 = vmatprep.subr.bf16.mxu0 0
        %5154 = vmatpush1.bf16.msra.mxu0 0
        %5155 = vmatprep.subr.bf16.mxu0 0
        %5156 = vmatpush1.bf16.msra.mxu0 0
        %5157 = vmatprep.subr.bf16.mxu0 0
        %5158 = vmatpush1.bf16.msra.mxu0 0
        %5159 = vmatprep.subr.bf16.mxu0 0
        %5160 = vmatpush1.bf16.msra.mxu0 0
        %5161 = vmatprep.mubr.bf16.mxu0 0
        %5162 = vmatmul.mubr.bf16.gmra.mrb[0].mxu0 %v5047
        %v5163 = vpop.f32.mrb[0].mxu0
        %v5164 = vadd.f32 0.0, %v5163
        %v5165 = vpop.f32.mrb[0].mxu0
        %v5166 = vpop.f32.mrb[0].mxu0
        %v5167 = vadd.f32 0.0, %v5166
        %v5168 = vpop.f32.mrb[0].mxu0
        %5169 = vmatprep.mubr.bf16.mxu0 0
        %5170 = vmatmul.mubr.bf16.gmra.mrb[0].mxu0 %v5048
        %v5171 = vpop.f32.mrb[0].mxu0
        %v5172 = vadd.f32 0.0, %v5171
        %v5173 = vpop.f32.mrb[0].mxu0
        %v5174 = vpop.f32.mrb[0].mxu0
        %v5175 = vadd.f32 0.0, %v5174
        %v5176 = vpop.f32.mrb[0].mxu0
        %5177 = vmatprep.mubr.bf16.mxu0 0
        %5178 = vmatmul.mubr.bf16.gmra.mrb[0].mxu0 %v5049
        %v5179 = vpop.f32.mrb[0].mxu0
        %v5180 = vadd.f32 0.0, %v5179
        %v5181 = vpop.f32.mrb[0].mxu0
        %v5182 = vpop.f32.mrb[0].mxu0
        %v5183 = vadd.f32 0.0, %v5182
        %v5184 = vpop.f32.mrb[0].mxu0
        %5185 = vmatprep.mubr.bf16.mxu0 0
        %5186 = vmatmul.mubr.bf16.gmra.mrb[0].mxu0 %v5050
        %v5187 = vpop.f32.mrb[0].mxu0
        %v5188 = vadd.f32 0.0, %v5187
        %v5189 = vpop.f32.mrb[0].mxu0
        %v5190 = vpop.f32.mrb[0].mxu0
        %v5191 = vadd.f32 0.0, %v5190
        %v5192 = vpop.f32.mrb[0].mxu0
        %5193 = vmatprep.mubr.bf16.mxu0 0
        %5194 = vmatmul.mubr.bf16.gmra.mrb[0].mxu0 %v5051
        %v5195 = vpop.f32.mrb[0].mxu0
        %v5196 = vadd.f32 0.0, %v5195
        %v5197 = vpop.f32.mrb[0].mxu0
        %v5198 = vpop.f32.mrb[0].mxu0
        %v5199 = vadd.f32 0.0, %v5198
        %v5200 = vpop.f32.mrb[0].mxu0
        %5201 = vmatprep.mubr.bf16.mxu0 0
        %5202 = vmatmul.mubr.bf16.gmra.mrb[0].mxu0 %v5052
        %v5203 = vpop.f32.mrb[0].mxu0
        %v5204 = vadd.f32 0.0, %v5203
        %v5205 = vpop.f32.mrb[0].mxu0
        %v5206 = vpop.f32.mrb[0].mxu0
        %v5207 = vadd.f32 0.0, %v5206
        %v5208 = vpop.f32.mrb[0].mxu0
        %5209 = vmatprep.mubr.bf16.mxu0 0
        %5210 = vmatmul.mubr.bf16.gmra.mrb[0].mxu0 %v5053
        %v5211 = vpop.f32.mrb[0].mxu0
        %v5212 = vadd.f32 0.0, %v5211
        %v5213 = vpop.f32.mrb[0].mxu0
        %v5214 = vpop.f32.mrb[0].mxu0
        %v5215 = vadd.f32 0.0, %v5214
        %v5216 = vpop.f32.mrb[0].mxu0
        %5217 = vmatprep.mubr.bf16.mxu0 0
        %5218 = vmatmul.mubr.bf16.gmra.mrb[0].mxu0 %v5054
        %v5219 = vpop.f32.mrb[0].mxu0
        %v5220 = vadd.f32 0.0, %v5219
        %v5221 = vpop.f32.mrb[0].mxu0
        %v5222 = vpop.f32.mrb[0].mxu0
        %v5223 = vadd.f32 0.0, %v5222
        %v5224 = vpop.f32.mrb[0].mxu0
        %5225 = vmatprep.mubr.bf16.mxu0 0
        %5226 = vmatmul.mubr.bf16.gmra.mrb[0].mxu0 %v5055
        %v5227 = vpop.f32.mrb[0].mxu0
        %v5228 = vadd.f32 0.0, %v5227
        %v5229 = vpop.f32.mrb[0].mxu0
        %v5230 = vpop.f32.mrb[0].mxu0
        %v5231 = vadd.f32 0.0, %v5230
        %v5232 = vpop.f32.mrb[0].mxu0
        %5233 = vmatprep.mubr.bf16.mxu0 0
        %5234 = vmatmul.mubr.bf16.gmra.mrb[0].mxu0 %v5056
        %v5235 = vpop.f32.mrb[0].mxu0
        %v5236 = vadd.f32 0.0, %v5235
        %v5237 = vpop.f32.mrb[0].mxu0
        %v5238 = vpop.f32.mrb[0].mxu0
        %v5239 = vadd.f32 0.0, %v5238
        %v5240 = vpop.f32.mrb[0].mxu0
        %5241 = vmatprep.mubr.bf16.mxu0 0
        %5242 = vmatmul.mubr.bf16.gmra.mrb[0].mxu0 %v5057
        %v5243 = vpop.f32.mrb[0].mxu0
        %v5244 = vadd.f32 0.0, %v5243
        %v5245 = vpop.f32.mrb[0].mxu0
        %v5246 = vpop.f32.mrb[0].mxu0
        %v5247 = vadd.f32 0.0, %v5246
        %v5248 = vpop.f32.mrb[0].mxu0
        %5249 = vmatprep.mubr.bf16.mxu0 0
        %5250 = vmatmul.mubr.bf16.gmra.mrb[0].mxu0 %v5058
        %v5251 = vpop.f32.mrb[0].mxu0
        %v5252 = vadd.f32 0.0, %v5251
        %v5253 = vpop.f32.mrb[0].mxu0
        %v5254 = vpop.f32.mrb[0].mxu0
        %v5255 = vadd.f32 0.0, %v5254
        %v5256 = vpop.f32.mrb[0].mxu0
        %5257 = vmatprep.mubr.bf16.mxu0 0
        %5258 = vmatmul.mubr.bf16.gmra.mrb[0].mxu0 %v5059
        %v5259 = vpop.f32.mrb[0].mxu0
        %v5260 = vadd.f32 0.0, %v5259
        %v5261 = vpop.f32.mrb[0].mxu0
        %v5262 = vpop.f32.mrb[0].mxu0
        %v5263 = vadd.f32 0.0, %v5262
        %v5264 = vpop.f32.mrb[0].mxu0
        %5265 = vmatprep.mubr.bf16.mxu0 0
        %5266 = vmatmul.mubr.bf16.gmra.mrb[0].mxu0 %v5060
        %v5267 = vpop.f32.mrb[0].mxu0
        %v5268 = vadd.f32 0.0, %v5267
        %v5269 = vpop.f32.mrb[0].mxu0
        %v5270 = vpop.f32.mrb[0].mxu0
        %v5271 = vadd.f32 0.0, %v5270
        %v5272 = vpop.f32.mrb[0].mxu0
        %5273 = vmatprep.mubr.bf16.mxu0 0
        %5274 = vmatmul.mubr.bf16.gmra.mrb[0].mxu0 %v5061
        %v5275 = vpop.f32.mrb[0].mxu0
        %v5276 = vadd.f32 0.0, %v5275
        %v5277 = vpop.f32.mrb[0].mxu0
        %v5278 = vpop.f32.mrb[0].mxu0
        %v5279 = vadd.f32 0.0, %v5278
        %v5280 = vpop.f32.mrb[0].mxu0
        %5281 = vmatprep.mubr.bf16.mxu0 0
        %5282 = vmatmul.mubr.bf16.gmra.mrb[0].mxu0 %v5062
        %v5283 = vpop.f32.mrb[0].mxu0
        %v5284 = vadd.f32 0.0, %v5283
        %v5285 = vpop.f32.mrb[0].mxu0
        %v5286 = vpop.f32.mrb[0].mxu0
        %v5287 = vadd.f32 0.0, %v5286
        %v5288 = vpop.f32.mrb[0].mxu0
        %5289 = vmatprep.mubr.bf16.mxu0 0
        %5290 = vmatmul.mubr.bf16.gmra.mrb[0].mxu0 %v5063
        %v5291 = vpop.f32.mrb[0].mxu0
        %v5292 = vadd.f32 0.0, %v5291
        %v5293 = vpop.f32.mrb[0].mxu0
        %v5294 = vpop.f32.mrb[0].mxu0
        %v5295 = vadd.f32 0.0, %v5294
        %v5296 = vpop.f32.mrb[0].mxu0
        %5297 = vmatprep.mubr.bf16.mxu0 0
        %5298 = vmatmul.mubr.bf16.gmra.mrb[0].mxu0 %v5064
        %v5299 = vpop.f32.mrb[0].mxu0
        %v5300 = vadd.f32 0.0, %v5299
        %v5301 = vpop.f32.mrb[0].mxu0
        %v5302 = vpop.f32.mrb[0].mxu0
        %v5303 = vadd.f32 0.0, %v5302
        %v5304 = vpop.f32.mrb[0].mxu0
        %5305 = vdwg.mxu0
        %v5306 = vld [vmem:[%s6] sm:$0x1]
        %v5308 = vlaneseq
        %v5309 = vshrl.u32 %v5308, 7
        %v5310 = vsub.s32 0, %v5309
        %v5311 = vrot.slane %v5306, %v5310
        %v5313 = vadd.f32 %v5164, %v5311
        %v5314 = vadd.f32 %v5167, %v5311
        %v5315 = vld [vmem:[%s288] sm:$0xf]
        %v5316 = vld [vmem:[%s288 + $0x4] sm:$0xf]
        %v5317 = vunpack.c.l.bf16 %v5315
        %v5318 = vunpack.c.l.bf16 %v5316
        %v5319 = vadd.f32 %v5313, %v5317
        %v5320 = vadd.f32 %v5314, %v5318
        %v5321 = vmax.f32 %v5319, 0.0
        %v5322 = vmax.f32 %v5320, 0.0
        %v5323 = vpack.c.bf16 %v5322, %v5321
        %v5325 = vunpack.c.l.b16 %v5323
        %v5326 = vunpack.c.h.b16 %v5323
        %v5327 = vpack.c.b16 %v5325, %v5325
        %v5328 = vpack.c.b16 %v5326, %v5326
        %vm5331 = vcmask 125952
        %5332 = vst.msk [vmem:[%s293] sm:$0xf] %vm5331, %v5327
        %5333 = vst.msk [vmem:[%s293 + $0x4] sm:$0xf] %vm5331, %v5328
        %v5334 = vadd.f32 %v5172, %v5311
        %v5335 = vadd.f32 %v5175, %v5311
        %v5336 = vadd.f32 %v5180, %v5311
        %v5337 = vld [vmem:[%s288 + $0x8] sm:$0xf]
        %v5338 = vld [vmem:[%s288 + $0xc] sm:$0xf]
        %v5339 = vunpack.c.l.bf16 %v5337
        %v5340 = vunpack.c.l.bf16 %v5338
        %vm5343 = vcmask 1041408
        %v5344 = vrot.slane %v5339, 6
        %v5345 = vrot.slane %v5340, 6
        %v5346 = vsel %vm5343, %v5344, %v5345
        %v5350 = vadd.f32 %v5334, %v5344
        %v5351 = vadd.f32 %v5335, %v5346
        %v5352 = vadd.f32 %v5336, %v5345
        %v5353 = vmax.f32 %v5350, 0.0
        %v5354 = vmax.f32 %v5351, 0.0
        %v5355 = vmax.f32 %v5352, 0.0
        %v5356 = vpack.c.bf16 %v5354, %v5353
        %v5357 = vpack.c.bf16 %v5355, %v5355
        %v5360 = vunpack.c.l.b16 %v5356
        %v5361 = vunpack.c.h.b16 %v5356
        %v5362 = vunpack.c.l.b16 %v5357
        %v5363 = vpack.c.b16 %v5360, %v5360
        %v5364 = vpack.c.b16 %v5361, %v5361
        %v5365 = vpack.c.b16 %v5362, %v5362
        %vm5366 = vcmask 1046532
        %vm5367 = vmor %vm800, %vm5366
        %v5368 = vrot.slane %v5363, 5
        %v5369 = vrot.slane %v5368, 4
        %v5370 = vrot.slane %v5364, 5
        %v5371 = vsel %vm5367, %v5369, %v5370
        %v5372 = vrot.slane %v5370, 4
        %v5373 = vrot.slane %v5365, 5
        %v5374 = vsel %vm5367, %v5372, %v5373
        %5377 = vst.msk [vmem:[%s293 + $0x8] sm:$0xf] %vm5331, %v5371
        %5378 = vst.msk [vmem:[%s293 + $0xc] sm:$0xf] %vm5331, %v5374
        %v5379 = vadd.f32 %v5183, %v5311
        %v5380 = vadd.f32 %v5188, %v5311
        %v5381 = vld [vmem:[%s288 + $0x10] sm:$0xf]
        %v5382 = vld [vmem:[%s288 + $0x14] sm:$0xf]
        %v5383 = vunpack.c.l.bf16 %v5381
        %v5384 = vunpack.c.l.bf16 %v5382
        %vm5387 = vcmask 1043456
        %v5388 = vrot.slane %v5383, 4
        %v5389 = vrot.slane %v5384, 4
        %v5390 = vsel %vm5387, %v5388, %v5389
        %v5394 = vadd.f32 %v5336, %v5388
        %v5395 = vadd.f32 %v5379, %v5390
        %v5396 = vadd.f32 %v5380, %v5389
        %v5397 = vmax.f32 %v5394, 0.0
        %v5398 = vmax.f32 %v5395, 0.0
        %v5399 = vmax.f32 %v5396, 0.0
        %v5400 = vpack.c.bf16 %v5398, %v5397
        %v5401 = vpack.c.bf16 %v5399, %v5399
        %v5404 = vunpack.c.l.b16 %v5400
        %v5405 = vunpack.c.h.b16 %v5400
        %v5406 = vunpack.c.l.b16 %v5401
        %v5407 = vpack.c.b16 %v5404, %v5404
        %v5408 = vpack.c.b16 %v5405, %v5405
        %v5409 = vpack.c.b16 %v5406, %v5406
        %vm5410 = vcmask 1045508
        %vm5411 = vmor %vm758, %vm5410
        %v5412 = vrot.slane %v5407, 6
        %v5413 = vrot.slane %v5412, 4
        %v5414 = vrot.slane %v5408, 6
        %v5415 = vsel %vm5411, %v5413, %v5414
        %v5416 = vrot.slane %v5414, 4
        %v5417 = vrot.slane %v5409, 6
        %v5418 = vsel %vm5411, %v5416, %v5417
        %5421 = vst.msk [vmem:[%s293 + $0x10] sm:$0xf] %vm5331, %v5415
        %5422 = vst.msk [vmem:[%s293 + $0x14] sm:$0xf] %vm5331, %v5418
        %v5423 = vadd.f32 %v5191, %v5311
        %v5424 = vadd.f32 %v5196, %v5311
        %v5425 = vld [vmem:[%s288 + $0x18] sm:$0xf]
        %v5426 = vld [vmem:[%s288 + $0x1c] sm:$0xf]
        %v5427 = vunpack.c.l.bf16 %v5425
        %v5428 = vunpack.c.l.bf16 %v5426
        %vm5431 = vcmask 1045504
        %v5432 = vrot.slane %v5427, 2
        %v5433 = vrot.slane %v5428, 2
        %v5434 = vsel %vm5431, %v5432, %v5433
        %v5438 = vadd.f32 %v5380, %v5432
        %v5439 = vadd.f32 %v5423, %v5434
        %v5440 = vadd.f32 %v5424, %v5433
        %v5441 = vmax.f32 %v5438, 0.0
        %v5442 = vmax.f32 %v5439, 0.0
        %v5443 = vmax.f32 %v5440, 0.0
        %v5444 = vpack.c.bf16 %v5442, %v5441
        %v5445 = vpack.c.bf16 %v5443, %v5443
        %v5448 = vunpack.c.l.b16 %v5444
        %v5449 = vunpack.c.h.b16 %v5444
        %v5450 = vunpack.c.l.b16 %v5445
        %v5451 = vpack.c.b16 %v5448, %v5448
        %v5452 = vpack.c.b16 %v5449, %v5449
        %v5453 = vpack.c.b16 %v5450, %v5450
        %vm5454 = vcmask 1044484
        %vm5455 = vmor %vm881, %vm5454
        %v5456 = vrot.slane %v5451, 7
        %v5457 = vrot.slane %v5456, 4
        %v5458 = vrot.slane %v5452, 7
        %v5459 = vsel %vm5455, %v5457, %v5458
        %v5460 = vrot.slane %v5458, 4
        %v5461 = vrot.slane %v5453, 7
        %v5462 = vsel %vm5455, %v5460, %v5461
        %5465 = vst.msk [vmem:[%s293 + $0x18] sm:$0xf] %vm5331, %v5459
        %5466 = vst.msk [vmem:[%s293 + $0x1c] sm:$0xf] %vm5331, %v5462
        %v5467 = vadd.f32 %v5199, %v5311
        %v5468 = vadd.f32 %v5204, %v5311
        %v5469 = vld [vmem:[%s288 + $0x20] sm:$0xf]
        %v5470 = vld [vmem:[%s288 + $0x24] sm:$0xf]
        %v5471 = vunpack.c.l.bf16 %v5469
        %v5472 = vunpack.c.l.bf16 %v5470
        %v5473 = vadd.f32 %v5467, %v5471
        %v5474 = vadd.f32 %v5468, %v5472
        %v5475 = vmax.f32 %v5473, 0.0
        %v5476 = vmax.f32 %v5474, 0.0
        %v5477 = vpack.c.bf16 %v5476, %v5475
        %v5479 = vunpack.c.l.b16 %v5477
        %v5480 = vunpack.c.h.b16 %v5477
        %v5481 = vpack.c.b16 %v5479, %v5479
        %v5482 = vpack.c.b16 %v5480, %v5480
        %5485 = vst.msk [vmem:[%s293 + $0x20] sm:$0xf] %vm5331, %v5481
        %5486 = vst.msk [vmem:[%s293 + $0x24] sm:$0xf] %vm5331, %v5482
        %v5487 = vadd.f32 %v5207, %v5311
        %v5488 = vadd.f32 %v5212, %v5311
        %v5489 = vadd.f32 %v5215, %v5311
        %v5490 = vld [vmem:[%s288 + $0x28] sm:$0xf]
        %v5491 = vld [vmem:[%s288 + $0x2c] sm:$0xf]
        %v5492 = vunpack.c.l.bf16 %v5490
        %v5493 = vunpack.c.l.bf16 %v5491
        %v5496 = vrot.slane %v5492, 6
        %v5497 = vrot.slane %v5493, 6
        %v5498 = vsel %vm5343, %v5496, %v5497
        %v5502 = vadd.f32 %v5487, %v5496
        %v5503 = vadd.f32 %v5488, %v5498
        %v5504 = vadd.f32 %v5489, %v5497
        %v5505 = vmax.f32 %v5502, 0.0
        %v5506 = vmax.f32 %v5503, 0.0
        %v5507 = vmax.f32 %v5504, 0.0
        %v5508 = vpack.c.bf16 %v5506, %v5505
        %v5509 = vpack.c.bf16 %v5507, %v5507
        %v5512 = vunpack.c.l.b16 %v5508
        %v5513 = vunpack.c.h.b16 %v5508
        %v5514 = vunpack.c.l.b16 %v5509
        %v5515 = vpack.c.b16 %v5512, %v5512
        %v5516 = vpack.c.b16 %v5513, %v5513
        %v5517 = vpack.c.b16 %v5514, %v5514
        %v5518 = vrot.slane %v5515, 5
        %v5519 = vrot.slane %v5518, 4
        %v5520 = vrot.slane %v5516, 5
        %v5521 = vsel %vm5367, %v5519, %v5520
        %v5522 = vrot.slane %v5520, 4
        %v5523 = vrot.slane %v5517, 5
        %v5524 = vsel %vm5367, %v5522, %v5523
        %5527 = vst.msk [vmem:[%s293 + $0x28] sm:$0xf] %vm5331, %v5521
        %5528 = vst.msk [vmem:[%s293 + $0x2c] sm:$0xf] %vm5331, %v5524
        %v5529 = vadd.f32 %v5220, %v5311
        %v5530 = vadd.f32 %v5223, %v5311
        %v5531 = vld [vmem:[%s288 + $0x30] sm:$0xf]
        %v5532 = vld [vmem:[%s288 + $0x34] sm:$0xf]
        %v5533 = vunpack.c.l.bf16 %v5531
        %v5534 = vunpack.c.l.bf16 %v5532
        %v5537 = vrot.slane %v5533, 4
        %v5538 = vrot.slane %v5534, 4
        %v5539 = vsel %vm5387, %v5537, %v5538
        %v5543 = vadd.f32 %v5489, %v5537
        %v5544 = vadd.f32 %v5529, %v5539
        %v5545 = vadd.f32 %v5530, %v5538
        %v5546 = vmax.f32 %v5543, 0.0
        %v5547 = vmax.f32 %v5544, 0.0
        %v5548 = vmax.f32 %v5545, 0.0
        %v5549 = vpack.c.bf16 %v5547, %v5546
        %v5550 = vpack.c.bf16 %v5548, %v5548
        %v5553 = vunpack.c.l.b16 %v5549
        %v5554 = vunpack.c.h.b16 %v5549
        %v5555 = vunpack.c.l.b16 %v5550
        %v5556 = vpack.c.b16 %v5553, %v5553
        %v5557 = vpack.c.b16 %v5554, %v5554
        %v5558 = vpack.c.b16 %v5555, %v5555
        %v5559 = vrot.slane %v5556, 6
        %v5560 = vrot.slane %v5559, 4
        %v5561 = vrot.slane %v5557, 6
        %v5562 = vsel %vm5411, %v5560, %v5561
        %v5563 = vrot.slane %v5561, 4
        %v5564 = vrot.slane %v5558, 6
        %v5565 = vsel %vm5411, %v5563, %v5564
        %5568 = vst.msk [vmem:[%s293 + $0x30] sm:$0xf] %vm5331, %v5562
        %5569 = vst.msk [vmem:[%s293 + $0x34] sm:$0xf] %vm5331, %v5565
        %v5570 = vadd.f32 %v5228, %v5311
        %v5571 = vadd.f32 %v5231, %v5311
        %v5572 = vld [vmem:[%s288 + $0x38] sm:$0xf]
        %v5573 = vld [vmem:[%s288 + $0x3c] sm:$0xf]
        %v5574 = vunpack.c.l.bf16 %v5572
        %v5575 = vunpack.c.l.bf16 %v5573
        %v5578 = vrot.slane %v5574, 2
        %v5579 = vrot.slane %v5575, 2
        %v5580 = vsel %vm5431, %v5578, %v5579
        %v5584 = vadd.f32 %v5530, %v5578
        %v5585 = vadd.f32 %v5570, %v5580
        %v5586 = vadd.f32 %v5571, %v5579
        %v5587 = vmax.f32 %v5584, 0.0
        %v5588 = vmax.f32 %v5585, 0.0
        %v5589 = vmax.f32 %v5586, 0.0
        %v5590 = vpack.c.bf16 %v5588, %v5587
        %v5591 = vpack.c.bf16 %v5589, %v5589
        %v5594 = vunpack.c.l.b16 %v5590
        %v5595 = vunpack.c.h.b16 %v5590
        %v5596 = vunpack.c.l.b16 %v5591
        %v5597 = vpack.c.b16 %v5594, %v5594
        %v5598 = vpack.c.b16 %v5595, %v5595
        %v5599 = vpack.c.b16 %v5596, %v5596
        %v5600 = vrot.slane %v5597, 7
        %v5601 = vrot.slane %v5600, 4
        %v5602 = vrot.slane %v5598, 7
        %v5603 = vsel %vm5455, %v5601, %v5602
        %v5604 = vrot.slane %v5602, 4
        %v5605 = vrot.slane %v5599, 7
        %v5606 = vsel %vm5455, %v5604, %v5605
        %5609 = vst.msk [vmem:[%s293 + $0x38] sm:$0xf] %vm5331, %v5603
        %5610 = vst.msk [vmem:[%s293 + $0x3c] sm:$0xf] %vm5331, %v5606
        %v5611 = vadd.f32 %v5236, %v5311
        %v5612 = vadd.f32 %v5239, %v5311
        %v5613 = vld [vmem:[%s288 + $0x40] sm:$0xf]
        %v5614 = vld [vmem:[%s288 + $0x44] sm:$0xf]
        %v5615 = vunpack.c.l.bf16 %v5613
        %v5616 = vunpack.c.l.bf16 %v5614
        %v5617 = vadd.f32 %v5611, %v5615
        %v5618 = vadd.f32 %v5612, %v5616
        %v5619 = vmax.f32 %v5617, 0.0
        %v5620 = vmax.f32 %v5618, 0.0
        %v5621 = vpack.c.bf16 %v5620, %v5619
        %v5623 = vunpack.c.l.b16 %v5621
        %v5624 = vunpack.c.h.b16 %v5621
        %v5625 = vpack.c.b16 %v5623, %v5623
        %v5626 = vpack.c.b16 %v5624, %v5624
        %5629 = vst.msk [vmem:[%s293 + $0x40] sm:$0xf] %vm5331, %v5625
        %5630 = vst.msk [vmem:[%s293 + $0x44] sm:$0xf] %vm5331, %v5626
        %v5631 = vadd.f32 %v5244, %v5311
        %v5632 = vadd.f32 %v5247, %v5311
        %v5633 = vadd.f32 %v5252, %v5311
        %v5634 = vld [vmem:[%s288 + $0x48] sm:$0xf]
        %v5635 = vld [vmem:[%s288 + $0x4c] sm:$0xf]
        %v5636 = vunpack.c.l.bf16 %v5634
        %v5637 = vunpack.c.l.bf16 %v5635
        %v5640 = vrot.slane %v5636, 6
        %v5641 = vrot.slane %v5637, 6
        %v5642 = vsel %vm5343, %v5640, %v5641
        %v5646 = vadd.f32 %v5631, %v5640
        %v5647 = vadd.f32 %v5632, %v5642
        %v5648 = vadd.f32 %v5633, %v5641
        %v5649 = vmax.f32 %v5646, 0.0
        %v5650 = vmax.f32 %v5647, 0.0
        %v5651 = vmax.f32 %v5648, 0.0
        %v5652 = vpack.c.bf16 %v5650, %v5649
        %v5653 = vpack.c.bf16 %v5651, %v5651
        %v5656 = vunpack.c.l.b16 %v5652
        %v5657 = vunpack.c.h.b16 %v5652
        %v5658 = vunpack.c.l.b16 %v5653
        %v5659 = vpack.c.b16 %v5656, %v5656
        %v5660 = vpack.c.b16 %v5657, %v5657
        %v5661 = vpack.c.b16 %v5658, %v5658
        %v5662 = vrot.slane %v5659, 5
        %v5663 = vrot.slane %v5662, 4
        %v5664 = vrot.slane %v5660, 5
        %v5665 = vsel %vm5367, %v5663, %v5664
        %v5666 = vrot.slane %v5664, 4
        %v5667 = vrot.slane %v5661, 5
        %v5668 = vsel %vm5367, %v5666, %v5667
        %5671 = vst.msk [vmem:[%s293 + $0x48] sm:$0xf] %vm5331, %v5665
        %5672 = vst.msk [vmem:[%s293 + $0x4c] sm:$0xf] %vm5331, %v5668
        %v5673 = vadd.f32 %v5255, %v5311
        %v5674 = vadd.f32 %v5260, %v5311
        %v5675 = vld [vmem:[%s288 + $0x50] sm:$0xf]
        %v5676 = vld [vmem:[%s288 + $0x54] sm:$0xf]
        %v5677 = vunpack.c.l.bf16 %v5675
        %v5678 = vunpack.c.l.bf16 %v5676
        %v5681 = vrot.slane %v5677, 4
        %v5682 = vrot.slane %v5678, 4
        %v5683 = vsel %vm5387, %v5681, %v5682
        %v5687 = vadd.f32 %v5633, %v5681
        %v5688 = vadd.f32 %v5673, %v5683
        %v5689 = vadd.f32 %v5674, %v5682
        %v5690 = vmax.f32 %v5687, 0.0
        %v5691 = vmax.f32 %v5688, 0.0
        %v5692 = vmax.f32 %v5689, 0.0
        %v5693 = vpack.c.bf16 %v5691, %v5690
        %v5694 = vpack.c.bf16 %v5692, %v5692
        %v5697 = vunpack.c.l.b16 %v5693
        %v5698 = vunpack.c.h.b16 %v5693
        %v5699 = vunpack.c.l.b16 %v5694
        %v5700 = vpack.c.b16 %v5697, %v5697
        %v5701 = vpack.c.b16 %v5698, %v5698
        %v5702 = vpack.c.b16 %v5699, %v5699
        %v5703 = vrot.slane %v5700, 6
        %v5704 = vrot.slane %v5703, 4
        %v5705 = vrot.slane %v5701, 6
        %v5706 = vsel %vm5411, %v5704, %v5705
        %v5707 = vrot.slane %v5705, 4
        %v5708 = vrot.slane %v5702, 6
        %v5709 = vsel %vm5411, %v5707, %v5708
        %5712 = vst.msk [vmem:[%s293 + $0x50] sm:$0xf] %vm5331, %v5706
        %5713 = vst.msk [vmem:[%s293 + $0x54] sm:$0xf] %vm5331, %v5709
        %v5714 = vadd.f32 %v5263, %v5311
        %v5715 = vadd.f32 %v5268, %v5311
        %v5716 = vld [vmem:[%s288 + $0x58] sm:$0xf]
        %v5717 = vld [vmem:[%s288 + $0x5c] sm:$0xf]
        %v5718 = vunpack.c.l.bf16 %v5716
        %v5719 = vunpack.c.l.bf16 %v5717
        %v5722 = vrot.slane %v5718, 2
        %v5723 = vrot.slane %v5719, 2
        %v5724 = vsel %vm5431, %v5722, %v5723
        %v5728 = vadd.f32 %v5674, %v5722
        %v5729 = vadd.f32 %v5714, %v5724
        %v5730 = vadd.f32 %v5715, %v5723
        %v5731 = vmax.f32 %v5728, 0.0
        %v5732 = vmax.f32 %v5729, 0.0
        %v5733 = vmax.f32 %v5730, 0.0
        %v5734 = vpack.c.bf16 %v5732, %v5731
        %v5735 = vpack.c.bf16 %v5733, %v5733
        %v5738 = vunpack.c.l.b16 %v5734
        %v5739 = vunpack.c.h.b16 %v5734
        %v5740 = vunpack.c.l.b16 %v5735
        %v5741 = vpack.c.b16 %v5738, %v5738
        %v5742 = vpack.c.b16 %v5739, %v5739
        %v5743 = vpack.c.b16 %v5740, %v5740
        %v5744 = vrot.slane %v5741, 7
        %v5745 = vrot.slane %v5744, 4
        %v5746 = vrot.slane %v5742, 7
        %v5747 = vsel %vm5455, %v5745, %v5746
        %v5748 = vrot.slane %v5746, 4
        %v5749 = vrot.slane %v5743, 7
        %v5750 = vsel %vm5455, %v5748, %v5749
        %5753 = vst.msk [vmem:[%s293 + $0x58] sm:$0xf] %vm5331, %v5747
        %5754 = vst.msk [vmem:[%s293 + $0x5c] sm:$0xf] %vm5331, %v5750
        %v5755 = vadd.f32 %v5271, %v5311
        %v5756 = vadd.f32 %v5276, %v5311
        %v5757 = vld [vmem:[%s288 + $0x60] sm:$0xf]
        %v5758 = vld [vmem:[%s288 + $0x64] sm:$0xf]
        %v5759 = vunpack.c.l.bf16 %v5757
        %v5760 = vunpack.c.l.bf16 %v5758
        %v5761 = vadd.f32 %v5755, %v5759
        %v5762 = vadd.f32 %v5756, %v5760
        %v5763 = vmax.f32 %v5761, 0.0
        %v5764 = vmax.f32 %v5762, 0.0
        %v5765 = vpack.c.bf16 %v5764, %v5763
        %v5767 = vunpack.c.l.b16 %v5765
        %v5768 = vunpack.c.h.b16 %v5765
        %v5769 = vpack.c.b16 %v5767, %v5767
        %v5770 = vpack.c.b16 %v5768, %v5768
        %5773 = vst.msk [vmem:[%s293 + $0x60] sm:$0xf] %vm5331, %v5769
        %5774 = vst.msk [vmem:[%s293 + $0x64] sm:$0xf] %vm5331, %v5770
        %v5775 = vadd.f32 %v5279, %v5311
        %v5776 = vadd.f32 %v5284, %v5311
        %v5777 = vadd.f32 %v5287, %v5311
        %v5778 = vld [vmem:[%s288 + $0x68] sm:$0xf]
        %v5779 = vld [vmem:[%s288 + $0x6c] sm:$0xf]
        %v5780 = vunpack.c.l.bf16 %v5778
        %v5781 = vunpack.c.l.bf16 %v5779
        %v5784 = vrot.slane %v5780, 6
        %v5785 = vrot.slane %v5781, 6
        %v5786 = vsel %vm5343, %v5784, %v5785
        %v5790 = vadd.f32 %v5775, %v5784
        %v5791 = vadd.f32 %v5776, %v5786
        %v5792 = vadd.f32 %v5777, %v5785
        %v5793 = vmax.f32 %v5790, 0.0
        %v5794 = vmax.f32 %v5791, 0.0
        %v5795 = vmax.f32 %v5792, 0.0
        %v5796 = vpack.c.bf16 %v5794, %v5793
        %v5797 = vpack.c.bf16 %v5795, %v5795
        %v5800 = vunpack.c.l.b16 %v5796
        %v5801 = vunpack.c.h.b16 %v5796
        %v5802 = vunpack.c.l.b16 %v5797
        %v5803 = vpack.c.b16 %v5800, %v5800
        %v5804 = vpack.c.b16 %v5801, %v5801
        %v5805 = vpack.c.b16 %v5802, %v5802
        %v5806 = vrot.slane %v5803, 5
        %v5807 = vrot.slane %v5806, 4
        %v5808 = vrot.slane %v5804, 5
        %v5809 = vsel %vm5367, %v5807, %v5808
        %v5810 = vrot.slane %v5808, 4
        %v5811 = vrot.slane %v5805, 5
        %v5812 = vsel %vm5367, %v5810, %v5811
        %5815 = vst.msk [vmem:[%s293 + $0x68] sm:$0xf] %vm5331, %v5809
        %5816 = vst.msk [vmem:[%s293 + $0x6c] sm:$0xf] %vm5331, %v5812
        %v5817 = vadd.f32 %v5292, %v5311
        %v5818 = vadd.f32 %v5295, %v5311
        %v5819 = vld [vmem:[%s288 + $0x70] sm:$0xf]
        %v5820 = vld [vmem:[%s288 + $0x74] sm:$0xf]
        %v5821 = vunpack.c.l.bf16 %v5819
        %v5822 = vunpack.c.l.bf16 %v5820
        %v5825 = vrot.slane %v5821, 4
        %v5826 = vrot.slane %v5822, 4
        %v5827 = vsel %vm5387, %v5825, %v5826
        %v5831 = vadd.f32 %v5777, %v5825
        %v5832 = vadd.f32 %v5817, %v5827
        %v5833 = vadd.f32 %v5818, %v5826
        %v5834 = vmax.f32 %v5831, 0.0
        %v5835 = vmax.f32 %v5832, 0.0
        %v5836 = vmax.f32 %v5833, 0.0
        %v5837 = vpack.c.bf16 %v5835, %v5834
        %v5838 = vpack.c.bf16 %v5836, %v5836
        %v5841 = vunpack.c.l.b16 %v5837
        %v5842 = vunpack.c.h.b16 %v5837
        %v5843 = vunpack.c.l.b16 %v5838
        %v5844 = vpack.c.b16 %v5841, %v5841
        %v5845 = vpack.c.b16 %v5842, %v5842
        %v5846 = vpack.c.b16 %v5843, %v5843
        %v5847 = vrot.slane %v5844, 6
        %v5848 = vrot.slane %v5847, 4
        %v5849 = vrot.slane %v5845, 6
        %v5850 = vsel %vm5411, %v5848, %v5849
        %v5851 = vrot.slane %v5849, 4
        %v5852 = vrot.slane %v5846, 6
        %v5853 = vsel %vm5411, %v5851, %v5852
        %5856 = vst.msk [vmem:[%s293 + $0x70] sm:$0xf] %vm5331, %v5850
        %5857 = vst.msk [vmem:[%s293 + $0x74] sm:$0xf] %vm5331, %v5853
        %v5858 = vadd.f32 %v5300, %v5311
        %v5859 = vadd.f32 %v5303, %v5311
        %v5860 = vld [vmem:[%s288 + $0x78] sm:$0xf]
        %v5861 = vld [vmem:[%s288 + $0x7c] sm:$0xf]
        %v5862 = vunpack.c.l.bf16 %v5860
        %v5863 = vunpack.c.l.bf16 %v5861
        %v5866 = vrot.slane %v5862, 2
        %v5867 = vrot.slane %v5863, 2
        %v5868 = vsel %vm5431, %v5866, %v5867
        %v5872 = vadd.f32 %v5818, %v5866
        %v5873 = vadd.f32 %v5858, %v5868
        %v5874 = vadd.f32 %v5859, %v5867
        %v5875 = vmax.f32 %v5872, 0.0
        %v5876 = vmax.f32 %v5873, 0.0
        %v5877 = vmax.f32 %v5874, 0.0
        %v5878 = vpack.c.bf16 %v5876, %v5875
        %v5879 = vpack.c.bf16 %v5877, %v5877
        %v5882 = vunpack.c.l.b16 %v5878
        %v5883 = vunpack.c.h.b16 %v5878
        %v5884 = vunpack.c.l.b16 %v5879
        %v5885 = vpack.c.b16 %v5882, %v5882
        %v5886 = vpack.c.b16 %v5883, %v5883
        %v5887 = vpack.c.b16 %v5884, %v5884
        %v5888 = vrot.slane %v5885, 7
        %v5889 = vrot.slane %v5888, 4
        %v5890 = vrot.slane %v5886, 7
        %v5891 = vsel %vm5455, %v5889, %v5890
        %v5892 = vrot.slane %v5890, 4
        %v5893 = vrot.slane %v5887, 7
        %v5894 = vsel %vm5455, %v5892, %v5893
        %5897 = vst.msk [vmem:[%s293 + $0x78] sm:$0xf] %vm5331, %v5891
        %5898 = vst.msk [vmem:[%s293 + $0x7c] sm:$0xf] %vm5331, %v5894
        %p5899 = scmp.lt.s32.totalorder %s19, 1
        %s5900 = scalar_select %p5899, %s19, 1
        %s5901 = smul.addr %s5900, 32
        %s5902 = smul.addr %s5901, 4
        %s5903 = scalar_lea.vmem %s7, %s5902
        // Predicated region
        $region53: #{tpu_custom_call.1} parent=47 // pred_check
          %p5904 = pneg %p189
        $region54: #{tpu_custom_call.1} parent=47 // pred_check_branch
          %5906 = sbr.rel (%p5904) target = $region56
        $region55: #{tpu_custom_call.1} parent=47 // pred_region
          _
        $region56: #{tpu_custom_call.1} parent=47 // pred_fallthru
          _
      $region48: #{tpu_custom_call.1} parent=5 // pred_fallthru
        _
      %p5907 = scmp.le.s32.totalorder 2, %s14
      // Predicated region
      $region57: #{tpu_custom_call.1} parent=5 // pred_check
        %p5908 = pneg %p5907
      $region58: #{tpu_custom_call.1} parent=5 // pred_check_branch
        %5910 = sbr.rel (%p5908) target = $region60
      $region59: #{tpu_custom_call.1} parent=5 // pred_region
        %s5911 = ssub.s32 %s14, 2
        // Predicated region
        $region61: #{tpu_custom_call.1} parent=59 // pred_check
          %p5912 = pneg %p195
        $region62: #{tpu_custom_call.1} parent=59 // pred_check_branch
          %5914 = sbr.rel (%p5912) target = $region64
        $region63: #{tpu_custom_call.1} parent=59 // pred_region
          %p5915 = scmp.lt.s32.totalorder %s20, 1
          %s5916 = scalar_select %p5915, %s20, 1
          %s5917 = smul.addr %s5916, 32
          %s5918 = smul.addr %s5917, 4
          %s5919 = scalar_lea.vmem %s7, %s5918
        $region64: #{tpu_custom_call.1} parent=59 // pred_fallthru
          _
      $region60: #{tpu_custom_call.1} parent=5 // pred_fallthru
        _
    $region6: #{tpu_custom_call.1} parent=1 // loop_footer
      %s18 = sadd.s32 1, %s14
    $region7: #{tpu_custom_call.1} parent=1 // loop_footer_branch
      %13 = sbr.rel target = $region3
    $region8: #{tpu_custom_call.1} parent=1 // loop_exit
      _
    %5920 = vsyncpa [#allocation4], 1
    %s5921 = scalar_lea.sflag [#allocation4], 1
    %5922 = vsyncpa %s5921, 1

</llo_original>
